<compile_context>
chip_gen: v5e
topology: v5e:2x2
jax: 0.10.0
libtpu: 0.0.40
codegen_flags: <defaults>
</compile_context>

<pallas_src>
import jax
import jax.numpy as jnp
from jax import lax
from jax.experimental import pallas as pl
from jax.experimental.pallas import tpu as pltpu

EPS = 1e-5


# ---------------------------------------------------------------------------
# Kernel 1: (per-channel input affine) -> 3x3 "same" conv -> +bias -> ReLU
#           -> per-tile per-channel (sum, sumsq) BN partials.
# Grid: (N, H // TH).  Halo rows come in through two extra 1-row BlockSpecs.
# ---------------------------------------------------------------------------
def _conv_relu_stats_kernel(scale_ref, shift_ref, w_ref, b_ref,
                            x_main_ref, x_top_ref, x_bot_ref,
                            h_ref, stats_ref, acc_ref):
    th = x_main_ref.shape[1]
    w_dim = x_main_ref.shape[2]
    cin = x_main_ref.shape[3]
    cout = h_ref.shape[3]
    i = pl.program_id(1)
    last = pl.num_programs(1) - 1
    mxu_dtype = w_ref.dtype                      # bf16 (or f32) MXU operands

    scale = scale_ref[...]                       # (1, cin) f32
    shift = shift_ref[...]                       # (1, cin) f32

    def norm(v):                                 # input BN-affine, kept in f32
        return v.astype(jnp.float32) * scale + shift

    top = norm(x_top_ref[0])                     # (1,  W, cin)
    mid = norm(x_main_ref[0])                    # (TH, W, cin)
    bot = norm(x_bot_ref[0])                     # (1,  W, cin)
    zrow = jnp.zeros_like(top)
    top = jnp.where(i > 0, top, zrow)            # "same"-conv zero rows at edges
    bot = jnp.where(i < last, bot, zrow)
    xn = jnp.concatenate([top, mid, bot], axis=0)            # (TH+2, W, cin)

    # dx = -1 / +1 shifts along W with explicit zero boundary columns.
    # TODO(synk): the dx shifts could use pltpu.roll (XLU slot) instead of
    #             slice+concat copies once layouts are verified on all chips.
    zcol = jnp.zeros((th + 2, 1, cin), xn.dtype)
    xl = jnp.concatenate([zcol, xn[:, :w_dim - 1, :]], axis=1)   # x[.., w-1, :]
    xr = jnp.concatenate([xn[:, 1:, :], zcol], axis=1)           # x[.., w+1, :]

    # im2col over dx: K = 3*cin, matching the prestacked (3, 3*cin, cout) weights.
    xcat = jnp.concatenate([xl, xn, xr], axis=-1)            # (TH+2, W, 3*cin)

    # One MXU matmul per dy tap, accumulated in a VMEM f32 scratch.
    for ky in range(3):
        lhs = xcat[ky:ky + th].reshape(th * w_dim, 3 * cin).astype(mxu_dtype)
        d = jnp.dot(lhs, w_ref[ky], preferred_element_type=jnp.float32)
        if ky == 0:
            acc_ref[...] = d
        else:
            acc_ref[...] += d

    h = jnp.maximum(acc_ref[...] + b_ref[...], 0.0)          # bias + ReLU, f32

    # Per-tile partial BatchNorm statistics (per output channel).
    s1 = jnp.sum(h, axis=0, keepdims=True)                   # (1, cout)
    s2 = jnp.sum(h * h, axis=0, keepdims=True)               # (1, cout)
    stats_ref[...] = jnp.concatenate([s1, s2], axis=0).reshape(1, 1, 2, cout)

    h_ref[...] = h.reshape(1, th, w_dim, cout).astype(h_ref.dtype)


def _choose_row_tile(hh, ww, cin, cout, budget_bytes=8 << 20):
    """Largest divisor of H whose per-grid-step VMEM footprint stays under a
    conservative budget (fits default scoped VMEM on v5e/v6e and v7x's 64 MiB)."""
    best = 1
    for th in range(1, hh + 1):
        if hh % th:
            continue
        per_step = (
            2 * th * ww * cin * 4              # double-buffered input rows
            + 2 * th * ww * cout * 4           # double-buffered output rows
            + 6 * (th + 2) * ww * cin * 4      # f32 temporaries (xn/xl/xr/xcat)
            + th * ww * cout * 4               # VMEM accumulator scratch
            + 2 * 9 * cin * cout * 4)          # stacked weights
        if per_step <= budget_bytes:
            best = th
    return best


def _conv_relu_stats(x, w_stacked, bias, in_scale, in_shift, out_dtype, row_tile):
    n, hh, ww, cin = x.shape
    cout = w_stacked.shape[-1]
    th = row_tile if row_tile is not None else _choose_row_tile(hh, ww, cin, cout)
    assert hh % th == 0, (hh, th)
    nh = hh // th

    h_out, stats = pl.pallas_call(
        _conv_relu_stats_kernel,
        out_shape=(
            jax.ShapeDtypeStruct((n, hh, ww, cout), out_dtype),
            jax.ShapeDtypeStruct((n, nh, 2, cout), jnp.float32),
        ),
        grid=(n, nh),
        in_specs=[
            pl.BlockSpec((1, cin), lambda b, i: (0, 0)),                  # scale
            pl.BlockSpec((1, cin), lambda b, i: (0, 0)),                  # shift
            pl.BlockSpec((3, 3 * cin, cout), lambda b, i: (0, 0, 0)),     # weights
            pl.BlockSpec((1, cout), lambda b, i: (0, 0)),                 # bias
            pl.BlockSpec((1, th, ww, cin), lambda b, i: (b, i, 0, 0)),    # main rows
            pl.BlockSpec((1, 1, ww, cin),                                 # top halo row
                         lambda b, i: (b, jnp.maximum(i * th - 1, 0), 0, 0)),
            pl.BlockSpec((1, 1, ww, cin),                                 # bottom halo row
                         lambda b, i: (b, jnp.minimum((i + 1) * th, hh - 1), 0, 0)),
        ],
        out_specs=(
            pl.BlockSpec((1, th, ww, cout), lambda b, i: (b, i, 0, 0)),
            pl.BlockSpec((1, 1, 2, cout), lambda b, i: (b, i, 0, 0)),
        ),
        scratch_shapes=[pltpu.VMEM((th * ww, cout), jnp.float32)],
        compiler_params=pltpu.CompilerParams(
            dimension_semantics=("parallel", "parallel")),
    )(in_scale, in_shift, w_stacked, bias, x, x, x)
    return h_out, stats


# ---------------------------------------------------------------------------
# Kernel 2: elementwise per-channel affine (final BatchNorm application).
# ---------------------------------------------------------------------------
def _affine_apply_kernel(scale_ref, shift_ref, h_ref, o_ref):
    o_ref[...] = (h_ref[...].astype(jnp.float32) * scale_ref[...]
                  + shift_ref[...]).astype(o_ref.dtype)


def _affine_apply(hid, scale, shift, row_tile):
    n, hh, ww, c = hid.shape
    th = row_tile if row_tile is not None else _choose_row_tile(hh, ww, c, c)
    assert hh % th == 0, (hh, th)
    nh = hh // th
    return pl.pallas_call(
        _affine_apply_kernel,
        out_shape=jax.ShapeDtypeStruct((n, hh, ww, c), jnp.float32),
        grid=(n, nh),
        in_specs=[
            pl.BlockSpec((1, c), lambda b, i: (0, 0)),
            pl.BlockSpec((1, c), lambda b, i: (0, 0)),
            pl.BlockSpec((1, th, ww, c), lambda b, i: (b, i, 0, 0)),
        ],
        out_specs=pl.BlockSpec((1, th, ww, c), lambda b, i: (b, i, 0, 0)),
        compiler_params=pltpu.CompilerParams(
            dimension_semantics=("parallel", "parallel")),
    )(scale, shift, hid)


def _bn_scale_shift(stats, gamma, beta, count):
    """Reduce per-tile (sum, sumsq) partials -> per-channel affine (scale, shift)."""
    s = jnp.sum(stats, axis=(0, 1))                           # (2, C)
    mean = s[0] / count
    var = jnp.maximum(s[1] / count - mean * mean, 0.0)        # biased variance
    scale = gamma.astype(jnp.float32) * lax.rsqrt(var + EPS)
    shift = beta.astype(jnp.float32) - mean * scale
    return scale.reshape(1, -1), shift.reshape(1, -1)


# ---------------------------------------------------------------------------
# Public wrapper (NCHW in / NCHW out, like the PyTorch module).
# ---------------------------------------------------------------------------
def _unet_convblock(x_nchw, params, *, compute_dtype=jnp.bfloat16, row_tile=None):
    w1, b1, g1, bt1, w2, b2, g2, bt2 = params
    n, cin, hh, ww = x_nchw.shape
    cout = w1.shape[-1]
    count = n * hh * ww

    # TODO(synk): fuse the NCHW<->NHWC relayouts into the first/last kernels.
    x = jnp.transpose(x_nchw, (0, 2, 3, 1)).astype(compute_dtype)     # NHWC

    # Prestack 3x3 weights as (ky, kx*Cin, Cout): each dy tap is one deep matmul.
    w1s = w1.reshape(3, 3 * cin, cout).astype(compute_dtype)
    w2s = w2.reshape(3, 3 * cout, cout).astype(compute_dtype)

    ident_scale = jnp.ones((1, cin), jnp.float32)
    ident_shift = jnp.zeros((1, cin), jnp.float32)

    # conv1 + bias + ReLU  (+ BN1 partial statistics)
    h1, st1 = _conv_relu_stats(x, w1s, b1.reshape(1, -1).astype(jnp.float32),
                               ident_scale, ident_shift, compute_dtype, row_tile)
    sc1, sh1 = _bn_scale_shift(st1, g1, bt1, count)

    # BN1 (folded into conv2's input affine) + conv2 + bias + ReLU (+ BN2 stats)
    h2, st2 = _conv_relu_stats(h1, w2s, b2.reshape(1, -1).astype(jnp.float32),
                               sc1, sh1, compute_dtype, row_tile)
    sc2, sh2 = _bn_scale_shift(st2, g2, bt2, count)

    # BN2 applied elementwise.
    y = _affine_apply(h2, sc2, sh2, row_tile)                          # f32 NHWC
    return jnp.transpose(y, (0, 3, 1, 2))


unet_convblock = jax.jit(_unet_convblock,
                         static_argnames=("compute_dtype", "row_tile"))


# ---------------------------------------------------------------------------
# Pure-JAX reference (training-mode BatchNorm, biased variance) + init + test.
# ---------------------------------------------------------------------------
def reference_forward(x_nchw, params):
    w1, b1, g1, bt1, w2, b2, g2, bt2 = params
    x = jnp.transpose(x_nchw, (0, 2, 3, 1))

    def block(h, wk, b, g, bt):
        h = lax.conv_general_dilated(
            h, wk, window_strides=(1, 1), padding="SAME",
            dimension_numbers=("NHWC", "HWIO", "NHWC"))
        h = jnp.maximum(h + b, 0.0)
        m = h.mean(axis=(0, 1, 2))
        v = ((h - m) ** 2).mean(axis=(0, 1, 2))
        return (h - m) / jnp.sqrt(v + EPS) * g + bt

    h = block(x, w1, b1, g1, bt1)
    h = block(h, w2, b2, g2, bt2)
    return jnp.transpose(h, (0, 3, 1, 2))


def init_params(key, in_channels, out_channels):
    ks = jax.random.split(key, 4)
    w1 = jax.random.normal(ks[0], (3, 3, in_channels, out_channels), jnp.float32) * 0.1
    b1 = jax.random.normal(ks[1], (out_channels,), jnp.float32) * 0.05
    w2 = jax.random.normal(ks[2], (3, 3, out_channels, out_channels), jnp.float32) * 0.1
    b2 = jax.random.normal(ks[3], (out_channels,), jnp.float32) * 0.05
    g1 = jnp.ones((out_channels,), jnp.float32)      # BatchNorm affine defaults
    bt1 = jnp.zeros((out_channels,), jnp.float32)
    g2 = jnp.ones((out_channels,), jnp.float32)
    bt2 = jnp.zeros((out_channels,), jnp.float32)
    return (w1, b1, g1, bt1, w2, b2, g2, bt2)


if __name__ == "__main__":
    key = jax.random.PRNGKey(0)
    kx, kp = jax.random.split(key)

    N, Cin, Cout, H, W = 2, 4, 8, 16, 16
    x = jax.random.normal(kx, (N, Cin, H, W), jnp.float32)
    params = init_params(kp, Cin, Cout)

    y_ref = jax.block_until_ready(reference_forward(x, params))

    # float32 path with a forced 2x2 grid -> validates the cross-tile BN reduction.
    y32 = jax.block_until_ready(
        unet_convblock(x, params, compute_dtype=jnp.float32, row_tile=8))
    assert y32.shape == (N, Cout, H, W)
    err32 = float(jnp.max(jnp.abs(y32 - y_ref)))
    assert err32 < 5e-4, f"f32 max abs err {err32}"

    # Default bfloat16 MXU path with automatic row-tile selection.
    ybf = jax.block_until_ready(unet_convblock(x, params))
    errbf = float(jnp.max(jnp.abs(ybf - y_ref)))
    assert errbf < 1.5e-1, f"bf16 max abs err {errbf}"

    print("KERNEL_OK")
</pallas_src>

<mosaic_0001>
module attributes {stable_mosaic.version = 11 : i64} {
  func.func @_conv_relu_stats_kernel(%arg0: i32, %arg1: i32, %arg2: memref<1x4xf32, #tpu.memory_space<vmem>>, %arg3: memref<1x4xf32, #tpu.memory_space<vmem>>, %arg4: memref<3x12x8xf32, #tpu.memory_space<vmem>>, %arg5: memref<1x8xf32, #tpu.memory_space<vmem>>, %arg6: memref<1x8x16x4xf32, #tpu.memory_space<vmem>>, %arg7: memref<1x1x16x4xf32, #tpu.memory_space<vmem>>, %arg8: memref<1x1x16x4xf32, #tpu.memory_space<vmem>>, %arg9: memref<1x8x16x8xf32, #tpu.memory_space<vmem>>, %arg10: memref<1x1x2x8xf32, #tpu.memory_space<vmem>>, %arg11: memref<128x8xf32, #tpu.memory_space<vmem>>) attributes {dimension_semantics = [#tpu.dimension_semantics<parallel>, #tpu.dimension_semantics<parallel>], iteration_bounds = array<i64: 2, 2>, scalar_prefetch = 0 : i64, scratch_operands = 1 : i64, tpu.core_type = #tpu.core_type<tc>, window_params = [{pipeline_mode = #tpu.pipeline_mode<synchronous>, transform_indices = @transform_0, window_bounds = array<i64: 1, 4>}, {pipeline_mode = #tpu.pipeline_mode<synchronous>, transform_indices = @transform_1, window_bounds = array<i64: 1, 4>}, {pipeline_mode = #tpu.pipeline_mode<synchronous>, transform_indices = @transform_2, window_bounds = array<i64: 3, 12, 8>}, {pipeline_mode = #tpu.pipeline_mode<synchronous>, transform_indices = @transform_3, window_bounds = array<i64: 1, 8>}, {transform_indices = @transform_4, window_bounds = array<i64: 1, 8, 16, 4>}, {transform_indices = @transform_5, window_bounds = array<i64: 1, 1, 16, 4>}, {transform_indices = @transform_6, window_bounds = array<i64: 1, 1, 16, 4>}, {transform_indices = @transform_7, window_bounds = array<i64: 1, 8, 16, 8>}, {transform_indices = @transform_8, window_bounds = array<i64: 1, 1, 2, 8>}]} {
    %c0 = arith.constant 0 : index
    %c0_0 = arith.constant 0 : index
    %0 = vector.load %arg2[%c0, %c0_0] : memref<1x4xf32, #tpu.memory_space<vmem>>, vector<1x4xf32>
    %c0_1 = arith.constant 0 : index
    %c0_2 = arith.constant 0 : index
    %1 = vector.load %arg3[%c0_1, %c0_2] : memref<1x4xf32, #tpu.memory_space<vmem>>, vector<1x4xf32>
    %c0_3 = arith.constant 0 : index
    %c0_4 = arith.constant 0 : index
    %c0_5 = arith.constant 0 : index
    %c0_6 = arith.constant 0 : index
    %2 = vector.load %arg7[%c0_3, %c0_4, %c0_5, %c0_6] : memref<1x1x16x4xf32, #tpu.memory_space<vmem>>, vector<1x1x16x4xf32>
    %3 = vector.shape_cast %2 : vector<1x1x16x4xf32> to vector<1x16x4xf32>
    %4 = vector.shape_cast %0 : vector<1x4xf32> to vector<1x1x4xf32>
    %5 = vector.broadcast %4 : vector<1x1x4xf32> to vector<1x16x4xf32>
    %6 = arith.mulf %3, %5 : vector<1x16x4xf32>
    %7 = vector.shape_cast %1 : vector<1x4xf32> to vector<1x1x4xf32>
    %8 = vector.broadcast %7 : vector<1x1x4xf32> to vector<1x16x4xf32>
    %9 = arith.addf %6, %8 : vector<1x16x4xf32>
    %c0_7 = arith.constant 0 : index
    %c0_8 = arith.constant 0 : index
    %c0_9 = arith.constant 0 : index
    %c0_10 = arith.constant 0 : index
    %10 = vector.load %arg6[%c0_7, %c0_8, %c0_9, %c0_10] : memref<1x8x16x4xf32, #tpu.memory_space<vmem>>, vector<1x8x16x4xf32>
    %11 = vector.shape_cast %10 : vector<1x8x16x4xf32> to vector<8x16x4xf32>
    %12 = vector.shape_cast %0 : vector<1x4xf32> to vector<1x1x4xf32>
    %13 = vector.broadcast %12 : vector<1x1x4xf32> to vector<8x16x4xf32>
    %14 = arith.mulf %11, %13 : vector<8x16x4xf32>
    %15 = vector.shape_cast %1 : vector<1x4xf32> to vector<1x1x4xf32>
    %16 = vector.broadcast %15 : vector<1x1x4xf32> to vector<8x16x4xf32>
    %17 = arith.addf %14, %16 : vector<8x16x4xf32>
    %c0_11 = arith.constant 0 : index
    %c0_12 = arith.constant 0 : index
    %c0_13 = arith.constant 0 : index
    %c0_14 = arith.constant 0 : index
    %18 = vector.load %arg8[%c0_11, %c0_12, %c0_13, %c0_14] : memref<1x1x16x4xf32, #tpu.memory_space<vmem>>, vector<1x1x16x4xf32>
    %19 = vector.shape_cast %18 : vector<1x1x16x4xf32> to vector<1x16x4xf32>
    %20 = vector.shape_cast %0 : vector<1x4xf32> to vector<1x1x4xf32>
    %21 = vector.broadcast %20 : vector<1x1x4xf32> to vector<1x16x4xf32>
    %22 = arith.mulf %19, %21 : vector<1x16x4xf32>
    %23 = vector.shape_cast %1 : vector<1x4xf32> to vector<1x1x4xf32>
    %24 = vector.broadcast %23 : vector<1x1x4xf32> to vector<1x16x4xf32>
    %25 = arith.addf %22, %24 : vector<1x16x4xf32>
    %cst = arith.constant 0.000000e+00 : f32
    %26 = vector.broadcast %cst : f32 to vector<1x16x4xf32>
    %c0_i32 = arith.constant 0 : i32
    %27 = arith.cmpi sgt, %arg1, %c0_i32 : i32
    %28 = arith.select %27, %9, %26 : vector<1x16x4xf32>
    %c1_i32 = arith.constant 1 : i32
    %29 = arith.cmpi slt, %arg1, %c1_i32 : i32
    %30 = arith.select %29, %25, %26 : vector<1x16x4xf32>
    %31 = tpu.concatenate %28, %17, %30 in 0 : vector<1x16x4xf32>, vector<8x16x4xf32>, vector<1x16x4xf32> -> vector<10x16x4xf32>
    %cst_15 = arith.constant 0.000000e+00 : f32
    %32 = vector.broadcast %cst_15 : f32 to vector<10x1x4xf32>
    %33 = vector.extract_strided_slice %31 {offsets = [0, 0, 0], sizes = [10, 15, 4], strides = [1, 1, 1]} : vector<10x16x4xf32> to vector<10x15x4xf32>
    %34 = tpu.concatenate %32, %33 in 1 : vector<10x1x4xf32>, vector<10x15x4xf32> -> vector<10x16x4xf32>
    %35 = vector.extract_strided_slice %31 {offsets = [0, 1, 0], sizes = [10, 15, 4], strides = [1, 1, 1]} : vector<10x16x4xf32> to vector<10x15x4xf32>
    %36 = tpu.concatenate %35, %32 in 1 : vector<10x15x4xf32>, vector<10x1x4xf32> -> vector<10x16x4xf32>
    %37 = tpu.concatenate %34, %31, %36 in 2 : vector<10x16x4xf32>, vector<10x16x4xf32>, vector<10x16x4xf32> -> vector<10x16x12xf32>
    %38 = vector.extract_strided_slice %37 {offsets = [0, 0, 0], sizes = [8, 16, 12], strides = [1, 1, 1]} : vector<10x16x12xf32> to vector<8x16x12xf32>
    %39 = vector.shape_cast %38 : vector<8x16x12xf32> to vector<128x12xf32>
    %c0_16 = arith.constant 0 : index
    %c0_17 = arith.constant 0 : index
    %c0_18 = arith.constant 0 : index
    %40 = vector.load %arg4[%c0_16, %c0_17, %c0_18] : memref<3x12x8xf32, #tpu.memory_space<vmem>>, vector<1x12x8xf32>
    %41 = vector.shape_cast %40 : vector<1x12x8xf32> to vector<12x8xf32>
    %cst_19 = arith.constant dense<0.000000e+00> : vector<128x8xf32>
    %42 = tpu.matmul %39, %41, %cst_19 {dimension_numbers = #tpu.dot_dimension_numbers<[1], [0], [0], [1], [0, 0, 1, 1], [], []>} : vector<128x12xf32>, vector<12x8xf32>, vector<128x8xf32> -> vector<128x8xf32>
    %c0_20 = arith.constant 0 : index
    %c0_21 = arith.constant 0 : index
    %43 = vector.load %arg11[%c0_20, %c0_21] : memref<128x8xf32, #tpu.memory_space<vmem>>, vector<128x8xf32>
    tpu.vector_store %arg11[%c0_20, %c0_21], %42 {strides = array<i32>} : memref<128x8xf32, #tpu.memory_space<vmem>>, vector<128x8xf32>,
    %44 = vector.extract_strided_slice %37 {offsets = [1, 0, 0], sizes = [8, 16, 12], strides = [1, 1, 1]} : vector<10x16x12xf32> to vector<8x16x12xf32>
    %45 = vector.shape_cast %44 : vector<8x16x12xf32> to vector<128x12xf32>
    %c1 = arith.constant 1 : index
    %c0_22 = arith.constant 0 : index
    %c0_23 = arith.constant 0 : index
    %46 = vector.load %arg4[%c1, %c0_22, %c0_23] : memref<3x12x8xf32, #tpu.memory_space<vmem>>, vector<1x12x8xf32>
    %47 = vector.shape_cast %46 : vector<1x12x8xf32> to vector<12x8xf32>
    %cst_24 = arith.constant dense<0.000000e+00> : vector<128x8xf32>
    %48 = tpu.matmul %45, %47, %cst_24 {dimension_numbers = #tpu.dot_dimension_numbers<[1], [0], [0], [1], [0, 0, 1, 1], [], []>} : vector<128x12xf32>, vector<12x8xf32>, vector<128x8xf32> -> vector<128x8xf32>
    %c0_25 = arith.constant 0 : index
    %c0_26 = arith.constant 0 : index
    %49 = vector.load %arg11[%c0_25, %c0_26] : memref<128x8xf32, #tpu.memory_space<vmem>>, vector<128x8xf32>
    %50 = arith.addf %49, %48 : vector<128x8xf32>
    %c0_27 = arith.constant 0 : index
    %c0_28 = arith.constant 0 : index
    %51 = vector.load %arg11[%c0_27, %c0_28] : memref<128x8xf32, #tpu.memory_space<vmem>>, vector<128x8xf32>
    tpu.vector_store %arg11[%c0_27, %c0_28], %50 {strides = array<i32>} : memref<128x8xf32, #tpu.memory_space<vmem>>, vector<128x8xf32>,
    %52 = vector.extract_strided_slice %37 {offsets = [2, 0, 0], sizes = [8, 16, 12], strides = [1, 1, 1]} : vector<10x16x12xf32> to vector<8x16x12xf32>
    %53 = vector.shape_cast %52 : vector<8x16x12xf32> to vector<128x12xf32>
    %c2 = arith.constant 2 : index
    %c0_29 = arith.constant 0 : index
    %c0_30 = arith.constant 0 : index
    %54 = vector.load %arg4[%c2, %c0_29, %c0_30] : memref<3x12x8xf32, #tpu.memory_space<vmem>>, vector<1x12x8xf32>
    %55 = vector.shape_cast %54 : vector<1x12x8xf32> to vector<12x8xf32>
    %cst_31 = arith.constant dense<0.000000e+00> : vector<128x8xf32>
    %56 = tpu.matmul %53, %55, %cst_31 {dimension_numbers = #tpu.dot_dimension_numbers<[1], [0], [0], [1], [0, 0, 1, 1], [], []>} : vector<128x12xf32>, vector<12x8xf32>, vector<128x8xf32> -> vector<128x8xf32>
    %c0_32 = arith.constant 0 : index
    %c0_33 = arith.constant 0 : index
    %57 = vector.load %arg11[%c0_32, %c0_33] : memref<128x8xf32, #tpu.memory_space<vmem>>, vector<128x8xf32>
    %58 = arith.addf %57, %56 : vector<128x8xf32>
    %c0_34 = arith.constant 0 : index
    %c0_35 = arith.constant 0 : index
    %59 = vector.load %arg11[%c0_34, %c0_35] : memref<128x8xf32, #tpu.memory_space<vmem>>, vector<128x8xf32>
    tpu.vector_store %arg11[%c0_34, %c0_35], %58 {strides = array<i32>} : memref<128x8xf32, #tpu.memory_space<vmem>>, vector<128x8xf32>,
    %c0_36 = arith.constant 0 : index
    %c0_37 = arith.constant 0 : index
    %60 = vector.load %arg11[%c0_36, %c0_37] : memref<128x8xf32, #tpu.memory_space<vmem>>, vector<128x8xf32>
    %c0_38 = arith.constant 0 : index
    %c0_39 = arith.constant 0 : index
    %61 = vector.load %arg5[%c0_38, %c0_39] : memref<1x8xf32, #tpu.memory_space<vmem>>, vector<1x8xf32>
    %62 = vector.broadcast %61 : vector<1x8xf32> to vector<128x8xf32>
    %63 = arith.addf %60, %62 : vector<128x8xf32>
    %cst_40 = arith.constant 0.000000e+00 : f32
    %64 = vector.broadcast %cst_40 : f32 to vector<128x8xf32>
    %65 = arith.maximumf %63, %64 : vector<128x8xf32>
    %cst_41 = arith.constant dense<0.000000e+00> : vector<8xf32>
    %66 = vector.multi_reduction <add>, %65, %cst_41 [0] : vector<128x8xf32> to vector<8xf32>
    %67 = vector.shape_cast %66 : vector<8xf32> to vector<1x8xf32>
    %68 = arith.mulf %65, %65 : vector<128x8xf32>
    %cst_42 = arith.constant dense<0.000000e+00> : vector<8xf32>
    %69 = vector.multi_reduction <add>, %68, %cst_42 [0] : vector<128x8xf32> to vector<8xf32>
    %70 = vector.shape_cast %69 : vector<8xf32> to vector<1x8xf32>
    %71 = tpu.concatenate %67, %70 in 0 : vector<1x8xf32>, vector<1x8xf32> -> vector<2x8xf32>
    %72 = vector.shape_cast %71 : vector<2x8xf32> to vector<1x1x2x8xf32>
    %c0_43 = arith.constant 0 : index
    %c0_44 = arith.constant 0 : index
    %c0_45 = arith.constant 0 : index
    %c0_46 = arith.constant 0 : index
    %73 = vector.load %arg10[%c0_43, %c0_44, %c0_45, %c0_46] : memref<1x1x2x8xf32, #tpu.memory_space<vmem>>, vector<1x1x2x8xf32>
    tpu.vector_store %arg10[%c0_43, %c0_44, %c0_45, %c0_46], %72 {strides = array<i32>} : memref<1x1x2x8xf32, #tpu.memory_space<vmem>>, vector<1x1x2x8xf32>,
    %74 = vector.shape_cast %65 : vector<128x8xf32> to vector<1x8x16x8xf32>
    %c0_47 = arith.constant 0 : index
    %c0_48 = arith.constant 0 : index
    %c0_49 = arith.constant 0 : index
    %c0_50 = arith.constant 0 : index
    %75 = vector.load %arg9[%c0_47, %c0_48, %c0_49, %c0_50] : memref<1x8x16x8xf32, #tpu.memory_space<vmem>>, vector<1x8x16x8xf32>
    tpu.vector_store %arg9[%c0_47, %c0_48, %c0_49, %c0_50], %74 {strides = array<i32>} : memref<1x8x16x8xf32, #tpu.memory_space<vmem>>, vector<1x8x16x8xf32>,
    return
  }
  func.func @transform_0(%arg0: i32, %arg1: i32) -> (i32, i32) {
    %c0_i32 = arith.constant 0 : i32
    %c0_i32_0 = arith.constant 0 : i32
    %c0_i32_1 = arith.constant 0 : i32
    return %c0_i32, %c0_i32_0 : i32, i32
  }
  func.func @transform_1(%arg0: i32, %arg1: i32) -> (i32, i32) {
    %c0_i32 = arith.constant 0 : i32
    %c0_i32_0 = arith.constant 0 : i32
    %c0_i32_1 = arith.constant 0 : i32
    return %c0_i32, %c0_i32_0 : i32, i32
  }
  func.func @transform_2(%arg0: i32, %arg1: i32) -> (i32, i32, i32) {
    %c0_i32 = arith.constant 0 : i32
    %c0_i32_0 = arith.constant 0 : i32
    %c0_i32_1 = arith.constant 0 : i32
    %c0_i32_2 = arith.constant 0 : i32
    return %c0_i32, %c0_i32_0, %c0_i32_1 : i32, i32, i32
  }
  func.func @transform_3(%arg0: i32, %arg1: i32) -> (i32, i32) {
    %c0_i32 = arith.constant 0 : i32
    %c0_i32_0 = arith.constant 0 : i32
    %c0_i32_1 = arith.constant 0 : i32
    return %c0_i32, %c0_i32_0 : i32, i32
  }
  func.func @transform_4(%arg0: i32, %arg1: i32) -> (i32, i32, i32, i32) {
    %c0_i32 = arith.constant 0 : i32
    %c0_i32_0 = arith.constant 0 : i32
    %c0_i32_1 = arith.constant 0 : i32
    return %arg0, %arg1, %c0_i32, %c0_i32_0 : i32, i32, i32, i32
  }
  func.func @transform_5(%arg0: i32, %arg1: i32) -> (i32, i32, i32, i32) {
    %c8_i32 = arith.constant 8 : i32
    %0 = arith.muli %arg1, %c8_i32 : i32
    %c1_i32 = arith.constant 1 : i32
    %1 = arith.subi %0, %c1_i32 : i32
    %c0_i32 = arith.constant 0 : i32
    %2 = arith.maxsi %1, %c0_i32 : i32
    %c0_i32_0 = arith.constant 0 : i32
    %c0_i32_1 = arith.constant 0 : i32
    %c0_i32_2 = arith.constant 0 : i32
    return %arg0, %2, %c0_i32_0, %c0_i32_1 : i32, i32, i32, i32
  }
  func.func @transform_6(%arg0: i32, %arg1: i32) -> (i32, i32, i32, i32) {
    %c1_i32 = arith.constant 1 : i32
    %0 = arith.addi %arg1, %c1_i32 : i32
    %c8_i32 = arith.constant 8 : i32
    %1 = arith.muli %0, %c8_i32 : i32
    %c15_i32 = arith.constant 15 : i32
    %2 = arith.minsi %1, %c15_i32 : i32
    %c0_i32 = arith.constant 0 : i32
    %c0_i32_0 = arith.constant 0 : i32
    %c0_i32_1 = arith.constant 0 : i32
    return %arg0, %2, %c0_i32, %c0_i32_0 : i32, i32, i32, i32
  }
  func.func @transform_7(%arg0: i32, %arg1: i32) -> (i32, i32, i32, i32) {
    %c0_i32 = arith.constant 0 : i32
    %c0_i32_0 = arith.constant 0 : i32
    %c0_i32_1 = arith.constant 0 : i32
    return %arg0, %arg1, %c0_i32, %c0_i32_0 : i32, i32, i32, i32
  }
  func.func @transform_8(%arg0: i32, %arg1: i32) -> (i32, i32, i32, i32) {
    %c0_i32 = arith.constant 0 : i32
    %c0_i32_0 = arith.constant 0 : i32
    %c0_i32_1 = arith.constant 0 : i32
    return %arg0, %arg1, %c0_i32, %c0_i32_0 : i32, i32, i32, i32
  }
}

module attributes {stable_mosaic.version = 11 : i64} {
  func.func @_affine_apply_kernel(%arg0: i32, %arg1: i32, %arg2: memref<1x8xf32, #tpu.memory_space<vmem>>, %arg3: memref<1x8xf32, #tpu.memory_space<vmem>>, %arg4: memref<1x8x16x8xf32, #tpu.memory_space<vmem>>, %arg5: memref<1x8x16x8xf32, #tpu.memory_space<vmem>>) attributes {dimension_semantics = [#tpu.dimension_semantics<parallel>, #tpu.dimension_semantics<parallel>], iteration_bounds = array<i64: 2, 2>, scalar_prefetch = 0 : i64, scratch_operands = 0 : i64, tpu.core_type = #tpu.core_type<tc>, window_params = [{pipeline_mode = #tpu.pipeline_mode<synchronous>, transform_indices = @transform_0, window_bounds = array<i64: 1, 8>}, {pipeline_mode = #tpu.pipeline_mode<synchronous>, transform_indices = @transform_1, window_bounds = array<i64: 1, 8>}, {transform_indices = @transform_2, window_bounds = array<i64: 1, 8, 16, 8>}, {transform_indices = @transform_3, window_bounds = array<i64: 1, 8, 16, 8>}]} {
    %c0 = arith.constant 0 : index
    %c0_0 = arith.constant 0 : index
    %c0_1 = arith.constant 0 : index
    %c0_2 = arith.constant 0 : index
    %0 = vector.load %arg4[%c0, %c0_0, %c0_1, %c0_2] : memref<1x8x16x8xf32, #tpu.memory_space<vmem>>, vector<1x8x16x8xf32>
    %c0_3 = arith.constant 0 : index
    %c0_4 = arith.constant 0 : index
    %1 = vector.load %arg2[%c0_3, %c0_4] : memref<1x8xf32, #tpu.memory_space<vmem>>, vector<1x8xf32>
    %2 = vector.shape_cast %1 : vector<1x8xf32> to vector<1x1x1x8xf32>
    %3 = vector.broadcast %2 : vector<1x1x1x8xf32> to vector<1x8x16x8xf32>
    %4 = arith.mulf %0, %3 : vector<1x8x16x8xf32>
    %c0_5 = arith.constant 0 : index
    %c0_6 = arith.constant 0 : index
    %5 = vector.load %arg3[%c0_5, %c0_6] : memref<1x8xf32, #tpu.memory_space<vmem>>, vector<1x8xf32>
    %6 = vector.shape_cast %5 : vector<1x8xf32> to vector<1x1x1x8xf32>
    %7 = vector.broadcast %6 : vector<1x1x1x8xf32> to vector<1x8x16x8xf32>
    %8 = arith.addf %4, %7 : vector<1x8x16x8xf32>
    %c0_7 = arith.constant 0 : index
    %c0_8 = arith.constant 0 : index
    %c0_9 = arith.constant 0 : index
    %c0_10 = arith.constant 0 : index
    %9 = vector.load %arg5[%c0_7, %c0_8, %c0_9, %c0_10] : memref<1x8x16x8xf32, #tpu.memory_space<vmem>>, vector<1x8x16x8xf32>
    tpu.vector_store %arg5[%c0_7, %c0_8, %c0_9, %c0_10], %8 {strides = array<i32>} : memref<1x8x16x8xf32, #tpu.memory_space<vmem>>, vector<1x8x16x8xf32>,
    return
  }
  func.func @transform_0(%arg0: i32, %arg1: i32) -> (i32, i32) {
    %c0_i32 = arith.constant 0 : i32
    %c0_i32_0 = arith.constant 0 : i32
    %c0_i32_1 = arith.constant 0 : i32
    return %c0_i32, %c0_i32_0 : i32, i32
  }
  func.func @transform_1(%arg0: i32, %arg1: i32) -> (i32, i32) {
    %c0_i32 = arith.constant 0 : i32
    %c0_i32_0 = arith.constant 0 : i32
    %c0_i32_1 = arith.constant 0 : i32
    return %c0_i32, %c0_i32_0 : i32, i32
  }
  func.func @transform_2(%arg0: i32, %arg1: i32) -> (i32, i32, i32, i32) {
    %c0_i32 = arith.constant 0 : i32
    %c0_i32_0 = arith.constant 0 : i32
    %c0_i32_1 = arith.constant 0 : i32
    return %arg0, %arg1, %c0_i32, %c0_i32_0 : i32, i32, i32, i32
  }
  func.func @transform_3(%arg0: i32, %arg1: i32) -> (i32, i32, i32, i32) {
    %c0_i32 = arith.constant 0 : i32
    %c0_i32_0 = arith.constant 0 : i32
    %c0_i32_1 = arith.constant 0 : i32
    return %arg0, %arg1, %c0_i32, %c0_i32_0 : i32, i32, i32, i32
  }
}

module attributes {stable_mosaic.version = 11 : i64} {
  func.func @_conv_relu_stats_kernel(%arg0: i32, %arg1: i32, %arg2: memref<1x8xf32, #tpu.memory_space<vmem>>, %arg3: memref<1x8xf32, #tpu.memory_space<vmem>>, %arg4: memref<3x24x8xf32, #tpu.memory_space<vmem>>, %arg5: memref<1x8xf32, #tpu.memory_space<vmem>>, %arg6: memref<1x8x16x8xf32, #tpu.memory_space<vmem>>, %arg7: memref<1x1x16x8xf32, #tpu.memory_space<vmem>>, %arg8: memref<1x1x16x8xf32, #tpu.memory_space<vmem>>, %arg9: memref<1x8x16x8xf32, #tpu.memory_space<vmem>>, %arg10: memref<1x1x2x8xf32, #tpu.memory_space<vmem>>, %arg11: memref<128x8xf32, #tpu.memory_space<vmem>>) attributes {dimension_semantics = [#tpu.dimension_semantics<parallel>, #tpu.dimension_semantics<parallel>], iteration_bounds = array<i64: 2, 2>, scalar_prefetch = 0 : i64, scratch_operands = 1 : i64, tpu.core_type = #tpu.core_type<tc>, window_params = [{pipeline_mode = #tpu.pipeline_mode<synchronous>, transform_indices = @transform_0, window_bounds = array<i64: 1, 8>}, {pipeline_mode = #tpu.pipeline_mode<synchronous>, transform_indices = @transform_1, window_bounds = array<i64: 1, 8>}, {pipeline_mode = #tpu.pipeline_mode<synchronous>, transform_indices = @transform_2, window_bounds = array<i64: 3, 24, 8>}, {pipeline_mode = #tpu.pipeline_mode<synchronous>, transform_indices = @transform_3, window_bounds = array<i64: 1, 8>}, {transform_indices = @transform_4, window_bounds = array<i64: 1, 8, 16, 8>}, {transform_indices = @transform_5, window_bounds = array<i64: 1, 1, 16, 8>}, {transform_indices = @transform_6, window_bounds = array<i64: 1, 1, 16, 8>}, {transform_indices = @transform_7, window_bounds = array<i64: 1, 8, 16, 8>}, {transform_indices = @transform_8, window_bounds = array<i64: 1, 1, 2, 8>}]} {
    %c0 = arith.constant 0 : index
    %c0_0 = arith.constant 0 : index
    %0 = vector.load %arg2[%c0, %c0_0] : memref<1x8xf32, #tpu.memory_space<vmem>>, vector<1x8xf32>
    %c0_1 = arith.constant 0 : index
    %c0_2 = arith.constant 0 : index
    %1 = vector.load %arg3[%c0_1, %c0_2] : memref<1x8xf32, #tpu.memory_space<vmem>>, vector<1x8xf32>
    %c0_3 = arith.constant 0 : index
    %c0_4 = arith.constant 0 : index
    %c0_5 = arith.constant 0 : index
    %c0_6 = arith.constant 0 : index
    %2 = vector.load %arg7[%c0_3, %c0_4, %c0_5, %c0_6] : memref<1x1x16x8xf32, #tpu.memory_space<vmem>>, vector<1x1x16x8xf32>
    %3 = vector.shape_cast %2 : vector<1x1x16x8xf32> to vector<1x16x8xf32>
    %4 = vector.shape_cast %0 : vector<1x8xf32> to vector<1x1x8xf32>
    %5 = vector.broadcast %4 : vector<1x1x8xf32> to vector<1x16x8xf32>
    %6 = arith.mulf %3, %5 : vector<1x16x8xf32>
    %7 = vector.shape_cast %1 : vector<1x8xf32> to vector<1x1x8xf32>
    %8 = vector.broadcast %7 : vector<1x1x8xf32> to vector<1x16x8xf32>
    %9 = arith.addf %6, %8 : vector<1x16x8xf32>
    %c0_7 = arith.constant 0 : index
    %c0_8 = arith.constant 0 : index
    %c0_9 = arith.constant 0 : index
    %c0_10 = arith.constant 0 : index
    %10 = vector.load %arg6[%c0_7, %c0_8, %c0_9, %c0_10] : memref<1x8x16x8xf32, #tpu.memory_space<vmem>>, vector<1x8x16x8xf32>
    %11 = vector.shape_cast %10 : vector<1x8x16x8xf32> to vector<8x16x8xf32>
    %12 = vector.shape_cast %0 : vector<1x8xf32> to vector<1x1x8xf32>
    %13 = vector.broadcast %12 : vector<1x1x8xf32> to vector<8x16x8xf32>
    %14 = arith.mulf %11, %13 : vector<8x16x8xf32>
    %15 = vector.shape_cast %1 : vector<1x8xf32> to vector<1x1x8xf32>
    %16 = vector.broadcast %15 : vector<1x1x8xf32> to vector<8x16x8xf32>
    %17 = arith.addf %14, %16 : vector<8x16x8xf32>
    %c0_11 = arith.constant 0 : index
    %c0_12 = arith.constant 0 : index
    %c0_13 = arith.constant 0 : index
    %c0_14 = arith.constant 0 : index
    %18 = vector.load %arg8[%c0_11, %c0_12, %c0_13, %c0_14] : memref<1x1x16x8xf32, #tpu.memory_space<vmem>>, vector<1x1x16x8xf32>
    %19 = vector.shape_cast %18 : vector<1x1x16x8xf32> to vector<1x16x8xf32>
    %20 = vector.shape_cast %0 : vector<1x8xf32> to vector<1x1x8xf32>
    %21 = vector.broadcast %20 : vector<1x1x8xf32> to vector<1x16x8xf32>
    %22 = arith.mulf %19, %21 : vector<1x16x8xf32>
    %23 = vector.shape_cast %1 : vector<1x8xf32> to vector<1x1x8xf32>
    %24 = vector.broadcast %23 : vector<1x1x8xf32> to vector<1x16x8xf32>
    %25 = arith.addf %22, %24 : vector<1x16x8xf32>
    %cst = arith.constant 0.000000e+00 : f32
    %26 = vector.broadcast %cst : f32 to vector<1x16x8xf32>
    %c0_i32 = arith.constant 0 : i32
    %27 = arith.cmpi sgt, %arg1, %c0_i32 : i32
    %28 = arith.select %27, %9, %26 : vector<1x16x8xf32>
    %c1_i32 = arith.constant 1 : i32
    %29 = arith.cmpi slt, %arg1, %c1_i32 : i32
    %30 = arith.select %29, %25, %26 : vector<1x16x8xf32>
    %31 = tpu.concatenate %28, %17, %30 in 0 : vector<1x16x8xf32>, vector<8x16x8xf32>, vector<1x16x8xf32> -> vector<10x16x8xf32>
    %cst_15 = arith.constant 0.000000e+00 : f32
    %32 = vector.broadcast %cst_15 : f32 to vector<10x1x8xf32>
    %33 = vector.extract_strided_slice %31 {offsets = [0, 0, 0], sizes = [10, 15, 8], strides = [1, 1, 1]} : vector<10x16x8xf32> to vector<10x15x8xf32>
    %34 = tpu.concatenate %32, %33 in 1 : vector<10x1x8xf32>, vector<10x15x8xf32> -> vector<10x16x8xf32>
    %35 = vector.extract_strided_slice %31 {offsets = [0, 1, 0], sizes = [10, 15, 8], strides = [1, 1, 1]} : vector<10x16x8xf32> to vector<10x15x8xf32>
    %36 = tpu.concatenate %35, %32 in 1 : vector<10x15x8xf32>, vector<10x1x8xf32> -> vector<10x16x8xf32>
    %37 = tpu.concatenate %34, %31, %36 in 2 : vector<10x16x8xf32>, vector<10x16x8xf32>, vector<10x16x8xf32> -> vector<10x16x24xf32>
    %38 = vector.extract_strided_slice %37 {offsets = [0, 0, 0], sizes = [8, 16, 24], strides = [1, 1, 1]} : vector<10x16x24xf32> to vector<8x16x24xf32>
    %39 = vector.shape_cast %38 : vector<8x16x24xf32> to vector<128x24xf32>
    %c0_16 = arith.constant 0 : index
    %c0_17 = arith.constant 0 : index
    %c0_18 = arith.constant 0 : index
    %40 = vector.load %arg4[%c0_16, %c0_17, %c0_18] : memref<3x24x8xf32, #tpu.memory_space<vmem>>, vector<1x24x8xf32>
    %41 = vector.shape_cast %40 : vector<1x24x8xf32> to vector<24x8xf32>
    %cst_19 = arith.constant dense<0.000000e+00> : vector<128x8xf32>
    %42 = tpu.matmul %39, %41, %cst_19 {dimension_numbers = #tpu.dot_dimension_numbers<[1], [0], [0], [1], [0, 0, 1, 1], [], []>} : vector<128x24xf32>, vector<24x8xf32>, vector<128x8xf32> -> vector<128x8xf32>
    %c0_20 = arith.constant 0 : index
    %c0_21 = arith.constant 0 : index
    %43 = vector.load %arg11[%c0_20, %c0_21] : memref<128x8xf32, #tpu.memory_space<vmem>>, vector<128x8xf32>
    tpu.vector_store %arg11[%c0_20, %c0_21], %42 {strides = array<i32>} : memref<128x8xf32, #tpu.memory_space<vmem>>, vector<128x8xf32>,
    %44 = vector.extract_strided_slice %37 {offsets = [1, 0, 0], sizes = [8, 16, 24], strides = [1, 1, 1]} : vector<10x16x24xf32> to vector<8x16x24xf32>
    %45 = vector.shape_cast %44 : vector<8x16x24xf32> to vector<128x24xf32>
    %c1 = arith.constant 1 : index
    %c0_22 = arith.constant 0 : index
    %c0_23 = arith.constant 0 : index
    %46 = vector.load %arg4[%c1, %c0_22, %c0_23] : memref<3x24x8xf32, #tpu.memory_space<vmem>>, vector<1x24x8xf32>
    %47 = vector.shape_cast %46 : vector<1x24x8xf32> to vector<24x8xf32>
    %cst_24 = arith.constant dense<0.000000e+00> : vector<128x8xf32>
    %48 = tpu.matmul %45, %47, %cst_24 {dimension_numbers = #tpu.dot_dimension_numbers<[1], [0], [0], [1], [0, 0, 1, 1], [], []>} : vector<128x24xf32>, vector<24x8xf32>, vector<128x8xf32> -> vector<128x8xf32>
    %c0_25 = arith.constant 0 : index
    %c0_26 = arith.constant 0 : index
    %49 = vector.load %arg11[%c0_25, %c0_26] : memref<128x8xf32, #tpu.memory_space<vmem>>, vector<128x8xf32>
    %50 = arith.addf %49, %48 : vector<128x8xf32>
    %c0_27 = arith.constant 0 : index
    %c0_28 = arith.constant 0 : index
    %51 = vector.load %arg11[%c0_27, %c0_28] : memref<128x8xf32, #tpu.memory_space<vmem>>, vector<128x8xf32>
    tpu.vector_store %arg11[%c0_27, %c0_28], %50 {strides = array<i32>} : memref<128x8xf32, #tpu.memory_space<vmem>>, vector<128x8xf32>,
    %52 = vector.extract_strided_slice %37 {offsets = [2, 0, 0], sizes = [8, 16, 24], strides = [1, 1, 1]} : vector<10x16x24xf32> to vector<8x16x24xf32>
    %53 = vector.shape_cast %52 : vector<8x16x24xf32> to vector<128x24xf32>
    %c2 = arith.constant 2 : index
    %c0_29 = arith.constant 0 : index
    %c0_30 = arith.constant 0 : index
    %54 = vector.load %arg4[%c2, %c0_29, %c0_30] : memref<3x24x8xf32, #tpu.memory_space<vmem>>, vector<1x24x8xf32>
    %55 = vector.shape_cast %54 : vector<1x24x8xf32> to vector<24x8xf32>
    %cst_31 = arith.constant dense<0.000000e+00> : vector<128x8xf32>
    %56 = tpu.matmul %53, %55, %cst_31 {dimension_numbers = #tpu.dot_dimension_numbers<[1], [0], [0], [1], [0, 0, 1, 1], [], []>} : vector<128x24xf32>, vector<24x8xf32>, vector<128x8xf32> -> vector<128x8xf32>
    %c0_32 = arith.constant 0 : index
    %c0_33 = arith.constant 0 : index
    %57 = vector.load %arg11[%c0_32, %c0_33] : memref<128x8xf32, #tpu.memory_space<vmem>>, vector<128x8xf32>
    %58 = arith.addf %57, %56 : vector<128x8xf32>
    %c0_34 = arith.constant 0 : index
    %c0_35 = arith.constant 0 : index
    %59 = vector.load %arg11[%c0_34, %c0_35] : memref<128x8xf32, #tpu.memory_space<vmem>>, vector<128x8xf32>
    tpu.vector_store %arg11[%c0_34, %c0_35], %58 {strides = array<i32>} : memref<128x8xf32, #tpu.memory_space<vmem>>, vector<128x8xf32>,
    %c0_36 = arith.constant 0 : index
    %c0_37 = arith.constant 0 : index
    %60 = vector.load %arg11[%c0_36, %c0_37] : memref<128x8xf32, #tpu.memory_space<vmem>>, vector<128x8xf32>
    %c0_38 = arith.constant 0 : index
    %c0_39 = arith.constant 0 : index
    %61 = vector.load %arg5[%c0_38, %c0_39] : memref<1x8xf32, #tpu.memory_space<vmem>>, vector<1x8xf32>
    %62 = vector.broadcast %61 : vector<1x8xf32> to vector<128x8xf32>
    %63 = arith.addf %60, %62 : vector<128x8xf32>
    %cst_40 = arith.constant 0.000000e+00 : f32
    %64 = vector.broadcast %cst_40 : f32 to vector<128x8xf32>
    %65 = arith.maximumf %63, %64 : vector<128x8xf32>
    %cst_41 = arith.constant dense<0.000000e+00> : vector<8xf32>
    %66 = vector.multi_reduction <add>, %65, %cst_41 [0] : vector<128x8xf32> to vector<8xf32>
    %67 = vector.shape_cast %66 : vector<8xf32> to vector<1x8xf32>
    %68 = arith.mulf %65, %65 : vector<128x8xf32>
    %cst_42 = arith.constant dense<0.000000e+00> : vector<8xf32>
    %69 = vector.multi_reduction <add>, %68, %cst_42 [0] : vector<128x8xf32> to vector<8xf32>
    %70 = vector.shape_cast %69 : vector<8xf32> to vector<1x8xf32>
    %71 = tpu.concatenate %67, %70 in 0 : vector<1x8xf32>, vector<1x8xf32> -> vector<2x8xf32>
    %72 = vector.shape_cast %71 : vector<2x8xf32> to vector<1x1x2x8xf32>
    %c0_43 = arith.constant 0 : index
    %c0_44 = arith.constant 0 : index
    %c0_45 = arith.constant 0 : index
    %c0_46 = arith.constant 0 : index
    %73 = vector.load %arg10[%c0_43, %c0_44, %c0_45, %c0_46] : memref<1x1x2x8xf32, #tpu.memory_space<vmem>>, vector<1x1x2x8xf32>
    tpu.vector_store %arg10[%c0_43, %c0_44, %c0_45, %c0_46], %72 {strides = array<i32>} : memref<1x1x2x8xf32, #tpu.memory_space<vmem>>, vector<1x1x2x8xf32>,
    %74 = vector.shape_cast %65 : vector<128x8xf32> to vector<1x8x16x8xf32>
    %c0_47 = arith.constant 0 : index
    %c0_48 = arith.constant 0 : index
    %c0_49 = arith.constant 0 : index
    %c0_50 = arith.constant 0 : index
    %75 = vector.load %arg9[%c0_47, %c0_48, %c0_49, %c0_50] : memref<1x8x16x8xf32, #tpu.memory_space<vmem>>, vector<1x8x16x8xf32>
    tpu.vector_store %arg9[%c0_47, %c0_48, %c0_49, %c0_50], %74 {strides = array<i32>} : memref<1x8x16x8xf32, #tpu.memory_space<vmem>>, vector<1x8x16x8xf32>,
    return
  }
  func.func @transform_0(%arg0: i32, %arg1: i32) -> (i32, i32) {
    %c0_i32 = arith.constant 0 : i32
    %c0_i32_0 = arith.constant 0 : i32
    %c0_i32_1 = arith.constant 0 : i32
    return %c0_i32, %c0_i32_0 : i32, i32
  }
  func.func @transform_1(%arg0: i32, %arg1: i32) -> (i32, i32) {
    %c0_i32 = arith.constant 0 : i32
    %c0_i32_0 = arith.constant 0 : i32
    %c0_i32_1 = arith.constant 0 : i32
    return %c0_i32, %c0_i32_0 : i32, i32
  }
  func.func @transform_2(%arg0: i32, %arg1: i32) -> (i32, i32, i32) {
    %c0_i32 = arith.constant 0 : i32
    %c0_i32_0 = arith.constant 0 : i32
    %c0_i32_1 = arith.constant 0 : i32
    %c0_i32_2 = arith.constant 0 : i32
    return %c0_i32, %c0_i32_0, %c0_i32_1 : i32, i32, i32
  }
  func.func @transform_3(%arg0: i32, %arg1: i32) -> (i32, i32) {
    %c0_i32 = arith.constant 0 : i32
    %c0_i32_0 = arith.constant 0 : i32
    %c0_i32_1 = arith.constant 0 : i32
    return %c0_i32, %c0_i32_0 : i32, i32
  }
  func.func @transform_4(%arg0: i32, %arg1: i32) -> (i32, i32, i32, i32) {
    %c0_i32 = arith.constant 0 : i32
    %c0_i32_0 = arith.constant 0 : i32
    %c0_i32_1 = arith.constant 0 : i32
    return %arg0, %arg1, %c0_i32, %c0_i32_0 : i32, i32, i32, i32
  }
  func.func @transform_5(%arg0: i32, %arg1: i32) -> (i32, i32, i32, i32) {
    %c8_i32 = arith.constant 8 : i32
    %0 = arith.muli %arg1, %c8_i32 : i32
    %c1_i32 = arith.constant 1 : i32
    %1 = arith.subi %0, %c1_i32 : i32
    %c0_i32 = arith.constant 0 : i32
    %2 = arith.maxsi %1, %c0_i32 : i32
    %c0_i32_0 = arith.constant 0 : i32
    %c0_i32_1 = arith.constant 0 : i32
    %c0_i32_2 = arith.constant 0 : i32
    return %arg0, %2, %c0_i32_0, %c0_i32_1 : i32, i32, i32, i32
  }
  func.func @transform_6(%arg0: i32, %arg1: i32) -> (i32, i32, i32, i32) {
    %c1_i32 = arith.constant 1 : i32
    %0 = arith.addi %arg1, %c1_i32 : i32
    %c8_i32 = arith.constant 8 : i32
    %1 = arith.muli %0, %c8_i32 : i32
    %c15_i32 = arith.constant 15 : i32
    %2 = arith.minsi %1, %c15_i32 : i32
    %c0_i32 = arith.constant 0 : i32
    %c0_i32_0 = arith.constant 0 : i32
    %c0_i32_1 = arith.constant 0 : i32
    return %arg0, %2, %c0_i32, %c0_i32_0 : i32, i32, i32, i32
  }
  func.func @transform_7(%arg0: i32, %arg1: i32) -> (i32, i32, i32, i32) {
    %c0_i32 = arith.constant 0 : i32
    %c0_i32_0 = arith.constant 0 : i32
    %c0_i32_1 = arith.constant 0 : i32
    return %arg0, %arg1, %c0_i32, %c0_i32_0 : i32, i32, i32, i32
  }
  func.func @transform_8(%arg0: i32, %arg1: i32) -> (i32, i32, i32, i32) {
    %c0_i32 = arith.constant 0 : i32
    %c0_i32_0 = arith.constant 0 : i32
    %c0_i32_1 = arith.constant 0 : i32
    return %arg0, %arg1, %c0_i32, %c0_i32_0 : i32, i32, i32, i32
  }
}

</mosaic_0001>

<llo_original>
// kernel: _unet_convblock.5
$region0: #{_unet_convblock.5}
  #allocation0 [shape = 'u32[]', space=smem, size = 0x4, offset = 0x4, fixed_abs, tag = 'smem constant byte address 0x4 - core index']
  #allocation1 [shape = 'u32[72,128]{1,0:T(1,128)}', space=vmem, size = 0x9000, scoped, tag = 'internal scratch']
  %s0 = inlined_call_operand.vmem [shape: f32[1,8], index: 0, kind: input, shape index: {}]
  %s1 = inlined_call_operand.vmem [shape: f32[1,8], index: 1, kind: input, shape index: {}]
  %s2 = inlined_call_operand.vmem [shape: f32[2,16,16,8], index: 2, kind: input, shape index: {}]
  %s3 = inlined_call_operand.vmem [shape: f32[2,16,16,8], index: 3, kind: output, shape index: {}]
  %s4 = sld [smem:[#allocation0]]
  $region45: #{_unet_convblock.5} parent=0
    _
  %s6 = ssub.s32 1, %s4
  %s7 = scalar_select 0, %s6, %s4
  loop: start=0, step=1, limit=6
  $region2: #{_unet_convblock.5} parent=0 // loop_pre_header
    _
  $region3: #{_unet_convblock.5} parent=0 // loop_header
    %s9 = sphi 0, %s13
    %p10 = scmp.ge.s32.totalorder %s9, 6
    %s16 = sphi 0, %s28
    %s17 = sphi 0, %s24
    %s18 = sphi 0, %s16
    %s19 = sphi 0, %s17
    %s20 = sphi 0, %s18
    %s21 = sphi 0, %s19
    %s29 = sphi 0, %s29
    %s31 = sphi 0, %s29
    %s32 = sphi 0, %s31
    %s46 = sphi 0, %s32
    %s50 = sphi 0, %s50
    %s52 = sphi 0, %s50
    %s53 = sphi 0, %s52
    %s67 = sphi 0, %s53
    %s75 = sphi 0, %s77
    %s78 = sphi 0, %s75
    %s79 = sphi 0, %s78
    %s95 = sphi 0, %s79
    %s103 = sphi 0, %s105
    %s106 = sphi 0, %s103
    %s107 = sphi 0, %s106
    %s123 = sphi 0, %s107
  $region4: #{_unet_convblock.5} parent=0 // loop_header_branch
    %12 = sbr.rel (%p10) target = $region8
  $region5: #{_unet_convblock.5} parent=0 // loop_body
    %s14 = ssub.s32 %s9, 1
    %s15 = ssub.s32 %s9, 2
    %s22 = sadd.s32 1, %s17
    %p23 = scmp.ge.s32.totalorder %s22, 2
    %s24 = scalar_select %p23, 0, %s22
    %s25 = sadd.s32 1, %s16
    %s26 = scalar_select %p23, %s25, %s16
    %p27 = scmp.ge.s32.totalorder %s26, 2
    %s28 = scalar_select %p27, 0, %s26
    %s30 = sadd.s32 %s29, 1
    %p33 = scmp.eq.s32.totalorder %s9, 3
    %p34 = scmp.ne.s32.totalorder %s29, %s31
    %p35 = scmp.eq.s32.totalorder %s9, 0
    %p36 = por %p34, %p35
    %p37 = scmp.ne.s32.totalorder %s29, %s31
    %p38 = scmp.eq.s32.totalorder %s14, 3
    %p39 = por %p37, %p38
    %p40 = scmp.ne.s32.totalorder %s31, %s32
    %p41 = scmp.eq.s32.totalorder %s14, 0
    %p42 = por %p40, %p41
    %p43 = scmp.ne.s32.totalorder %s31, %s32
    %p44 = scmp.eq.s32.totalorder %s15, 3
    %p45 = por %p43, %p44
    %p47 = scmp.ne.s32.totalorder %s32, %s46
    %p48 = scmp.eq.s32.totalorder %s15, 0
    %p49 = por %p47, %p48
    %s51 = sadd.s32 %s50, 1
    %p54 = scmp.eq.s32.totalorder %s9, 3
    %p55 = scmp.ne.s32.totalorder %s50, %s52
    %p56 = scmp.eq.s32.totalorder %s9, 0
    %p57 = por %p55, %p56
    %p58 = scmp.ne.s32.totalorder %s50, %s52
    %p59 = scmp.eq.s32.totalorder %s14, 3
    %p60 = por %p58, %p59
    %p61 = scmp.ne.s32.totalorder %s52, %s53
    %p62 = scmp.eq.s32.totalorder %s14, 0
    %p63 = por %p61, %p62
    %p64 = scmp.ne.s32.totalorder %s52, %s53
    %p65 = scmp.eq.s32.totalorder %s15, 3
    %p66 = por %p64, %p65
    %p68 = scmp.ne.s32.totalorder %s53, %s67
    %p69 = scmp.eq.s32.totalorder %s15, 0
    %p70 = por %p68, %p69
    %s71 = ssub.s32 %s16, %s28
    %s72 = ssub.s32 %s17, %s24
    %s73 = sor.u32 %s71, %s72
    %p74 = scmp.eq.s32.totalorder %s73, 0
    %s76 = sadd.s32 %s75, 1
    %s77 = scalar_select %p74, %s75, %s76
    %p80 = pneg %p74
    %p81 = scmp.eq.s32.totalorder %s9, 3
    %p82 = por %p80, %p81
    %p83 = scmp.ne.s32.totalorder %s75, %s78
    %p84 = scmp.eq.s32.totalorder %s9, 0
    %p85 = por %p83, %p84
    %p86 = scmp.ne.s32.totalorder %s75, %s78
    %p87 = scmp.eq.s32.totalorder %s14, 3
    %p88 = por %p86, %p87
    %p89 = scmp.ne.s32.totalorder %s78, %s79
    %p90 = scmp.eq.s32.totalorder %s14, 0
    %p91 = por %p89, %p90
    %p92 = scmp.ne.s32.totalorder %s78, %s79
    %p93 = scmp.eq.s32.totalorder %s15, 3
    %p94 = por %p92, %p93
    %p96 = scmp.ne.s32.totalorder %s79, %s95
    %p97 = scmp.eq.s32.totalorder %s15, 0
    %p98 = por %p96, %p97
    %s99 = ssub.s32 %s16, %s28
    %s100 = ssub.s32 %s17, %s24
    %s101 = sor.u32 %s99, %s100
    %p102 = scmp.eq.s32.totalorder %s101, 0
    %s104 = sadd.s32 %s103, 1
    %s105 = scalar_select %p102, %s103, %s104
    %p108 = pneg %p102
    %p109 = scmp.eq.s32.totalorder %s9, 3
    %p110 = por %p108, %p109
    %p111 = scmp.ne.s32.totalorder %s103, %s106
    %p112 = scmp.eq.s32.totalorder %s9, 0
    %p113 = por %p111, %p112
    %p114 = scmp.ne.s32.totalorder %s103, %s106
    %p115 = scmp.eq.s32.totalorder %s14, 3
    %p116 = por %p114, %p115
    %p117 = scmp.ne.s32.totalorder %s106, %s107
    %p118 = scmp.eq.s32.totalorder %s14, 0
    %p119 = por %p117, %p118
    %p120 = scmp.ne.s32.totalorder %s106, %s107
    %p121 = scmp.eq.s32.totalorder %s15, 3
    %p122 = por %p120, %p121
    %p124 = scmp.ne.s32.totalorder %s107, %s123
    %p125 = scmp.eq.s32.totalorder %s15, 0
    %p126 = por %p124, %p125
    %p127 = scmp.le.s32.totalorder 1, %s9
    %p128 = scmp.lt.s32.totalorder %s9, 5
    %p129 = pnand %p127, %p128
    %p130 = pneg %p129
    // Predicated region
    $region9: #{_unet_convblock.5} parent=5 // pred_check
      _
    $region10: #{_unet_convblock.5} parent=5 // pred_check_branch
      %132 = sbr.rel (%p129) target = $region12
    $region11: #{_unet_convblock.5} parent=5 // pred_region
      %s133 = ssub.s32 %s9, 1
      // Predicated region
      $region13: #{_unet_convblock.5} parent=11 // pred_check
        %p134 = pneg %p42
      $region14: #{_unet_convblock.5} parent=11 // pred_check_branch
        %136 = sbr.rel (%p134) target = $region16
      $region15: #{_unet_convblock.5} parent=11 // pred_region
        _
      $region16: #{_unet_convblock.5} parent=11 // pred_fallthru
        _
      // Predicated region
      $region17: #{_unet_convblock.5} parent=11 // pred_check
        %p137 = pneg %p63
      $region18: #{_unet_convblock.5} parent=11 // pred_check_branch
        %139 = sbr.rel (%p137) target = $region20
      $region19: #{_unet_convblock.5} parent=11 // pred_region
        _
      $region20: #{_unet_convblock.5} parent=11 // pred_fallthru
        _
    $region12: #{_unet_convblock.5} parent=5 // pred_fallthru
      _
    %p140 = scmp.lt.s32.totalorder %s9, 4
    // Predicated region
    $region21: #{_unet_convblock.5} parent=5 // pred_check
      %p141 = pneg %p140
    $region22: #{_unet_convblock.5} parent=5 // pred_check_branch
      %143 = sbr.rel (%p141) target = $region24
    $region23: #{_unet_convblock.5} parent=5 // pred_region
      // Predicated region
      $region25: #{_unet_convblock.5} parent=23 // pred_check
        %p144 = pneg %p85
      $region26: #{_unet_convblock.5} parent=23 // pred_check_branch
        %146 = sbr.rel (%p144) target = $region28
      $region27: #{_unet_convblock.5} parent=23 // pred_region
        %s147 = smul.u32 8, %s17
        %p148 = scmp.lt.s32.totalorder %s16, 1
        %s149 = scalar_select %p148, %s16, 1
        %p150 = scmp.lt.s32.totalorder %s147, 15
        %s151 = scalar_select %p150, %s147, 15
        %s152 = smul.addr %s151, 2
        %s153 = smul.addr %s149, 32
        %s154 = sadd.s32 %s152, %s153
        %s155 = smul.addr %s154, 8
        %s156 = scalar_lea.vmem %s2, %s155
        %s157 = smul.u32 8, %s17
      $region28: #{_unet_convblock.5} parent=23 // pred_fallthru
        _
    $region24: #{_unet_convblock.5} parent=5 // pred_fallthru
      _
    %p158 = scmp.le.s32.totalorder 1, %s9
    %p159 = scmp.lt.s32.totalorder %s9, 5
    %p160 = pnand %p158, %p159
    %p161 = pneg %p160
    // Predicated region
    $region29: #{_unet_convblock.5} parent=5 // pred_check
      _
    $region30: #{_unet_convblock.5} parent=5 // pred_check_branch
      %163 = sbr.rel (%p160) target = $region32
    $region31: #{_unet_convblock.5} parent=5 // pred_region
      %s164 = ssub.s32 %s9, 1
      %p165 = pneg %p42
      %p166 = pneg %p39
      %p167 = pneg %p63
      %p168 = pneg %p60
      %s169 = smul.u32 8, %s19
      %p170 = scmp.lt.s32.totalorder %s18, 1
      %s171 = scalar_select %p170, %s18, 1
      %p172 = scmp.lt.s32.totalorder %s169, 15
      %s173 = scalar_select %p172, %s169, 15
      %s174 = smul.addr %s173, 2
      %s175 = smul.addr %s171, 32
      %s176 = sadd.s32 %s174, %s175
      %s177 = smul.addr %s176, 8
      %s178 = scalar_lea.vmem %s2, %s177
      %p179 = pneg %p91
      %p180 = pneg %p88
      %p181 = pneg %p119
      %p182 = pneg %p116
      %s183 = smul.u32 8, %s19
      %p184 = scmp.lt.s32.totalorder %s18, 1
      %s185 = scalar_select %p184, %s18, 1
      %p186 = scmp.lt.s32.totalorder %s183, 15
      %s187 = scalar_select %p186, %s183, 15
      %s188 = smul.addr %s187, 2
      %s189 = smul.addr %s185, 32
      %s190 = sadd.s32 %s188, %s189
      %s191 = smul.addr %s190, 8
      %s192 = scalar_lea.vmem %s3, %s191
      %s193 = smul.u32 8, %s19
      %p194 = scmp.lt.s32.totalorder %s18, 1
      %s195 = scalar_select %p194, %s18, 1
      %p196 = scmp.lt.s32.totalorder %s193, 15
      %s197 = scalar_select %p196, %s193, 15
      %s198 = smul.addr %s197, 2
      %s199 = smul.addr %s195, 32
      %s200 = sadd.s32 %s198, %s199
      %s201 = smul.addr %s200, 8
      %s202 = scalar_lea.vmem %s2, %s201
      %s203 = smul.u32 8, %s19
      %s204 = smul.u32 8, %s19
      %p205 = scmp.lt.s32.totalorder %s18, 1
      %s206 = scalar_select %p205, %s18, 1
      %p207 = scmp.lt.s32.totalorder %s204, 15
      %s208 = scalar_select %p207, %s204, 15
      %s209 = smul.addr %s208, 2
      %s210 = smul.addr %s206, 32
      %s211 = sadd.s32 %s209, %s210
      %s212 = smul.addr %s211, 8
      %s213 = scalar_lea.vmem %s3, %s212
      %s214 = smul.u32 8, %s19
      %v215 = vld [vmem:[%s202] sm:$0xff]
      %v216 = vld [vmem:[%s202 + $0x8] sm:$0xff]
      %v217 = vld [vmem:[%s202 + $0x10] sm:$0xff]
      %v218 = vld [vmem:[%s202 + $0x18] sm:$0xff]
      %v219 = vld [vmem:[%s202 + $0x20] sm:$0xff]
      %v220 = vld [vmem:[%s202 + $0x28] sm:$0xff]
      %v221 = vld [vmem:[%s202 + $0x30] sm:$0xff]
      %v222 = vld [vmem:[%s202 + $0x38] sm:$0xff]
      %v223 = vld [vmem:[%s202 + $0x40] sm:$0xff]
      %v224 = vld [vmem:[%s202 + $0x48] sm:$0xff]
      %v225 = vld [vmem:[%s202 + $0x50] sm:$0xff]
      %v226 = vld [vmem:[%s202 + $0x58] sm:$0xff]
      %v227 = vld [vmem:[%s202 + $0x60] sm:$0xff]
      %v228 = vld [vmem:[%s202 + $0x68] sm:$0xff]
      %v229 = vld [vmem:[%s202 + $0x70] sm:$0xff]
      %v230 = vld [vmem:[%s202 + $0x78] sm:$0xff]
      %v231 = vld [vmem:[%s0] sm:$0x1]
      %v233 = vperm.slane %v231, 0
      %v235 = vmul.f32 %v215, %v233
      %v236 = vmul.f32 %v216, %v233
      %v237 = vmul.f32 %v217, %v233
      %v238 = vmul.f32 %v218, %v233
      %v239 = vmul.f32 %v219, %v233
      %v240 = vmul.f32 %v220, %v233
      %v241 = vmul.f32 %v221, %v233
      %v242 = vmul.f32 %v222, %v233
      %v243 = vmul.f32 %v223, %v233
      %v244 = vmul.f32 %v224, %v233
      %v245 = vmul.f32 %v225, %v233
      %v246 = vmul.f32 %v226, %v233
      %v247 = vmul.f32 %v227, %v233
      %v248 = vmul.f32 %v228, %v233
      %v249 = vmul.f32 %v229, %v233
      %v250 = vmul.f32 %v230, %v233
      %v251 = vld [vmem:[%s1] sm:$0x1]
      %v253 = vperm.slane %v251, 0
      %v255 = vadd.f32 %v235, %v253
      %v256 = vadd.f32 %v236, %v253
      %v257 = vadd.f32 %v237, %v253
      %v258 = vadd.f32 %v238, %v253
      %v259 = vadd.f32 %v239, %v253
      %v260 = vadd.f32 %v240, %v253
      %v261 = vadd.f32 %v241, %v253
      %v262 = vadd.f32 %v242, %v253
      %v263 = vadd.f32 %v243, %v253
      %v264 = vadd.f32 %v244, %v253
      %v265 = vadd.f32 %v245, %v253
      %v266 = vadd.f32 %v246, %v253
      %v267 = vadd.f32 %v247, %v253
      %v268 = vadd.f32 %v248, %v253
      %v269 = vadd.f32 %v249, %v253
      %v270 = vadd.f32 %v250, %v253
      %vm271 = vcmask 64512
      %272 = vst.msk [vmem:[%s213] sm:$0xff] %vm271, %v255
      %273 = vst.msk [vmem:[%s213 + $0x8] sm:$0xff] %vm271, %v256
      %274 = vst.msk [vmem:[%s213 + $0x10] sm:$0xff] %vm271, %v257
      %275 = vst.msk [vmem:[%s213 + $0x18] sm:$0xff] %vm271, %v258
      %276 = vst.msk [vmem:[%s213 + $0x20] sm:$0xff] %vm271, %v259
      %277 = vst.msk [vmem:[%s213 + $0x28] sm:$0xff] %vm271, %v260
      %278 = vst.msk [vmem:[%s213 + $0x30] sm:$0xff] %vm271, %v261
      %279 = vst.msk [vmem:[%s213 + $0x38] sm:$0xff] %vm271, %v262
      %280 = vst.msk [vmem:[%s213 + $0x40] sm:$0xff] %vm271, %v263
      %281 = vst.msk [vmem:[%s213 + $0x48] sm:$0xff] %vm271, %v264
      %282 = vst.msk [vmem:[%s213 + $0x50] sm:$0xff] %vm271, %v265
      %283 = vst.msk [vmem:[%s213 + $0x58] sm:$0xff] %vm271, %v266
      %284 = vst.msk [vmem:[%s213 + $0x60] sm:$0xff] %vm271, %v267
      %285 = vst.msk [vmem:[%s213 + $0x68] sm:$0xff] %vm271, %v268
      %286 = vst.msk [vmem:[%s213 + $0x70] sm:$0xff] %vm271, %v269
      %287 = vst.msk [vmem:[%s213 + $0x78] sm:$0xff] %vm271, %v270
      %s288 = smul.u32 8, %s19
      %p289 = scmp.lt.s32.totalorder %s18, 1
      %s290 = scalar_select %p289, %s18, 1
      %p291 = scmp.lt.s32.totalorder %s288, 15
      %s292 = scalar_select %p291, %s288, 15
      %s293 = smul.addr %s292, 2
      %s294 = smul.addr %s290, 32
      %s295 = sadd.s32 %s293, %s294
      %s296 = smul.addr %s295, 8
      %s297 = scalar_lea.vmem %s3, %s296
      // Predicated region
      $region33: #{_unet_convblock.5} parent=31 // pred_check
        %p298 = pneg %p116
      $region34: #{_unet_convblock.5} parent=31 // pred_check_branch
        %300 = sbr.rel (%p298) target = $region36
      $region35: #{_unet_convblock.5} parent=31 // pred_region
        %s301 = smul.u32 8, %s19
      $region36: #{_unet_convblock.5} parent=31 // pred_fallthru
        _
    $region32: #{_unet_convblock.5} parent=5 // pred_fallthru
      _
    %p302 = scmp.le.s32.totalorder 2, %s9
    // Predicated region
    $region37: #{_unet_convblock.5} parent=5 // pred_check
      %p303 = pneg %p302
    $region38: #{_unet_convblock.5} parent=5 // pred_check_branch
      %305 = sbr.rel (%p303) target = $region40
    $region39: #{_unet_convblock.5} parent=5 // pred_region
      %s306 = ssub.s32 %s9, 2
      // Predicated region
      $region41: #{_unet_convblock.5} parent=39 // pred_check
        %p307 = pneg %p122
      $region42: #{_unet_convblock.5} parent=39 // pred_check_branch
        %309 = sbr.rel (%p307) target = $region44
      $region43: #{_unet_convblock.5} parent=39 // pred_region
        %s310 = smul.u32 8, %s21
        %p311 = scmp.lt.s32.totalorder %s20, 1
        %s312 = scalar_select %p311, %s20, 1
        %p313 = scmp.lt.s32.totalorder %s310, 15
        %s314 = scalar_select %p313, %s310, 15
        %s315 = smul.addr %s314, 2
        %s316 = smul.addr %s312, 32
        %s317 = sadd.s32 %s315, %s316
        %s318 = smul.addr %s317, 8
        %s319 = scalar_lea.vmem %s3, %s318
      $region44: #{_unet_convblock.5} parent=39 // pred_fallthru
        _
    $region40: #{_unet_convblock.5} parent=5 // pred_fallthru
      _
  $region6: #{_unet_convblock.5} parent=0 // loop_footer
    %s13 = sadd.s32 1, %s9
  $region7: #{_unet_convblock.5} parent=0 // loop_footer_branch
    %8 = sbr.rel target = $region3
  $region8: #{_unet_convblock.5} parent=0 // loop_exit
    _

// kernel: _unet_convblock.3
$region0: #{_unet_convblock.3}
  #allocation0 [shape = 'u32[]', space=smem, size = 0x4, offset = 0x4, fixed_abs, tag = 'smem constant byte address 0x4 - core index']
  #allocation1 [shape = 'u32[72,128]{1,0:T(1,128)}', space=vmem, size = 0x9000, scoped, tag = 'internal scratch']
  #allocation2 [shape = 'f32[128,8]{1,0:T(8,128)}', space=vmem, size = 0x10000, scoped, tag = 'scratch operand']
  %s0 = inlined_call_operand.vmem [shape: f32[1,4], index: 0, kind: input, shape index: {}]
  %s1 = inlined_call_operand.vmem [shape: f32[1,4], index: 1, kind: input, shape index: {}]
  %s2 = inlined_call_operand.vmem [shape: f32[3,12,8], index: 2, kind: input, shape index: {}]
  %s3 = inlined_call_operand.vmem [shape: f32[1,8], index: 3, kind: input, shape index: {}]
  %s4 = inlined_call_operand.vmem [shape: f32[2,16,16,4], index: 4, kind: input, shape index: {}, may-alias: {4,5,6}]
  %s5 = inlined_call_operand.vmem [shape: f32[2,16,16,4], index: 5, kind: input, shape index: {}, may-alias: {4,5,6}]
  %s6 = inlined_call_operand.vmem [shape: f32[2,16,16,4], index: 6, kind: input, shape index: {}, may-alias: {4,5,6}]
  %s7 = inlined_call_operand.vmem [shape: f32[2,16,16,8], index: 7, kind: output, shape index: {0}]
  %s8 = inlined_call_operand.vmem [shape: f32[2,2,2,8], index: 8, kind: output, shape index: {1}]
  %9 = xla_tuple %s7, %s8
  %s10 = sld [smem:[#allocation0]]
  $region69: #{_unet_convblock.3} parent=0
    _
  %s12 = ssub.s32 1, %s10
  %s13 = scalar_select 0, %s12, %s10
  loop: start=0, step=1, limit=6
  $region2: #{_unet_convblock.3} parent=0 // loop_pre_header
    _
  $region3: #{_unet_convblock.3} parent=0 // loop_header
    %s15 = sphi 0, %s19
    %p16 = scmp.ge.s32.totalorder %s15, 6
    %s22 = sphi 0, %s34
    %s23 = sphi 0, %s30
    %s24 = sphi 0, %s22
    %s25 = sphi 0, %s23
    %s26 = sphi 0, %s24
    %s27 = sphi 0, %s25
    %s35 = sphi 0, %s35
    %s37 = sphi 0, %s35
    %s38 = sphi 0, %s37
    %s52 = sphi 0, %s38
    %s56 = sphi 0, %s56
    %s58 = sphi 0, %s56
    %s59 = sphi 0, %s58
    %s73 = sphi 0, %s59
    %s77 = sphi 0, %s77
    %s79 = sphi 0, %s77
    %s80 = sphi 0, %s79
    %s94 = sphi 0, %s80
    %s98 = sphi 0, %s98
    %s100 = sphi 0, %s98
    %s101 = sphi 0, %s100
    %s115 = sphi 0, %s101
    %s123 = sphi 0, %s125
    %s126 = sphi 0, %s123
    %s127 = sphi 0, %s126
    %s143 = sphi 0, %s127
    %s159 = sphi 0, %s161
    %s162 = sphi 0, %s159
    %s163 = sphi 0, %s162
    %s179 = sphi 0, %s163
    %s195 = sphi 0, %s197
    %s198 = sphi 0, %s195
    %s199 = sphi 0, %s198
    %s215 = sphi 0, %s199
    %s223 = sphi 0, %s225
    %s226 = sphi 0, %s223
    %s227 = sphi 0, %s226
    %s243 = sphi 0, %s227
    %s251 = sphi 0, %s253
    %s254 = sphi 0, %s251
    %s255 = sphi 0, %s254
    %s271 = sphi 0, %s255
  $region4: #{_unet_convblock.3} parent=0 // loop_header_branch
    %18 = sbr.rel (%p16) target = $region8
  $region5: #{_unet_convblock.3} parent=0 // loop_body
    %s20 = ssub.s32 %s15, 1
    %s21 = ssub.s32 %s15, 2
    %s28 = sadd.s32 1, %s23
    %p29 = scmp.ge.s32.totalorder %s28, 2
    %s30 = scalar_select %p29, 0, %s28
    %s31 = sadd.s32 1, %s22
    %s32 = scalar_select %p29, %s31, %s22
    %p33 = scmp.ge.s32.totalorder %s32, 2
    %s34 = scalar_select %p33, 0, %s32
    %s36 = sadd.s32 %s35, 1
    %p39 = scmp.eq.s32.totalorder %s15, 3
    %p40 = scmp.ne.s32.totalorder %s35, %s37
    %p41 = scmp.eq.s32.totalorder %s15, 0
    %p42 = por %p40, %p41
    %p43 = scmp.ne.s32.totalorder %s35, %s37
    %p44 = scmp.eq.s32.totalorder %s20, 3
    %p45 = por %p43, %p44
    %p46 = scmp.ne.s32.totalorder %s37, %s38
    %p47 = scmp.eq.s32.totalorder %s20, 0
    %p48 = por %p46, %p47
    %p49 = scmp.ne.s32.totalorder %s37, %s38
    %p50 = scmp.eq.s32.totalorder %s21, 3
    %p51 = por %p49, %p50
    %p53 = scmp.ne.s32.totalorder %s38, %s52
    %p54 = scmp.eq.s32.totalorder %s21, 0
    %p55 = por %p53, %p54
    %s57 = sadd.s32 %s56, 1
    %p60 = scmp.eq.s32.totalorder %s15, 3
    %p61 = scmp.ne.s32.totalorder %s56, %s58
    %p62 = scmp.eq.s32.totalorder %s15, 0
    %p63 = por %p61, %p62
    %p64 = scmp.ne.s32.totalorder %s56, %s58
    %p65 = scmp.eq.s32.totalorder %s20, 3
    %p66 = por %p64, %p65
    %p67 = scmp.ne.s32.totalorder %s58, %s59
    %p68 = scmp.eq.s32.totalorder %s20, 0
    %p69 = por %p67, %p68
    %p70 = scmp.ne.s32.totalorder %s58, %s59
    %p71 = scmp.eq.s32.totalorder %s21, 3
    %p72 = por %p70, %p71
    %p74 = scmp.ne.s32.totalorder %s59, %s73
    %p75 = scmp.eq.s32.totalorder %s21, 0
    %p76 = por %p74, %p75
    %s78 = sadd.s32 %s77, 1
    %p81 = scmp.eq.s32.totalorder %s15, 3
    %p82 = scmp.ne.s32.totalorder %s77, %s79
    %p83 = scmp.eq.s32.totalorder %s15, 0
    %p84 = por %p82, %p83
    %p85 = scmp.ne.s32.totalorder %s77, %s79
    %p86 = scmp.eq.s32.totalorder %s20, 3
    %p87 = por %p85, %p86
    %p88 = scmp.ne.s32.totalorder %s79, %s80
    %p89 = scmp.eq.s32.totalorder %s20, 0
    %p90 = por %p88, %p89
    %p91 = scmp.ne.s32.totalorder %s79, %s80
    %p92 = scmp.eq.s32.totalorder %s21, 3
    %p93 = por %p91, %p92
    %p95 = scmp.ne.s32.totalorder %s80, %s94
    %p96 = scmp.eq.s32.totalorder %s21, 0
    %p97 = por %p95, %p96
    %s99 = sadd.s32 %s98, 1
    %p102 = scmp.eq.s32.totalorder %s15, 3
    %p103 = scmp.ne.s32.totalorder %s98, %s100
    %p104 = scmp.eq.s32.totalorder %s15, 0
    %p105 = por %p103, %p104
    %p106 = scmp.ne.s32.totalorder %s98, %s100
    %p107 = scmp.eq.s32.totalorder %s20, 3
    %p108 = por %p106, %p107
    %p109 = scmp.ne.s32.totalorder %s100, %s101
    %p110 = scmp.eq.s32.totalorder %s20, 0
    %p111 = por %p109, %p110
    %p112 = scmp.ne.s32.totalorder %s100, %s101
    %p113 = scmp.eq.s32.totalorder %s21, 3
    %p114 = por %p112, %p113
    %p116 = scmp.ne.s32.totalorder %s101, %s115
    %p117 = scmp.eq.s32.totalorder %s21, 0
    %p118 = por %p116, %p117
    %s119 = ssub.s32 %s22, %s34
    %s120 = ssub.s32 %s23, %s30
    %s121 = sor.u32 %s119, %s120
    %p122 = scmp.eq.s32.totalorder %s121, 0
    %s124 = sadd.s32 %s123, 1
    %s125 = scalar_select %p122, %s123, %s124
    %p128 = pneg %p122
    %p129 = scmp.eq.s32.totalorder %s15, 3
    %p130 = por %p128, %p129
    %p131 = scmp.ne.s32.totalorder %s123, %s126
    %p132 = scmp.eq.s32.totalorder %s15, 0
    %p133 = por %p131, %p132
    %p134 = scmp.ne.s32.totalorder %s123, %s126
    %p135 = scmp.eq.s32.totalorder %s20, 3
    %p136 = por %p134, %p135
    %p137 = scmp.ne.s32.totalorder %s126, %s127
    %p138 = scmp.eq.s32.totalorder %s20, 0
    %p139 = por %p137, %p138
    %p140 = scmp.ne.s32.totalorder %s126, %s127
    %p141 = scmp.eq.s32.totalorder %s21, 3
    %p142 = por %p140, %p141
    %p144 = scmp.ne.s32.totalorder %s127, %s143
    %p145 = scmp.eq.s32.totalorder %s21, 0
    %p146 = por %p144, %p145
    %s147 = smul.u32 %s23, 8
    %s148 = ssub.s32 %s147, 1
    %p149 = scmp.gt.s32.totalorder %s148, 0
    %s150 = scalar_select %p149, %s148, 0
    %s151 = smul.u32 %s30, 8
    %s152 = ssub.s32 %s151, 1
    %p153 = scmp.gt.s32.totalorder %s152, 0
    %s154 = scalar_select %p153, %s152, 0
    %s155 = ssub.s32 %s22, %s34
    %s156 = ssub.s32 %s150, %s154
    %s157 = sor.u32 %s155, %s156
    %p158 = scmp.eq.s32.totalorder %s157, 0
    %s160 = sadd.s32 %s159, 1
    %s161 = scalar_select %p158, %s159, %s160
    %p164 = pneg %p158
    %p165 = scmp.eq.s32.totalorder %s15, 3
    %p166 = por %p164, %p165
    %p167 = scmp.ne.s32.totalorder %s159, %s162
    %p168 = scmp.eq.s32.totalorder %s15, 0
    %p169 = por %p167, %p168
    %p170 = scmp.ne.s32.totalorder %s159, %s162
    %p171 = scmp.eq.s32.totalorder %s20, 3
    %p172 = por %p170, %p171
    %p173 = scmp.ne.s32.totalorder %s162, %s163
    %p174 = scmp.eq.s32.totalorder %s20, 0
    %p175 = por %p173, %p174
    %p176 = scmp.ne.s32.totalorder %s162, %s163
    %p177 = scmp.eq.s32.totalorder %s21, 3
    %p178 = por %p176, %p177
    %p180 = scmp.ne.s32.totalorder %s163, %s179
    %p181 = scmp.eq.s32.totalorder %s21, 0
    %p182 = por %p180, %p181
    %s183 = sadd.s32 %s23, 1
    %s184 = smul.u32 %s183, 8
    %p185 = scmp.lt.s32.totalorder %s184, 15
    %s186 = scalar_select %p185, %s184, 15
    %s187 = sadd.s32 %s30, 1
    %s188 = smul.u32 %s187, 8
    %p189 = scmp.lt.s32.totalorder %s188, 15
    %s190 = scalar_select %p189, %s188, 15
    %s191 = ssub.s32 %s22, %s34
    %s192 = ssub.s32 %s186, %s190
    %s193 = sor.u32 %s191, %s192
    %p194 = scmp.eq.s32.totalorder %s193, 0
    %s196 = sadd.s32 %s195, 1
    %s197 = scalar_select %p194, %s195, %s196
    %p200 = pneg %p194
    %p201 = scmp.eq.s32.totalorder %s15, 3
    %p202 = por %p200, %p201
    %p203 = scmp.ne.s32.totalorder %s195, %s198
    %p204 = scmp.eq.s32.totalorder %s15, 0
    %p205 = por %p203, %p204
    %p206 = scmp.ne.s32.totalorder %s195, %s198
    %p207 = scmp.eq.s32.totalorder %s20, 3
    %p208 = por %p206, %p207
    %p209 = scmp.ne.s32.totalorder %s198, %s199
    %p210 = scmp.eq.s32.totalorder %s20, 0
    %p211 = por %p209, %p210
    %p212 = scmp.ne.s32.totalorder %s198, %s199
    %p213 = scmp.eq.s32.totalorder %s21, 3
    %p214 = por %p212, %p213
    %p216 = scmp.ne.s32.totalorder %s199, %s215
    %p217 = scmp.eq.s32.totalorder %s21, 0
    %p218 = por %p216, %p217
    %s219 = ssub.s32 %s22, %s34
    %s220 = ssub.s32 %s23, %s30
    %s221 = sor.u32 %s219, %s220
    %p222 = scmp.eq.s32.totalorder %s221, 0
    %s224 = sadd.s32 %s223, 1
    %s225 = scalar_select %p222, %s223, %s224
    %p228 = pneg %p222
    %p229 = scmp.eq.s32.totalorder %s15, 3
    %p230 = por %p228, %p229
    %p231 = scmp.ne.s32.totalorder %s223, %s226
    %p232 = scmp.eq.s32.totalorder %s15, 0
    %p233 = por %p231, %p232
    %p234 = scmp.ne.s32.totalorder %s223, %s226
    %p235 = scmp.eq.s32.totalorder %s20, 3
    %p236 = por %p234, %p235
    %p237 = scmp.ne.s32.totalorder %s226, %s227
    %p238 = scmp.eq.s32.totalorder %s20, 0
    %p239 = por %p237, %p238
    %p240 = scmp.ne.s32.totalorder %s226, %s227
    %p241 = scmp.eq.s32.totalorder %s21, 3
    %p242 = por %p240, %p241
    %p244 = scmp.ne.s32.totalorder %s227, %s243
    %p245 = scmp.eq.s32.totalorder %s21, 0
    %p246 = por %p244, %p245
    %s247 = ssub.s32 %s22, %s34
    %s248 = ssub.s32 %s23, %s30
    %s249 = sor.u32 %s247, %s248
    %p250 = scmp.eq.s32.totalorder %s249, 0
    %s252 = sadd.s32 %s251, 1
    %s253 = scalar_select %p250, %s251, %s252
    %p256 = pneg %p250
    %p257 = scmp.eq.s32.totalorder %s15, 3
    %p258 = por %p256, %p257
    %p259 = scmp.ne.s32.totalorder %s251, %s254
    %p260 = scmp.eq.s32.totalorder %s15, 0
    %p261 = por %p259, %p260
    %p262 = scmp.ne.s32.totalorder %s251, %s254
    %p263 = scmp.eq.s32.totalorder %s20, 3
    %p264 = por %p262, %p263
    %p265 = scmp.ne.s32.totalorder %s254, %s255
    %p266 = scmp.eq.s32.totalorder %s20, 0
    %p267 = por %p265, %p266
    %p268 = scmp.ne.s32.totalorder %s254, %s255
    %p269 = scmp.eq.s32.totalorder %s21, 3
    %p270 = por %p268, %p269
    %p272 = scmp.ne.s32.totalorder %s255, %s271
    %p273 = scmp.eq.s32.totalorder %s21, 0
    %p274 = por %p272, %p273
    %p275 = scmp.le.s32.totalorder 1, %s15
    %p276 = scmp.lt.s32.totalorder %s15, 5
    %p277 = pnand %p275, %p276
    %p278 = pneg %p277
    // Predicated region
    $region9: #{_unet_convblock.3} parent=5 // pred_check
      _
    $region10: #{_unet_convblock.3} parent=5 // pred_check_branch
      %280 = sbr.rel (%p277) target = $region12
    $region11: #{_unet_convblock.3} parent=5 // pred_region
      %s281 = ssub.s32 %s15, 1
      // Predicated region
      $region13: #{_unet_convblock.3} parent=11 // pred_check
        %p282 = pneg %p48
      $region14: #{_unet_convblock.3} parent=11 // pred_check_branch
        %284 = sbr.rel (%p282) target = $region16
      $region15: #{_unet_convblock.3} parent=11 // pred_region
        _
      $region16: #{_unet_convblock.3} parent=11 // pred_fallthru
        _
      // Predicated region
      $region17: #{_unet_convblock.3} parent=11 // pred_check
        %p285 = pneg %p69
      $region18: #{_unet_convblock.3} parent=11 // pred_check_branch
        %287 = sbr.rel (%p285) target = $region20
      $region19: #{_unet_convblock.3} parent=11 // pred_region
        _
      $region20: #{_unet_convblock.3} parent=11 // pred_fallthru
        _
      // Predicated region
      $region21: #{_unet_convblock.3} parent=11 // pred_check
        %p288 = pneg %p90
      $region22: #{_unet_convblock.3} parent=11 // pred_check_branch
        %290 = sbr.rel (%p288) target = $region24
      $region23: #{_unet_convblock.3} parent=11 // pred_region
        _
      $region24: #{_unet_convblock.3} parent=11 // pred_fallthru
        _
      // Predicated region
      $region25: #{_unet_convblock.3} parent=11 // pred_check
        %p291 = pneg %p111
      $region26: #{_unet_convblock.3} parent=11 // pred_check_branch
        %293 = sbr.rel (%p291) target = $region28
      $region27: #{_unet_convblock.3} parent=11 // pred_region
        _
      $region28: #{_unet_convblock.3} parent=11 // pred_fallthru
        _
    $region12: #{_unet_convblock.3} parent=5 // pred_fallthru
      _
    %p294 = scmp.lt.s32.totalorder %s15, 4
    // Predicated region
    $region29: #{_unet_convblock.3} parent=5 // pred_check
      %p295 = pneg %p294
    $region30: #{_unet_convblock.3} parent=5 // pred_check_branch
      %297 = sbr.rel (%p295) target = $region32
    $region31: #{_unet_convblock.3} parent=5 // pred_region
      // Predicated region
      $region33: #{_unet_convblock.3} parent=31 // pred_check
        %p298 = pneg %p133
      $region34: #{_unet_convblock.3} parent=31 // pred_check_branch
        %300 = sbr.rel (%p298) target = $region36
      $region35: #{_unet_convblock.3} parent=31 // pred_region
        %s301 = smul.u32 8, %s23
        %p302 = scmp.lt.s32.totalorder %s22, 1
        %s303 = scalar_select %p302, %s22, 1
        %p304 = scmp.lt.s32.totalorder %s301, 15
        %s305 = scalar_select %p304, %s301, 15
        %s306 = smul.addr %s305, 2
        %s307 = smul.addr %s303, 32
        %s308 = sadd.s32 %s306, %s307
        %s309 = smul.addr %s308, 8
        %s310 = scalar_lea.vmem %s4, %s309
        %s311 = smul.u32 8, %s23
      $region36: #{_unet_convblock.3} parent=31 // pred_fallthru
        _
      // Predicated region
      $region37: #{_unet_convblock.3} parent=31 // pred_check
        %p312 = pneg %p169
      $region38: #{_unet_convblock.3} parent=31 // pred_check_branch
        %314 = sbr.rel (%p312) target = $region40
      $region39: #{_unet_convblock.3} parent=31 // pred_region
        %s315 = smul.u32 %s23, 8
        %s316 = ssub.s32 %s315, 1
        %p317 = scmp.gt.s32.totalorder %s316, 0
        %s318 = scalar_select %p317, %s316, 0
        %p319 = scmp.lt.s32.totalorder %s22, 1
        %s320 = scalar_select %p319, %s22, 1
        %p321 = scmp.lt.s32.totalorder %s318, 15
        %s322 = scalar_select %p321, %s318, 15
        %s323 = smul.addr %s322, 2
        %s324 = smul.addr %s320, 32
        %s325 = sadd.s32 %s323, %s324
        %s326 = smul.addr %s325, 8
        %s327 = scalar_lea.vmem %s5, %s326
        %s328 = smul.u32 %s23, 8
        %s329 = ssub.s32 %s328, 1
        %p330 = scmp.gt.s32.totalorder %s329, 0
        %s331 = scalar_select %p330, %s329, 0
      $region40: #{_unet_convblock.3} parent=31 // pred_fallthru
        _
      // Predicated region
      $region41: #{_unet_convblock.3} parent=31 // pred_check
        %p332 = pneg %p205
      $region42: #{_unet_convblock.3} parent=31 // pred_check_branch
        %334 = sbr.rel (%p332) target = $region44
      $region43: #{_unet_convblock.3} parent=31 // pred_region
        %s335 = sadd.s32 %s23, 1
        %s336 = smul.u32 %s335, 8
        %p337 = scmp.lt.s32.totalorder %s336, 15
        %s338 = scalar_select %p337, %s336, 15
        %p339 = scmp.lt.s32.totalorder %s22, 1
        %s340 = scalar_select %p339, %s22, 1
        %p341 = scmp.lt.s32.totalorder %s338, 15
        %s342 = scalar_select %p341, %s338, 15
        %s343 = smul.addr %s342, 2
        %s344 = smul.addr %s340, 32
        %s345 = sadd.s32 %s343, %s344
        %s346 = smul.addr %s345, 8
        %s347 = scalar_lea.vmem %s6, %s346
        %s348 = sadd.s32 %s23, 1
        %s349 = smul.u32 %s348, 8
        %p350 = scmp.lt.s32.totalorder %s349, 15
        %s351 = scalar_select %p350, %s349, 15
      $region44: #{_unet_convblock.3} parent=31 // pred_fallthru
        _
    $region32: #{_unet_convblock.3} parent=5 // pred_fallthru
      _
    %p352 = scmp.le.s32.totalorder 1, %s15
    %p353 = scmp.lt.s32.totalorder %s15, 5
    %p354 = pnand %p352, %p353
    %p355 = pneg %p354
    // Predicated region
    $region45: #{_unet_convblock.3} parent=5 // pred_check
      _
    $region46: #{_unet_convblock.3} parent=5 // pred_check_branch
      %357 = sbr.rel (%p354) target = $region48
    $region47: #{_unet_convblock.3} parent=5 // pred_region
      %s358 = ssub.s32 %s15, 1
      %p359 = pneg %p48
      %p360 = pneg %p45
      %p361 = pneg %p69
      %p362 = pneg %p66
      %p363 = pneg %p90
      %p364 = pneg %p87
      %p365 = pneg %p111
      %p366 = pneg %p108
      %s367 = smul.u32 8, %s25
      %p368 = scmp.lt.s32.totalorder %s24, 1
      %s369 = scalar_select %p368, %s24, 1
      %p370 = scmp.lt.s32.totalorder %s367, 15
      %s371 = scalar_select %p370, %s367, 15
      %s372 = smul.addr %s371, 2
      %s373 = smul.addr %s369, 32
      %s374 = sadd.s32 %s372, %s373
      %s375 = smul.addr %s374, 8
      %s376 = scalar_lea.vmem %s4, %s375
      %p377 = pneg %p139
      %p378 = pneg %p136
      %s379 = smul.u32 %s25, 8
      %s380 = ssub.s32 %s379, 1
      %p381 = scmp.gt.s32.totalorder %s380, 0
      %s382 = scalar_select %p381, %s380, 0
      %p383 = scmp.lt.s32.totalorder %s24, 1
      %s384 = scalar_select %p383, %s24, 1
      %p385 = scmp.lt.s32.totalorder %s382, 15
      %s386 = scalar_select %p385, %s382, 15
      %s387 = smul.addr %s386, 2
      %s388 = smul.addr %s384, 32
      %s389 = sadd.s32 %s387, %s388
      %s390 = smul.addr %s389, 8
      %s391 = scalar_lea.vmem %s5, %s390
      %p392 = pneg %p175
      %p393 = pneg %p172
      %s394 = sadd.s32 %s25, 1
      %s395 = smul.u32 %s394, 8
      %p396 = scmp.lt.s32.totalorder %s395, 15
      %s397 = scalar_select %p396, %s395, 15
      %p398 = scmp.lt.s32.totalorder %s24, 1
      %s399 = scalar_select %p398, %s24, 1
      %p400 = scmp.lt.s32.totalorder %s397, 15
      %s401 = scalar_select %p400, %s397, 15
      %s402 = smul.addr %s401, 2
      %s403 = smul.addr %s399, 32
      %s404 = sadd.s32 %s402, %s403
      %s405 = smul.addr %s404, 8
      %s406 = scalar_lea.vmem %s6, %s405
      %p407 = pneg %p211
      %p408 = pneg %p208
      %p409 = pneg %p239
      %p410 = pneg %p236
      %s411 = smul.u32 8, %s25
      %p412 = scmp.lt.s32.totalorder %s24, 1
      %s413 = scalar_select %p412, %s24, 1
      %p414 = scmp.lt.s32.totalorder %s411, 15
      %s415 = scalar_select %p414, %s411, 15
      %s416 = smul.addr %s415, 2
      %s417 = smul.addr %s413, 32
      %s418 = sadd.s32 %s416, %s417
      %s419 = smul.addr %s418, 8
      %s420 = scalar_lea.vmem %s7, %s419
      %p421 = pneg %p267
      %p422 = pneg %p264
      %p423 = scmp.lt.s32.totalorder %s24, 1
      %s424 = scalar_select %p423, %s24, 1
      %p425 = scmp.lt.s32.totalorder %s25, 1
      %s426 = scalar_select %p425, %s25, 1
      %s427 = smul.addr %s424, 2
      %s428 = sadd.s32 %s426, %s427
      %s429 = smul.addr %s428, 2
      %s430 = scalar_lea.vmem %s8, %s429
      %s431 = smul.u32 8, %s25
      %p432 = scmp.lt.s32.totalorder %s24, 1
      %s433 = scalar_select %p432, %s24, 1
      %p434 = scmp.lt.s32.totalorder %s431, 15
      %s435 = scalar_select %p434, %s431, 15
      %s436 = smul.addr %s435, 2
      %s437 = smul.addr %s433, 32
      %s438 = sadd.s32 %s436, %s437
      %s439 = smul.addr %s438, 8
      %s440 = scalar_lea.vmem %s4, %s439
      %s441 = smul.u32 8, %s25
      %s442 = smul.u32 %s25, 8
      %s443 = ssub.s32 %s442, 1
      %p444 = scmp.gt.s32.totalorder %s443, 0
      %s445 = scalar_select %p444, %s443, 0
      %p446 = scmp.lt.s32.totalorder %s24, 1
      %s447 = scalar_select %p446, %s24, 1
      %p448 = scmp.lt.s32.totalorder %s445, 15
      %s449 = scalar_select %p448, %s445, 15
      %s450 = smul.addr %s449, 2
      %s451 = smul.addr %s447, 32
      %s452 = sadd.s32 %s450, %s451
      %s453 = smul.addr %s452, 8
      %s454 = scalar_lea.vmem %s5, %s453
      %s455 = smul.u32 %s25, 8
      %s456 = ssub.s32 %s455, 1
      %p457 = scmp.gt.s32.totalorder %s456, 0
      %s458 = scalar_select %p457, %s456, 0
      %s459 = sadd.s32 %s25, 1
      %s460 = smul.u32 %s459, 8
      %p461 = scmp.lt.s32.totalorder %s460, 15
      %s462 = scalar_select %p461, %s460, 15
      %p463 = scmp.lt.s32.totalorder %s24, 1
      %s464 = scalar_select %p463, %s24, 1
      %p465 = scmp.lt.s32.totalorder %s462, 15
      %s466 = scalar_select %p465, %s462, 15
      %s467 = smul.addr %s466, 2
      %s468 = smul.addr %s464, 32
      %s469 = sadd.s32 %s467, %s468
      %s470 = smul.addr %s469, 8
      %s471 = scalar_lea.vmem %s6, %s470
      %s472 = sadd.s32 %s25, 1
      %s473 = smul.u32 %s472, 8
      %p474 = scmp.lt.s32.totalorder %s473, 15
      %s475 = scalar_select %p474, %s473, 15
      %s476 = smul.u32 8, %s25
      %p477 = scmp.lt.s32.totalorder %s24, 1
      %s478 = scalar_select %p477, %s24, 1
      %p479 = scmp.lt.s32.totalorder %s476, 15
      %s480 = scalar_select %p479, %s476, 15
      %s481 = smul.addr %s480, 2
      %s482 = smul.addr %s478, 32
      %s483 = sadd.s32 %s481, %s482
      %s484 = smul.addr %s483, 8
      %s485 = scalar_lea.vmem %s7, %s484
      %s486 = smul.u32 8, %s25
      %p487 = scmp.lt.s32.totalorder %s24, 1
      %s488 = scalar_select %p487, %s24, 1
      %p489 = scmp.lt.s32.totalorder %s25, 1
      %s490 = scalar_select %p489, %s25, 1
      %s491 = smul.addr %s488, 2
      %s492 = sadd.s32 %s490, %s491
      %s493 = smul.addr %s492, 2
      %s494 = scalar_lea.vmem %s8, %s493
      %v495 = vld [vmem:[%s0] sm:$0x1]
      %v496 = vld [vmem:[%s1] sm:$0x1]
      %v497 = vld [vmem:[%s454] sm:$0xff]
      %v498 = vld [vmem:[%s454 + $0x8] sm:$0xff]
      %v500 = vperm.slane %v495, 0
      %v502 = vmul.f32 %v497, %v500
      %v503 = vmul.f32 %v498, %v500
      %v505 = vperm.slane %v496, 0
      %v507 = vadd.f32 %v502, %v505
      %v508 = vadd.f32 %v503, %v505
      %v509 = vld [vmem:[%s440] sm:$0xff]
      %v510 = vld [vmem:[%s440 + $0x8] sm:$0xff]
      %v511 = vld [vmem:[%s440 + $0x10] sm:$0xff]
      %v512 = vld [vmem:[%s440 + $0x18] sm:$0xff]
      %v513 = vld [vmem:[%s440 + $0x20] sm:$0xff]
      %v514 = vld [vmem:[%s440 + $0x28] sm:$0xff]
      %v515 = vld [vmem:[%s440 + $0x30] sm:$0xff]
      %v516 = vld [vmem:[%s440 + $0x38] sm:$0xff]
      %v517 = vld [vmem:[%s440 + $0x40] sm:$0xff]
      %v518 = vld [vmem:[%s440 + $0x48] sm:$0xff]
      %v519 = vld [vmem:[%s440 + $0x50] sm:$0xff]
      %v520 = vld [vmem:[%s440 + $0x58] sm:$0xff]
      %v521 = vld [vmem:[%s440 + $0x60] sm:$0xff]
      %v522 = vld [vmem:[%s440 + $0x68] sm:$0xff]
      %v523 = vld [vmem:[%s440 + $0x70] sm:$0xff]
      %v524 = vld [vmem:[%s440 + $0x78] sm:$0xff]
      %v525 = vmul.f32 %v509, %v500
      %v526 = vmul.f32 %v510, %v500
      %v527 = vmul.f32 %v511, %v500
      %v528 = vmul.f32 %v512, %v500
      %v529 = vmul.f32 %v513, %v500
      %v530 = vmul.f32 %v514, %v500
      %v531 = vmul.f32 %v515, %v500
      %v532 = vmul.f32 %v516, %v500
      %v533 = vmul.f32 %v517, %v500
      %v534 = vmul.f32 %v518, %v500
      %v535 = vmul.f32 %v519, %v500
      %v536 = vmul.f32 %v520, %v500
      %v537 = vmul.f32 %v521, %v500
      %v538 = vmul.f32 %v522, %v500
      %v539 = vmul.f32 %v523, %v500
      %v540 = vmul.f32 %v524, %v500
      %v541 = vadd.f32 %v525, %v505
      %v542 = vadd.f32 %v526, %v505
      %v543 = vadd.f32 %v527, %v505
      %v544 = vadd.f32 %v528, %v505
      %v545 = vadd.f32 %v529, %v505
      %v546 = vadd.f32 %v530, %v505
      %v547 = vadd.f32 %v531, %v505
      %v548 = vadd.f32 %v532, %v505
      %v549 = vadd.f32 %v533, %v505
      %v550 = vadd.f32 %v534, %v505
      %v551 = vadd.f32 %v535, %v505
      %v552 = vadd.f32 %v536, %v505
      %v553 = vadd.f32 %v537, %v505
      %v554 = vadd.f32 %v538, %v505
      %v555 = vadd.f32 %v539, %v505
      %v556 = vadd.f32 %v540, %v505
      %v557 = vld [vmem:[%s471] sm:$0xff]
      %v558 = vld [vmem:[%s471 + $0x8] sm:$0xff]
      %v559 = vmul.f32 %v557, %v500
      %v560 = vmul.f32 %v558, %v500
      %v561 = vadd.f32 %v559, %v505
      %v562 = vadd.f32 %v560, %v505
      %p563 = scmp.gt.s32.totalorder %s25, 0
      %s564 = scalar_select %p563, 1, 0
      %v565 = vstv %s564
      %vm566 = vcmp.eq.s32.totalorder %v565, 1
      %v567 = vsel %vm566, %v507, 0.0
      %v568 = vsel %vm566, %v508, 0.0
      %p569 = scmp.lt.s32.totalorder %s25, 1
      %s570 = scalar_select %p569, 1, 0
      %v571 = vstv %s570
      %vm572 = vcmp.eq.s32.totalorder %v571, 1
      %v573 = vsel %vm572, %v561, 0.0
      %v574 = vsel %vm572, %v562, 0.0
      %vm595 = vcmask 1040384
      %v596 = vrot.slane %v567, 7
      %v597 = vrot.slane %v568, 7
      %v598 = vsel %vm595, %v596, %v597
      %v599 = vrot.slane %v541, 7
      %v600 = vrot.slane %v542, 7
      %v601 = vsel %vm595, %v599, %v600
      %v602 = vrot.slane %v543, 7
      %v603 = vrot.slane %v544, 7
      %v604 = vsel %vm595, %v602, %v603
      %v605 = vrot.slane %v545, 7
      %v606 = vrot.slane %v546, 7
      %v607 = vsel %vm595, %v605, %v606
      %v608 = vrot.slane %v547, 7
      %v609 = vrot.slane %v548, 7
      %v610 = vsel %vm595, %v608, %v609
      %v611 = vrot.slane %v549, 7
      %v612 = vrot.slane %v550, 7
      %v613 = vsel %vm595, %v611, %v612
      %v614 = vrot.slane %v551, 7
      %v615 = vrot.slane %v552, 7
      %v616 = vsel %vm595, %v614, %v615
      %v617 = vrot.slane %v553, 7
      %v618 = vrot.slane %v554, 7
      %v619 = vsel %vm595, %v617, %v618
      %v620 = vrot.slane %v555, 7
      %v621 = vrot.slane %v556, 7
      %v622 = vsel %vm595, %v620, %v621
      %v623 = vrot.slane %v573, 7
      %v624 = vrot.slane %v574, 7
      %v625 = vsel %vm595, %v623, %v624
      %v646 = vsel %vm595, 0.0, %v596
      %v647 = vsel %vm595, 0.0, %v599
      %v648 = vsel %vm595, 0.0, %v602
      %v649 = vsel %vm595, 0.0, %v605
      %v650 = vsel %vm595, 0.0, %v608
      %v651 = vsel %vm595, 0.0, %v611
      %v652 = vsel %vm595, 0.0, %v614
      %v653 = vsel %vm595, 0.0, %v617
      %v654 = vsel %vm595, 0.0, %v620
      %v655 = vsel %vm595, 0.0, %v623
      %vm656 = vcmask 1046528
      %v657 = vrot.slane %v567, 1
      %v658 = vrot.slane %v568, 1
      %v659 = vsel %vm656, %v657, %v658
      %v660 = vrot.slane %v541, 1
      %v661 = vrot.slane %v542, 1
      %v662 = vsel %vm656, %v660, %v661
      %v663 = vrot.slane %v543, 1
      %v664 = vrot.slane %v544, 1
      %v665 = vsel %vm656, %v663, %v664
      %v666 = vrot.slane %v545, 1
      %v667 = vrot.slane %v546, 1
      %v668 = vsel %vm656, %v666, %v667
      %v669 = vrot.slane %v547, 1
      %v670 = vrot.slane %v548, 1
      %v671 = vsel %vm656, %v669, %v670
      %v672 = vrot.slane %v549, 1
      %v673 = vrot.slane %v550, 1
      %v674 = vsel %vm656, %v672, %v673
      %v675 = vrot.slane %v551, 1
      %v676 = vrot.slane %v552, 1
      %v677 = vsel %vm656, %v675, %v676
      %v678 = vrot.slane %v553, 1
      %v679 = vrot.slane %v554, 1
      %v680 = vsel %vm656, %v678, %v679
      %v681 = vrot.slane %v555, 1
      %v682 = vrot.slane %v556, 1
      %v683 = vsel %vm656, %v681, %v682
      %v684 = vrot.slane %v573, 1
      %v685 = vrot.slane %v574, 1
      %v686 = vsel %vm656, %v684, %v685
      %v697 = vsel %vm656, %v658, 0.0
      %v698 = vsel %vm656, %v661, 0.0
      %v699 = vsel %vm656, %v664, 0.0
      %v700 = vsel %vm656, %v667, 0.0
      %v701 = vsel %vm656, %v670, 0.0
      %v702 = vsel %vm656, %v673, 0.0
      %v703 = vsel %vm656, %v676, 0.0
      %v704 = vsel %vm656, %v679, 0.0
      %v705 = vsel %vm656, %v682, 0.0
      %v706 = vsel %vm656, %v685, 0.0
      %707 = vrot.lane.b32.xlu0 %v567, 4
      %v708 = vpop.permute.xlu0 %707
      %709 = vrot.lane.b32.xlu0 %v568, 4
      %v710 = vpop.permute.xlu0 %709
      %711 = vrot.lane.b32.xlu0 %v541, 4
      %v712 = vpop.permute.xlu0 %711
      %713 = vrot.lane.b32.xlu0 %v542, 4
      %v714 = vpop.permute.xlu0 %713
      %715 = vrot.lane.b32.xlu0 %v543, 4
      %v716 = vpop.permute.xlu0 %715
      %717 = vrot.lane.b32.xlu0 %v544, 4
      %v718 = vpop.permute.xlu0 %717
      %719 = vrot.lane.b32.xlu0 %v545, 4
      %v720 = vpop.permute.xlu0 %719
      %721 = vrot.lane.b32.xlu0 %v546, 4
      %v722 = vpop.permute.xlu0 %721
      %723 = vrot.lane.b32.xlu0 %v547, 4
      %v724 = vpop.permute.xlu0 %723
      %725 = vrot.lane.b32.xlu0 %v548, 4
      %v726 = vpop.permute.xlu0 %725
      %727 = vrot.lane.b32.xlu0 %v549, 4
      %v728 = vpop.permute.xlu0 %727
      %729 = vrot.lane.b32.xlu0 %v550, 4
      %v730 = vpop.permute.xlu0 %729
      %731 = vrot.lane.b32.xlu0 %v551, 4
      %v732 = vpop.permute.xlu0 %731
      %733 = vrot.lane.b32.xlu0 %v552, 4
      %v734 = vpop.permute.xlu0 %733
      %735 = vrot.lane.b32.xlu0 %v553, 4
      %v736 = vpop.permute.xlu0 %735
      %737 = vrot.lane.b32.xlu0 %v554, 4
      %v738 = vpop.permute.xlu0 %737
      %739 = vrot.lane.b32.xlu0 %v555, 4
      %v740 = vpop.permute.xlu0 %739
      %741 = vrot.lane.b32.xlu0 %v556, 4
      %v742 = vpop.permute.xlu0 %741
      %743 = vrot.lane.b32.xlu0 %v573, 4
      %v744 = vpop.permute.xlu0 %743
      %745 = vrot.lane.b32.xlu0 %v574, 4
      %v746 = vpop.permute.xlu0 %745
      %777 = vrot.lane.b32.xlu0 %v659, 8
      %v778 = vpop.permute.xlu0 %777
      %779 = vrot.lane.b32.xlu0 %v697, 8
      %v780 = vpop.permute.xlu0 %779
      %781 = vrot.lane.b32.xlu0 %v662, 8
      %v782 = vpop.permute.xlu0 %781
      %783 = vrot.lane.b32.xlu0 %v698, 8
      %v784 = vpop.permute.xlu0 %783
      %785 = vrot.lane.b32.xlu0 %v665, 8
      %v786 = vpop.permute.xlu0 %785
      %787 = vrot.lane.b32.xlu0 %v699, 8
      %v788 = vpop.permute.xlu0 %787
      %789 = vrot.lane.b32.xlu0 %v668, 8
      %v790 = vpop.permute.xlu0 %789
      %791 = vrot.lane.b32.xlu0 %v700, 8
      %v792 = vpop.permute.xlu0 %791
      %793 = vrot.lane.b32.xlu0 %v671, 8
      %v794 = vpop.permute.xlu0 %793
      %795 = vrot.lane.b32.xlu0 %v701, 8
      %v796 = vpop.permute.xlu0 %795
      %797 = vrot.lane.b32.xlu0 %v674, 8
      %v798 = vpop.permute.xlu0 %797
      %799 = vrot.lane.b32.xlu0 %v702, 8
      %v800 = vpop.permute.xlu0 %799
      %801 = vrot.lane.b32.xlu0 %v677, 8
      %v802 = vpop.permute.xlu0 %801
      %803 = vrot.lane.b32.xlu0 %v703, 8
      %v804 = vpop.permute.xlu0 %803
      %805 = vrot.lane.b32.xlu0 %v680, 8
      %v806 = vpop.permute.xlu0 %805
      %807 = vrot.lane.b32.xlu0 %v704, 8
      %v808 = vpop.permute.xlu0 %807
      %809 = vrot.lane.b32.xlu0 %v683, 8
      %v810 = vpop.permute.xlu0 %809
      %811 = vrot.lane.b32.xlu0 %v705, 8
      %v812 = vpop.permute.xlu0 %811
      %813 = vrot.lane.b32.xlu0 %v686, 8
      %v814 = vpop.permute.xlu0 %813
      %815 = vrot.lane.b32.xlu0 %v706, 8
      %v816 = vpop.permute.xlu0 %815
      %vm837 = vcmask 31744
      %v838 = vsel %vm837, %v646, %v708
      %v839 = vsel %vm837, %v598, %v710
      %v840 = vsel %vm837, %v647, %v712
      %v841 = vsel %vm837, %v601, %v714
      %v842 = vsel %vm837, %v648, %v716
      %v843 = vsel %vm837, %v604, %v718
      %v844 = vsel %vm837, %v649, %v720
      %v845 = vsel %vm837, %v607, %v722
      %v846 = vsel %vm837, %v650, %v724
      %v847 = vsel %vm837, %v610, %v726
      %v848 = vsel %vm837, %v651, %v728
      %v849 = vsel %vm837, %v613, %v730
      %v850 = vsel %vm837, %v652, %v732
      %v851 = vsel %vm837, %v616, %v734
      %v852 = vsel %vm837, %v653, %v736
      %v853 = vsel %vm837, %v619, %v738
      %v854 = vsel %vm837, %v654, %v740
      %v855 = vsel %vm837, %v622, %v742
      %v856 = vsel %vm837, %v655, %v744
      %v857 = vsel %vm837, %v625, %v746
      %vm858 = vcmask 64512
      %v859 = vsel %vm858, %v838, %v778
      %v860 = vsel %vm858, %v839, %v780
      %v861 = vsel %vm858, %v840, %v782
      %v862 = vsel %vm858, %v841, %v784
      %v863 = vsel %vm858, %v842, %v786
      %v864 = vsel %vm858, %v843, %v788
      %v865 = vsel %vm858, %v844, %v790
      %v866 = vsel %vm858, %v845, %v792
      %v867 = vsel %vm858, %v846, %v794
      %v868 = vsel %vm858, %v847, %v796
      %v869 = vsel %vm858, %v848, %v798
      %v870 = vsel %vm858, %v849, %v800
      %v871 = vsel %vm858, %v850, %v802
      %v872 = vsel %vm858, %v851, %v804
      %v873 = vsel %vm858, %v852, %v806
      %v874 = vsel %vm858, %v853, %v808
      %v875 = vsel %vm858, %v854, %v810
      %v876 = vsel %vm858, %v855, %v812
      %v877 = vsel %vm858, %v856, %v814
      %v878 = vsel %vm858, %v857, %v816
      %v879 = vld [vmem:[%s2] sm:$0xff]
      %v880 = vld [vmem:[%s2 + $0x8] sm:$0xf]
      %vm881 = vcmask 97280
      %v883 = vsel %vm881, %v859, 0
      %v886 = vsel %vm881, %v860, 0
      %v889 = vsel %vm881, %v861, 0
      %v892 = vsel %vm881, %v862, 0
      %v895 = vsel %vm881, %v863, 0
      %v898 = vsel %vm881, %v864, 0
      %v901 = vsel %vm881, %v865, 0
      %v904 = vsel %vm881, %v866, 0
      %v907 = vsel %vm881, %v867, 0
      %v910 = vsel %vm881, %v868, 0
      %v913 = vsel %vm881, %v869, 0
      %v916 = vsel %vm881, %v870, 0
      %v919 = vsel %vm881, %v871, 0
      %v922 = vsel %vm881, %v872, 0
      %v925 = vsel %vm881, %v873, 0
      %v928 = vsel %vm881, %v874, 0
      %vm930 = vcmask 1043456
      %v932 = vsel %vm930, %v880, 0
      %934 = vmatpush.msra.mxu0 0.0
      %935 = vmatpush.msra.mxu0 0.0
      %936 = vmatpush.msra.mxu0 0.0
      %937 = vmatpush.msra.mxu0 0.0
      %938 = vmatpush.msra.mxu0 0.0
      %939 = vmatpush.msra.mxu0 0.0
      %940 = vmatpush.msra.mxu0 0.0
      %941 = vmatpush.msra.mxu0 0.0
      %942 = vmatpush.msra.mxu0 0.0
      %943 = vmatpush.msra.mxu0 0.0
      %944 = vmatpush.msra.mxu0 0.0
      %945 = vmatpush.msra.mxu0 0.0
      %946 = vmatpush.msra.mxu0 0.0
      %947 = vmatpush.msra.mxu0 0.0
      %948 = vmatpush.msra.mxu0 %v932
      %949 = vmatpush.msra.mxu0 %v879
      %950 = vmatmul.f32.gmra.mxu0 %v883
      %v951 = vpop.f32.mrf.mxu0
      %v952 = vadd.f32 0.0, %v951
      %953 = vmatmul.f32.gmra.mxu0 %v886
      %v954 = vpop.f32.mrf.mxu0
      %v955 = vadd.f32 0.0, %v954
      %956 = vmatmul.f32.gmra.mxu0 %v889
      %v957 = vpop.f32.mrf.mxu0
      %v958 = vadd.f32 0.0, %v957
      %959 = vmatmul.f32.gmra.mxu0 %v892
      %v960 = vpop.f32.mrf.mxu0
      %v961 = vadd.f32 0.0, %v960
      %962 = vmatmul.f32.gmra.mxu0 %v895
      %v963 = vpop.f32.mrf.mxu0
      %v964 = vadd.f32 0.0, %v963
      %965 = vmatmul.f32.gmra.mxu0 %v898
      %v966 = vpop.f32.mrf.mxu0
      %v967 = vadd.f32 0.0, %v966
      %968 = vmatmul.f32.gmra.mxu0 %v901
      %v969 = vpop.f32.mrf.mxu0
      %v970 = vadd.f32 0.0, %v969
      %971 = vmatmul.f32.gmra.mxu0 %v904
      %v972 = vpop.f32.mrf.mxu0
      %v973 = vadd.f32 0.0, %v972
      %974 = vmatmul.f32.gmra.mxu0 %v907
      %v975 = vpop.f32.mrf.mxu0
      %v976 = vadd.f32 0.0, %v975
      %977 = vmatmul.f32.gmra.mxu0 %v910
      %v978 = vpop.f32.mrf.mxu0
      %v979 = vadd.f32 0.0, %v978
      %980 = vmatmul.f32.gmra.mxu0 %v913
      %v981 = vpop.f32.mrf.mxu0
      %v982 = vadd.f32 0.0, %v981
      %983 = vmatmul.f32.gmra.mxu0 %v916
      %v984 = vpop.f32.mrf.mxu0
      %v985 = vadd.f32 0.0, %v984
      %986 = vmatmul.f32.gmra.mxu0 %v919
      %v987 = vpop.f32.mrf.mxu0
      %v988 = vadd.f32 0.0, %v987
      %989 = vmatmul.f32.gmra.mxu0 %v922
      %v990 = vpop.f32.mrf.mxu0
      %v991 = vadd.f32 0.0, %v990
      %992 = vmatmul.f32.gmra.mxu0 %v925
      %v993 = vpop.f32.mrf.mxu0
      %v994 = vadd.f32 0.0, %v993
      %995 = vmatmul.f32.gmra.mxu0 %v928
      %v996 = vpop.f32.mrf.mxu0
      %v997 = vadd.f32 0.0, %v996
      %998 = vdwg.mxu0
      %999 = vst.msk [vmem:[#allocation2] sm:$0xff] %vm858, %v952
      %1000 = vst.msk [vmem:[#allocation2 + $0x8] sm:$0xff] %vm858, %v955
      %1001 = vst.msk [vmem:[#allocation2 + $0x10] sm:$0xff] %vm858, %v958
      %1002 = vst.msk [vmem:[#allocation2 + $0x18] sm:$0xff] %vm858, %v961
      %1003 = vst.msk [vmem:[#allocation2 + $0x20] sm:$0xff] %vm858, %v964
      %1004 = vst.msk [vmem:[#allocation2 + $0x28] sm:$0xff] %vm858, %v967
      %1005 = vst.msk [vmem:[#allocation2 + $0x30] sm:$0xff] %vm858, %v970
      %1006 = vst.msk [vmem:[#allocation2 + $0x38] sm:$0xff] %vm858, %v973
      %1007 = vst.msk [vmem:[#allocation2 + $0x40] sm:$0xff] %vm858, %v976
      %1008 = vst.msk [vmem:[#allocation2 + $0x48] sm:$0xff] %vm858, %v979
      %1009 = vst.msk [vmem:[#allocation2 + $0x50] sm:$0xff] %vm858, %v982
      %1010 = vst.msk [vmem:[#allocation2 + $0x58] sm:$0xff] %vm858, %v985
      %1011 = vst.msk [vmem:[#allocation2 + $0x60] sm:$0xff] %vm858, %v988
      %1012 = vst.msk [vmem:[#allocation2 + $0x68] sm:$0xff] %vm858, %v991
      %1013 = vst.msk [vmem:[#allocation2 + $0x70] sm:$0xff] %vm858, %v994
      %1014 = vst.msk [vmem:[#allocation2 + $0x78] sm:$0xff] %vm858, %v997
      %s1015 = scalar_lea.vmem %s2, 16
      %v1016 = vld [vmem:[%s1015] sm:$0xff]
      %v1017 = vld [vmem:[%s1015 + $0x8] sm:$0xf]
      %v1019 = vsel %vm881, %v875, 0
      %v1022 = vsel %vm881, %v876, 0
      %v1025 = vsel %vm930, %v1017, 0
      %1027 = vmatpush.msra.mxu0 0.0
      %1028 = vmatpush.msra.mxu0 0.0
      %1029 = vmatpush.msra.mxu0 0.0
      %1030 = vmatpush.msra.mxu0 0.0
      %1031 = vmatpush.msra.mxu0 0.0
      %1032 = vmatpush.msra.mxu0 0.0
      %1033 = vmatpush.msra.mxu0 0.0
      %1034 = vmatpush.msra.mxu0 0.0
      %1035 = vmatpush.msra.mxu0 0.0
      %1036 = vmatpush.msra.mxu0 0.0
      %1037 = vmatpush.msra.mxu0 0.0
      %1038 = vmatpush.msra.mxu0 0.0
      %1039 = vmatpush.msra.mxu0 0.0
      %1040 = vmatpush.msra.mxu0 0.0
      %1041 = vmatpush.msra.mxu0 %v1025
      %1042 = vmatpush.msra.mxu0 %v1016
      %1043 = vmatmul.f32.gmra.mxu0 %v889
      %v1044 = vpop.f32.mrf.mxu0
      %v1045 = vadd.f32 0.0, %v1044
      %1046 = vmatmul.f32.gmra.mxu0 %v892
      %v1047 = vpop.f32.mrf.mxu0
      %v1048 = vadd.f32 0.0, %v1047
      %1049 = vmatmul.f32.gmra.mxu0 %v895
      %v1050 = vpop.f32.mrf.mxu0
      %v1051 = vadd.f32 0.0, %v1050
      %1052 = vmatmul.f32.gmra.mxu0 %v898
      %v1053 = vpop.f32.mrf.mxu0
      %v1054 = vadd.f32 0.0, %v1053
      %1055 = vmatmul.f32.gmra.mxu0 %v901
      %v1056 = vpop.f32.mrf.mxu0
      %v1057 = vadd.f32 0.0, %v1056
      %1058 = vmatmul.f32.gmra.mxu0 %v904
      %v1059 = vpop.f32.mrf.mxu0
      %v1060 = vadd.f32 0.0, %v1059
      %1061 = vmatmul.f32.gmra.mxu0 %v907
      %v1062 = vpop.f32.mrf.mxu0
      %v1063 = vadd.f32 0.0, %v1062
      %1064 = vmatmul.f32.gmra.mxu0 %v910
      %v1065 = vpop.f32.mrf.mxu0
      %v1066 = vadd.f32 0.0, %v1065
      %1067 = vmatmul.f32.gmra.mxu0 %v913
      %v1068 = vpop.f32.mrf.mxu0
      %v1069 = vadd.f32 0.0, %v1068
      %1070 = vmatmul.f32.gmra.mxu0 %v916
      %v1071 = vpop.f32.mrf.mxu0
      %v1072 = vadd.f32 0.0, %v1071
      %1073 = vmatmul.f32.gmra.mxu0 %v919
      %v1074 = vpop.f32.mrf.mxu0
      %v1075 = vadd.f32 0.0, %v1074
      %1076 = vmatmul.f32.gmra.mxu0 %v922
      %v1077 = vpop.f32.mrf.mxu0
      %v1078 = vadd.f32 0.0, %v1077
      %1079 = vmatmul.f32.gmra.mxu0 %v925
      %v1080 = vpop.f32.mrf.mxu0
      %v1081 = vadd.f32 0.0, %v1080
      %1082 = vmatmul.f32.gmra.mxu0 %v928
      %v1083 = vpop.f32.mrf.mxu0
      %v1084 = vadd.f32 0.0, %v1083
      %1085 = vmatmul.f32.gmra.mxu0 %v1019
      %v1086 = vpop.f32.mrf.mxu0
      %v1087 = vadd.f32 0.0, %v1086
      %1088 = vmatmul.f32.gmra.mxu0 %v1022
      %v1089 = vpop.f32.mrf.mxu0
      %v1090 = vadd.f32 0.0, %v1089
      %1091 = vdwg.mxu0
      %v1092 = vld [vmem:[#allocation2] sm:$0xff]
      %v1093 = vld [vmem:[#allocation2 + $0x8] sm:$0xff]
      %v1094 = vld [vmem:[#allocation2 + $0x10] sm:$0xff]
      %v1095 = vld [vmem:[#allocation2 + $0x18] sm:$0xff]
      %v1096 = vld [vmem:[#allocation2 + $0x20] sm:$0xff]
      %v1097 = vld [vmem:[#allocation2 + $0x28] sm:$0xff]
      %v1098 = vld [vmem:[#allocation2 + $0x30] sm:$0xff]
      %v1099 = vld [vmem:[#allocation2 + $0x38] sm:$0xff]
      %v1100 = vld [vmem:[#allocation2 + $0x40] sm:$0xff]
      %v1101 = vld [vmem:[#allocation2 + $0x48] sm:$0xff]
      %v1102 = vld [vmem:[#allocation2 + $0x50] sm:$0xff]
      %v1103 = vld [vmem:[#allocation2 + $0x58] sm:$0xff]
      %v1104 = vld [vmem:[#allocation2 + $0x60] sm:$0xff]
      %v1105 = vld [vmem:[#allocation2 + $0x68] sm:$0xff]
      %v1106 = vld [vmem:[#allocation2 + $0x70] sm:$0xff]
      %v1107 = vld [vmem:[#allocation2 + $0x78] sm:$0xff]
      %v1108 = vadd.f32 %v1092, %v1045
      %v1109 = vadd.f32 %v1093, %v1048
      %v1110 = vadd.f32 %v1094, %v1051
      %v1111 = vadd.f32 %v1095, %v1054
      %v1112 = vadd.f32 %v1096, %v1057
      %v1113 = vadd.f32 %v1097, %v1060
      %v1114 = vadd.f32 %v1098, %v1063
      %v1115 = vadd.f32 %v1099, %v1066
      %v1116 = vadd.f32 %v1100, %v1069
      %v1117 = vadd.f32 %v1101, %v1072
      %v1118 = vadd.f32 %v1102, %v1075
      %v1119 = vadd.f32 %v1103, %v1078
      %v1120 = vadd.f32 %v1104, %v1081
      %v1121 = vadd.f32 %v1105, %v1084
      %v1122 = vadd.f32 %v1106, %v1087
      %v1123 = vadd.f32 %v1107, %v1090
      %1124 = vst.msk [vmem:[#allocation2] sm:$0xff] %vm858, %v1108
      %1125 = vst.msk [vmem:[#allocation2 + $0x8] sm:$0xff] %vm858, %v1109
      %1126 = vst.msk [vmem:[#allocation2 + $0x10] sm:$0xff] %vm858, %v1110
      %1127 = vst.msk [vmem:[#allocation2 + $0x18] sm:$0xff] %vm858, %v1111
      %1128 = vst.msk [vmem:[#allocation2 + $0x20] sm:$0xff] %vm858, %v1112
      %1129 = vst.msk [vmem:[#allocation2 + $0x28] sm:$0xff] %vm858, %v1113
      %1130 = vst.msk [vmem:[#allocation2 + $0x30] sm:$0xff] %vm858, %v1114
      %1131 = vst.msk [vmem:[#allocation2 + $0x38] sm:$0xff] %vm858, %v1115
      %1132 = vst.msk [vmem:[#allocation2 + $0x40] sm:$0xff] %vm858, %v1116
      %1133 = vst.msk [vmem:[#allocation2 + $0x48] sm:$0xff] %vm858, %v1117
      %1134 = vst.msk [vmem:[#allocation2 + $0x50] sm:$0xff] %vm858, %v1118
      %1135 = vst.msk [vmem:[#allocation2 + $0x58] sm:$0xff] %vm858, %v1119
      %1136 = vst.msk [vmem:[#allocation2 + $0x60] sm:$0xff] %vm858, %v1120
      %1137 = vst.msk [vmem:[#allocation2 + $0x68] sm:$0xff] %vm858, %v1121
      %1138 = vst.msk [vmem:[#allocation2 + $0x70] sm:$0xff] %vm858, %v1122
      %1139 = vst.msk [vmem:[#allocation2 + $0x78] sm:$0xff] %vm858, %v1123
      %s1140 = scalar_lea.vmem %s2, 32
      %v1141 = vld [vmem:[%s1140] sm:$0xff]
      %v1142 = vld [vmem:[%s1140 + $0x8] sm:$0xf]
      %v1144 = vsel %vm881, %v877, 0
      %v1147 = vsel %vm881, %v878, 0
      %v1150 = vsel %vm930, %v1142, 0
      %1152 = vmatpush.msra.mxu0 0.0
      %1153 = vmatpush.msra.mxu0 0.0
      %1154 = vmatpush.msra.mxu0 0.0
      %1155 = vmatpush.msra.mxu0 0.0
      %1156 = vmatpush.msra.mxu0 0.0
      %1157 = vmatpush.msra.mxu0 0.0
      %1158 = vmatpush.msra.mxu0 0.0
      %1159 = vmatpush.msra.mxu0 0.0
      %1160 = vmatpush.msra.mxu0 0.0
      %1161 = vmatpush.msra.mxu0 0.0
      %1162 = vmatpush.msra.mxu0 0.0
      %1163 = vmatpush.msra.mxu0 0.0
      %1164 = vmatpush.msra.mxu0 0.0
      %1165 = vmatpush.msra.mxu0 0.0
      %1166 = vmatpush.msra.mxu0 %v1150
      %1167 = vmatpush.msra.mxu0 %v1141
      %1168 = vmatmul.f32.gmra.mxu0 %v895
      %v1169 = vpop.f32.mrf.mxu0
      %v1170 = vadd.f32 0.0, %v1169
      %1171 = vmatmul.f32.gmra.mxu0 %v898
      %v1172 = vpop.f32.mrf.mxu0
      %v1173 = vadd.f32 0.0, %v1172
      %1174 = vmatmul.f32.gmra.mxu0 %v901
      %v1175 = vpop.f32.mrf.mxu0
      %v1176 = vadd.f32 0.0, %v1175
      %1177 = vmatmul.f32.gmra.mxu0 %v904
      %v1178 = vpop.f32.mrf.mxu0
      %v1179 = vadd.f32 0.0, %v1178
      %1180 = vmatmul.f32.gmra.mxu0 %v907
      %v1181 = vpop.f32.mrf.mxu0
      %v1182 = vadd.f32 0.0, %v1181
      %1183 = vmatmul.f32.gmra.mxu0 %v910
      %v1184 = vpop.f32.mrf.mxu0
      %v1185 = vadd.f32 0.0, %v1184
      %1186 = vmatmul.f32.gmra.mxu0 %v913
      %v1187 = vpop.f32.mrf.mxu0
      %v1188 = vadd.f32 0.0, %v1187
      %1189 = vmatmul.f32.gmra.mxu0 %v916
      %v1190 = vpop.f32.mrf.mxu0
      %v1191 = vadd.f32 0.0, %v1190
      %1192 = vmatmul.f32.gmra.mxu0 %v919
      %v1193 = vpop.f32.mrf.mxu0
      %v1194 = vadd.f32 0.0, %v1193
      %1195 = vmatmul.f32.gmra.mxu0 %v922
      %v1196 = vpop.f32.mrf.mxu0
      %v1197 = vadd.f32 0.0, %v1196
      %1198 = vmatmul.f32.gmra.mxu0 %v925
      %v1199 = vpop.f32.mrf.mxu0
      %v1200 = vadd.f32 0.0, %v1199
      %1201 = vmatmul.f32.gmra.mxu0 %v928
      %v1202 = vpop.f32.mrf.mxu0
      %v1203 = vadd.f32 0.0, %v1202
      %1204 = vmatmul.f32.gmra.mxu0 %v1019
      %v1205 = vpop.f32.mrf.mxu0
      %v1206 = vadd.f32 0.0, %v1205
      %1207 = vmatmul.f32.gmra.mxu0 %v1022
      %v1208 = vpop.f32.mrf.mxu0
      %v1209 = vadd.f32 0.0, %v1208
      %1210 = vmatmul.f32.gmra.mxu0 %v1144
      %v1211 = vpop.f32.mrf.mxu0
      %v1212 = vadd.f32 0.0, %v1211
      %1213 = vmatmul.f32.gmra.mxu0 %v1147
      %v1214 = vpop.f32.mrf.mxu0
      %v1215 = vadd.f32 0.0, %v1214
      %1216 = vdwg.mxu0
      %v1217 = vld [vmem:[#allocation2] sm:$0xff]
      %v1218 = vld [vmem:[#allocation2 + $0x8] sm:$0xff]
      %v1219 = vld [vmem:[#allocation2 + $0x10] sm:$0xff]
      %v1220 = vld [vmem:[#allocation2 + $0x18] sm:$0xff]
      %v1221 = vld [vmem:[#allocation2 + $0x20] sm:$0xff]
      %v1222 = vld [vmem:[#allocation2 + $0x28] sm:$0xff]
      %v1223 = vld [vmem:[#allocation2 + $0x30] sm:$0xff]
      %v1224 = vld [vmem:[#allocation2 + $0x38] sm:$0xff]
      %v1225 = vld [vmem:[#allocation2 + $0x40] sm:$0xff]
      %v1226 = vld [vmem:[#allocation2 + $0x48] sm:$0xff]
      %v1227 = vld [vmem:[#allocation2 + $0x50] sm:$0xff]
      %v1228 = vld [vmem:[#allocation2 + $0x58] sm:$0xff]
      %v1229 = vld [vmem:[#allocation2 + $0x60] sm:$0xff]
      %v1230 = vld [vmem:[#allocation2 + $0x68] sm:$0xff]
      %v1231 = vld [vmem:[#allocation2 + $0x70] sm:$0xff]
      %v1232 = vld [vmem:[#allocation2 + $0x78] sm:$0xff]
      %v1233 = vadd.f32 %v1217, %v1170
      %v1234 = vadd.f32 %v1218, %v1173
      %v1235 = vadd.f32 %v1219, %v1176
      %v1236 = vadd.f32 %v1220, %v1179
      %v1237 = vadd.f32 %v1221, %v1182
      %v1238 = vadd.f32 %v1222, %v1185
      %v1239 = vadd.f32 %v1223, %v1188
      %v1240 = vadd.f32 %v1224, %v1191
      %v1241 = vadd.f32 %v1225, %v1194
      %v1242 = vadd.f32 %v1226, %v1197
      %v1243 = vadd.f32 %v1227, %v1200
      %v1244 = vadd.f32 %v1228, %v1203
      %v1245 = vadd.f32 %v1229, %v1206
      %v1246 = vadd.f32 %v1230, %v1209
      %v1247 = vadd.f32 %v1231, %v1212
      %v1248 = vadd.f32 %v1232, %v1215
      %1249 = vst.msk [vmem:[#allocation2] sm:$0xff] %vm858, %v1233
      %1250 = vst.msk [vmem:[#allocation2 + $0x8] sm:$0xff] %vm858, %v1234
      %1251 = vst.msk [vmem:[#allocation2 + $0x10] sm:$0xff] %vm858, %v1235
      %1252 = vst.msk [vmem:[#allocation2 + $0x18] sm:$0xff] %vm858, %v1236
      %1253 = vst.msk [vmem:[#allocation2 + $0x20] sm:$0xff] %vm858, %v1237
      %1254 = vst.msk [vmem:[#allocation2 + $0x28] sm:$0xff] %vm858, %v1238
      %1255 = vst.msk [vmem:[#allocation2 + $0x30] sm:$0xff] %vm858, %v1239
      %1256 = vst.msk [vmem:[#allocation2 + $0x38] sm:$0xff] %vm858, %v1240
      %1257 = vst.msk [vmem:[#allocation2 + $0x40] sm:$0xff] %vm858, %v1241
      %1258 = vst.msk [vmem:[#allocation2 + $0x48] sm:$0xff] %vm858, %v1242
      %1259 = vst.msk [vmem:[#allocation2 + $0x50] sm:$0xff] %vm858, %v1243
      %1260 = vst.msk [vmem:[#allocation2 + $0x58] sm:$0xff] %vm858, %v1244
      %1261 = vst.msk [vmem:[#allocation2 + $0x60] sm:$0xff] %vm858, %v1245
      %1262 = vst.msk [vmem:[#allocation2 + $0x68] sm:$0xff] %vm858, %v1246
      %1263 = vst.msk [vmem:[#allocation2 + $0x70] sm:$0xff] %vm858, %v1247
      %1264 = vst.msk [vmem:[#allocation2 + $0x78] sm:$0xff] %vm858, %v1248
      %v1265 = vld [vmem:[#allocation2] sm:$0xff]
      %v1266 = vld [vmem:[#allocation2 + $0x8] sm:$0xff]
      %v1267 = vld [vmem:[#allocation2 + $0x10] sm:$0xff]
      %v1268 = vld [vmem:[#allocation2 + $0x18] sm:$0xff]
      %v1269 = vld [vmem:[#allocation2 + $0x20] sm:$0xff]
      %v1270 = vld [vmem:[#allocation2 + $0x28] sm:$0xff]
      %v1271 = vld [vmem:[#allocation2 + $0x30] sm:$0xff]
      %v1272 = vld [vmem:[#allocation2 + $0x38] sm:$0xff]
      %v1273 = vld [vmem:[#allocation2 + $0x40] sm:$0xff]
      %v1274 = vld [vmem:[#allocation2 + $0x48] sm:$0xff]
      %v1275 = vld [vmem:[#allocation2 + $0x50] sm:$0xff]
      %v1276 = vld [vmem:[#allocation2 + $0x58] sm:$0xff]
      %v1277 = vld [vmem:[#allocation2 + $0x60] sm:$0xff]
      %v1278 = vld [vmem:[#allocation2 + $0x68] sm:$0xff]
      %v1279 = vld [vmem:[#allocation2 + $0x70] sm:$0xff]
      %v1280 = vld [vmem:[#allocation2 + $0x78] sm:$0xff]
      %v1281 = vld [vmem:[%s3] sm:$0x1]
      %v1283 = vperm.slane %v1281, 0
      %v1285 = vadd.f32 %v1265, %v1283
      %v1286 = vadd.f32 %v1266, %v1283
      %v1287 = vadd.f32 %v1267, %v1283
      %v1288 = vadd.f32 %v1268, %v1283
      %v1289 = vadd.f32 %v1269, %v1283
      %v1290 = vadd.f32 %v1270, %v1283
      %v1291 = vadd.f32 %v1271, %v1283
      %v1292 = vadd.f32 %v1272, %v1283
      %v1293 = vadd.f32 %v1273, %v1283
      %v1294 = vadd.f32 %v1274, %v1283
      %v1295 = vadd.f32 %v1275, %v1283
      %v1296 = vadd.f32 %v1276, %v1283
      %v1297 = vadd.f32 %v1277, %v1283
      %v1298 = vadd.f32 %v1278, %v1283
      %v1299 = vadd.f32 %v1279, %v1283
      %v1300 = vadd.f32 %v1280, %v1283
      %v1301 = vmax.f32 %v1285, 0.0
      %v1302 = vmax.f32 %v1286, 0.0
      %v1303 = vmax.f32 %v1287, 0.0
      %v1304 = vmax.f32 %v1288, 0.0
      %v1305 = vmax.f32 %v1289, 0.0
      %v1306 = vmax.f32 %v1290, 0.0
      %v1307 = vmax.f32 %v1291, 0.0
      %v1308 = vmax.f32 %v1292, 0.0
      %v1309 = vmax.f32 %v1293, 0.0
      %v1310 = vmax.f32 %v1294, 0.0
      %v1311 = vmax.f32 %v1295, 0.0
      %v1312 = vmax.f32 %v1296, 0.0
      %v1313 = vmax.f32 %v1297, 0.0
      %v1314 = vmax.f32 %v1298, 0.0
      %v1315 = vmax.f32 %v1299, 0.0
      %v1316 = vmax.f32 %v1300, 0.0
      %v1317 = vsel %vm858, %v1301, 0.0
      %v1318 = vsel %vm858, %v1302, 0.0
      %v1319 = vadd.f32 %v1317, %v1318
      %v1320 = vsel %vm858, %v1303, 0.0
      %v1321 = vadd.f32 %v1319, %v1320
      %v1322 = vsel %vm858, %v1304, 0.0
      %v1323 = vadd.f32 %v1321, %v1322
      %v1324 = vsel %vm858, %v1305, 0.0
      %v1325 = vadd.f32 %v1323, %v1324
      %v1326 = vsel %vm858, %v1306, 0.0
      %v1327 = vadd.f32 %v1325, %v1326
      %v1328 = vsel %vm858, %v1307, 0.0
      %v1329 = vadd.f32 %v1327, %v1328
      %v1330 = vsel %vm858, %v1308, 0.0
      %v1331 = vadd.f32 %v1329, %v1330
      %v1332 = vsel %vm858, %v1309, 0.0
      %v1333 = vadd.f32 %v1331, %v1332
      %v1334 = vsel %vm858, %v1310, 0.0
      %v1335 = vadd.f32 %v1333, %v1334
      %v1336 = vsel %vm858, %v1311, 0.0
      %v1337 = vadd.f32 %v1335, %v1336
      %v1338 = vsel %vm858, %v1312, 0.0
      %v1339 = vadd.f32 %v1337, %v1338
      %v1340 = vsel %vm858, %v1313, 0.0
      %v1341 = vadd.f32 %v1339, %v1340
      %v1342 = vsel %vm858, %v1314, 0.0
      %v1343 = vadd.f32 %v1341, %v1342
      %v1344 = vsel %vm858, %v1315, 0.0
      %v1345 = vadd.f32 %v1343, %v1344
      %v1346 = vsel %vm858, %v1316, 0.0
      %v1347 = vadd.f32 %v1345, %v1346
      %v1348 = vrot.slane %v1347, 4
      %v1349 = vadd.f32 %v1347, %v1348
      %v1350 = vrot.slane %v1349, 2
      %v1351 = vadd.f32 %v1349, %v1350
      %v1352 = vrot.slane %v1351, 1
      %v1353 = vadd.f32 %v1351, %v1352
      %v1354 = vmul.f32 %v1301, %v1301
      %v1355 = vmul.f32 %v1302, %v1302
      %v1356 = vmul.f32 %v1303, %v1303
      %v1357 = vmul.f32 %v1304, %v1304
      %v1358 = vmul.f32 %v1305, %v1305
      %v1359 = vmul.f32 %v1306, %v1306
      %v1360 = vmul.f32 %v1307, %v1307
      %v1361 = vmul.f32 %v1308, %v1308
      %v1362 = vmul.f32 %v1309, %v1309
      %v1363 = vmul.f32 %v1310, %v1310
      %v1364 = vmul.f32 %v1311, %v1311
      %v1365 = vmul.f32 %v1312, %v1312
      %v1366 = vmul.f32 %v1313, %v1313
      %v1367 = vmul.f32 %v1314, %v1314
      %v1368 = vmul.f32 %v1315, %v1315
      %v1369 = vmul.f32 %v1316, %v1316
      %v1370 = vsel %vm858, %v1354, 0.0
      %v1371 = vsel %vm858, %v1355, 0.0
      %v1372 = vadd.f32 %v1370, %v1371
      %v1373 = vsel %vm858, %v1356, 0.0
      %v1374 = vadd.f32 %v1372, %v1373
      %v1375 = vsel %vm858, %v1357, 0.0
      %v1376 = vadd.f32 %v1374, %v1375
      %v1377 = vsel %vm858, %v1358, 0.0
      %v1378 = vadd.f32 %v1376, %v1377
      %v1379 = vsel %vm858, %v1359, 0.0
      %v1380 = vadd.f32 %v1378, %v1379
      %v1381 = vsel %vm858, %v1360, 0.0
      %v1382 = vadd.f32 %v1380, %v1381
      %v1383 = vsel %vm858, %v1361, 0.0
      %v1384 = vadd.f32 %v1382, %v1383
      %v1385 = vsel %vm858, %v1362, 0.0
      %v1386 = vadd.f32 %v1384, %v1385
      %v1387 = vsel %vm858, %v1363, 0.0
      %v1388 = vadd.f32 %v1386, %v1387
      %v1389 = vsel %vm858, %v1364, 0.0
      %v1390 = vadd.f32 %v1388, %v1389
      %v1391 = vsel %vm858, %v1365, 0.0
      %v1392 = vadd.f32 %v1390, %v1391
      %v1393 = vsel %vm858, %v1366, 0.0
      %v1394 = vadd.f32 %v1392, %v1393
      %v1395 = vsel %vm858, %v1367, 0.0
      %v1396 = vadd.f32 %v1394, %v1395
      %v1397 = vsel %vm858, %v1368, 0.0
      %v1398 = vadd.f32 %v1396, %v1397
      %v1399 = vsel %vm858, %v1369, 0.0
      %v1400 = vadd.f32 %v1398, %v1399
      %v1401 = vrot.slane %v1400, 4
      %v1402 = vadd.f32 %v1400, %v1401
      %v1403 = vrot.slane %v1402, 2
      %v1404 = vadd.f32 %v1402, %v1403
      %v1405 = vrot.slane %v1404, 1
      %v1406 = vadd.f32 %v1404, %v1405
      %v1407 = vsel %vm595, %v1353, %v1406
      %vm1408 = vcmask 58368
      %1409 = vst.msk [vmem:[%s494] sm:$0x3] %vm1408, %v1407
      %1410 = vst.msk [vmem:[%s485] sm:$0xff] %vm858, %v1301
      %1411 = vst.msk [vmem:[%s485 + $0x8] sm:$0xff] %vm858, %v1302
      %1412 = vst.msk [vmem:[%s485 + $0x10] sm:$0xff] %vm858, %v1303
      %1413 = vst.msk [vmem:[%s485 + $0x18] sm:$0xff] %vm858, %v1304
      %1414 = vst.msk [vmem:[%s485 + $0x20] sm:$0xff] %vm858, %v1305
      %1415 = vst.msk [vmem:[%s485 + $0x28] sm:$0xff] %vm858, %v1306
      %1416 = vst.msk [vmem:[%s485 + $0x30] sm:$0xff] %vm858, %v1307
      %1417 = vst.msk [vmem:[%s485 + $0x38] sm:$0xff] %vm858, %v1308
      %1418 = vst.msk [vmem:[%s485 + $0x40] sm:$0xff] %vm858, %v1309
      %1419 = vst.msk [vmem:[%s485 + $0x48] sm:$0xff] %vm858, %v1310
      %1420 = vst.msk [vmem:[%s485 + $0x50] sm:$0xff] %vm858, %v1311
      %1421 = vst.msk [vmem:[%s485 + $0x58] sm:$0xff] %vm858, %v1312
      %1422 = vst.msk [vmem:[%s485 + $0x60] sm:$0xff] %vm858, %v1313
      %1423 = vst.msk [vmem:[%s485 + $0x68] sm:$0xff] %vm858, %v1314
      %1424 = vst.msk [vmem:[%s485 + $0x70] sm:$0xff] %vm858, %v1315
      %1425 = vst.msk [vmem:[%s485 + $0x78] sm:$0xff] %vm858, %v1316
      %s1426 = smul.u32 8, %s25
      %p1427 = scmp.lt.s32.totalorder %s24, 1
      %s1428 = scalar_select %p1427, %s24, 1
      %p1429 = scmp.lt.s32.totalorder %s1426, 15
      %s1430 = scalar_select %p1429, %s1426, 15
      %s1431 = smul.addr %s1430, 2
      %s1432 = smul.addr %s1428, 32
      %s1433 = sadd.s32 %s1431, %s1432
      %s1434 = smul.addr %s1433, 8
      %s1435 = scalar_lea.vmem %s7, %s1434
      %p1436 = scmp.lt.s32.totalorder %s24, 1
      %s1437 = scalar_select %p1436, %s24, 1
      %p1438 = scmp.lt.s32.totalorder %s25, 1
      %s1439 = scalar_select %p1438, %s25, 1
      %s1440 = smul.addr %s1437, 2
      %s1441 = sadd.s32 %s1439, %s1440
      %s1442 = smul.addr %s1441, 2
      %s1443 = scalar_lea.vmem %s8, %s1442
      // Predicated region
      $region49: #{_unet_convblock.3} parent=47 // pred_check
        %p1444 = pneg %p236
      $region50: #{_unet_convblock.3} parent=47 // pred_check_branch
        %1446 = sbr.rel (%p1444) target = $region52
      $region51: #{_unet_convblock.3} parent=47 // pred_region
        %s1447 = smul.u32 8, %s25
      $region52: #{_unet_convblock.3} parent=47 // pred_fallthru
        _
      // Predicated region
      $region53: #{_unet_convblock.3} parent=47 // pred_check
        %p1448 = pneg %p264
      $region54: #{_unet_convblock.3} parent=47 // pred_check_branch
        %1450 = sbr.rel (%p1448) target = $region56
      $region55: #{_unet_convblock.3} parent=47 // pred_region
        _
      $region56: #{_unet_convblock.3} parent=47 // pred_fallthru
        _
    $region48: #{_unet_convblock.3} parent=5 // pred_fallthru
      _
    %p1451 = scmp.le.s32.totalorder 2, %s15
    // Predicated region
    $region57: #{_unet_convblock.3} parent=5 // pred_check
      %p1452 = pneg %p1451
    $region58: #{_unet_convblock.3} parent=5 // pred_check_branch
      %1454 = sbr.rel (%p1452) target = $region60
    $region59: #{_unet_convblock.3} parent=5 // pred_region
      %s1455 = ssub.s32 %s15, 2
      // Predicated region
      $region61: #{_unet_convblock.3} parent=59 // pred_check
        %p1456 = pneg %p242
      $region62: #{_unet_convblock.3} parent=59 // pred_check_branch
        %1458 = sbr.rel (%p1456) target = $region64
      $region63: #{_unet_convblock.3} parent=59 // pred_region
        %s1459 = smul.u32 8, %s27
        %p1460 = scmp.lt.s32.totalorder %s26, 1
        %s1461 = scalar_select %p1460, %s26, 1
        %p1462 = scmp.lt.s32.totalorder %s1459, 15
        %s1463 = scalar_select %p1462, %s1459, 15
        %s1464 = smul.addr %s1463, 2
        %s1465 = smul.addr %s1461, 32
        %s1466 = sadd.s32 %s1464, %s1465
        %s1467 = smul.addr %s1466, 8
        %s1468 = scalar_lea.vmem %s7, %s1467
      $region64: #{_unet_convblock.3} parent=59 // pred_fallthru
        _
      // Predicated region
      $region65: #{_unet_convblock.3} parent=59 // pred_check
        %p1469 = pneg %p270
      $region66: #{_unet_convblock.3} parent=59 // pred_check_branch
        %1471 = sbr.rel (%p1469) target = $region68
      $region67: #{_unet_convblock.3} parent=59 // pred_region
        %p1472 = scmp.lt.s32.totalorder %s26, 1
        %s1473 = scalar_select %p1472, %s26, 1
        %p1474 = scmp.lt.s32.totalorder %s27, 1
        %s1475 = scalar_select %p1474, %s27, 1
        %s1476 = smul.addr %s1473, 2
        %s1477 = sadd.s32 %s1475, %s1476
        %s1478 = smul.addr %s1477, 2
        %s1479 = scalar_lea.vmem %s8, %s1478
      $region68: #{_unet_convblock.3} parent=59 // pred_fallthru
        _
    $region60: #{_unet_convblock.3} parent=5 // pred_fallthru
      _
  $region6: #{_unet_convblock.3} parent=0 // loop_footer
    %s19 = sadd.s32 1, %s15
  $region7: #{_unet_convblock.3} parent=0 // loop_footer_branch
    %14 = sbr.rel target = $region3
  $region8: #{_unet_convblock.3} parent=0 // loop_exit
    _

// kernel: _unet_convblock.4
$region0: #{_unet_convblock.4}
  #allocation0 [shape = 'u32[]', space=smem, size = 0x4, offset = 0x4, fixed_abs, tag = 'smem constant byte address 0x4 - core index']
  #allocation1 [shape = 'u32[72,128]{1,0:T(1,128)}', space=vmem, size = 0x9000, scoped, tag = 'internal scratch']
  #allocation2 [shape = 'f32[128,8]{1,0:T(8,128)}', space=vmem, size = 0x10000, scoped, tag = 'scratch operand']
  %s0 = inlined_call_operand.vmem [shape: f32[1,8], index: 0, kind: input, shape index: {}]
  %s1 = inlined_call_operand.vmem [shape: f32[1,8], index: 1, kind: input, shape index: {}]
  %s2 = inlined_call_operand.vmem [shape: f32[3,24,8], index: 2, kind: input, shape index: {}]
  %s3 = inlined_call_operand.vmem [shape: f32[1,8], index: 3, kind: input, shape index: {}]
  %s4 = inlined_call_operand.vmem [shape: f32[2,16,16,8], index: 4, kind: input, shape index: {}, may-alias: {4,5,6}]
  %s5 = inlined_call_operand.vmem [shape: f32[2,16,16,8], index: 5, kind: input, shape index: {}, may-alias: {4,5,6}]
  %s6 = inlined_call_operand.vmem [shape: f32[2,16,16,8], index: 6, kind: input, shape index: {}, may-alias: {4,5,6}]
  %s7 = inlined_call_operand.vmem [shape: f32[2,16,16,8], index: 7, kind: output, shape index: {0}]
  %s8 = inlined_call_operand.vmem [shape: f32[2,2,2,8], index: 8, kind: output, shape index: {1}]
  %9 = xla_tuple %s7, %s8
  %s10 = sld [smem:[#allocation0]]
  $region69: #{_unet_convblock.4} parent=0
    _
  %s12 = ssub.s32 1, %s10
  %s13 = scalar_select 0, %s12, %s10
  loop: start=0, step=1, limit=6
  $region2: #{_unet_convblock.4} parent=0 // loop_pre_header
    _
  $region3: #{_unet_convblock.4} parent=0 // loop_header
    %s15 = sphi 0, %s19
    %p16 = scmp.ge.s32.totalorder %s15, 6
    %s22 = sphi 0, %s34
    %s23 = sphi 0, %s30
    %s24 = sphi 0, %s22
    %s25 = sphi 0, %s23
    %s26 = sphi 0, %s24
    %s27 = sphi 0, %s25
    %s35 = sphi 0, %s35
    %s37 = sphi 0, %s35
    %s38 = sphi 0, %s37
    %s52 = sphi 0, %s38
    %s56 = sphi 0, %s56
    %s58 = sphi 0, %s56
    %s59 = sphi 0, %s58
    %s73 = sphi 0, %s59
    %s77 = sphi 0, %s77
    %s79 = sphi 0, %s77
    %s80 = sphi 0, %s79
    %s94 = sphi 0, %s80
    %s98 = sphi 0, %s98
    %s100 = sphi 0, %s98
    %s101 = sphi 0, %s100
    %s115 = sphi 0, %s101
    %s123 = sphi 0, %s125
    %s126 = sphi 0, %s123
    %s127 = sphi 0, %s126
    %s143 = sphi 0, %s127
    %s159 = sphi 0, %s161
    %s162 = sphi 0, %s159
    %s163 = sphi 0, %s162
    %s179 = sphi 0, %s163
    %s195 = sphi 0, %s197
    %s198 = sphi 0, %s195
    %s199 = sphi 0, %s198
    %s215 = sphi 0, %s199
    %s223 = sphi 0, %s225
    %s226 = sphi 0, %s223
    %s227 = sphi 0, %s226
    %s243 = sphi 0, %s227
    %s251 = sphi 0, %s253
    %s254 = sphi 0, %s251
    %s255 = sphi 0, %s254
    %s271 = sphi 0, %s255
  $region4: #{_unet_convblock.4} parent=0 // loop_header_branch
    %18 = sbr.rel (%p16) target = $region8
  $region5: #{_unet_convblock.4} parent=0 // loop_body
    %s20 = ssub.s32 %s15, 1
    %s21 = ssub.s32 %s15, 2
    %s28 = sadd.s32 1, %s23
    %p29 = scmp.ge.s32.totalorder %s28, 2
    %s30 = scalar_select %p29, 0, %s28
    %s31 = sadd.s32 1, %s22
    %s32 = scalar_select %p29, %s31, %s22
    %p33 = scmp.ge.s32.totalorder %s32, 2
    %s34 = scalar_select %p33, 0, %s32
    %s36 = sadd.s32 %s35, 1
    %p39 = scmp.eq.s32.totalorder %s15, 3
    %p40 = scmp.ne.s32.totalorder %s35, %s37
    %p41 = scmp.eq.s32.totalorder %s15, 0
    %p42 = por %p40, %p41
    %p43 = scmp.ne.s32.totalorder %s35, %s37
    %p44 = scmp.eq.s32.totalorder %s20, 3
    %p45 = por %p43, %p44
    %p46 = scmp.ne.s32.totalorder %s37, %s38
    %p47 = scmp.eq.s32.totalorder %s20, 0
    %p48 = por %p46, %p47
    %p49 = scmp.ne.s32.totalorder %s37, %s38
    %p50 = scmp.eq.s32.totalorder %s21, 3
    %p51 = por %p49, %p50
    %p53 = scmp.ne.s32.totalorder %s38, %s52
    %p54 = scmp.eq.s32.totalorder %s21, 0
    %p55 = por %p53, %p54
    %s57 = sadd.s32 %s56, 1
    %p60 = scmp.eq.s32.totalorder %s15, 3
    %p61 = scmp.ne.s32.totalorder %s56, %s58
    %p62 = scmp.eq.s32.totalorder %s15, 0
    %p63 = por %p61, %p62
    %p64 = scmp.ne.s32.totalorder %s56, %s58
    %p65 = scmp.eq.s32.totalorder %s20, 3
    %p66 = por %p64, %p65
    %p67 = scmp.ne.s32.totalorder %s58, %s59
    %p68 = scmp.eq.s32.totalorder %s20, 0
    %p69 = por %p67, %p68
    %p70 = scmp.ne.s32.totalorder %s58, %s59
    %p71 = scmp.eq.s32.totalorder %s21, 3
    %p72 = por %p70, %p71
    %p74 = scmp.ne.s32.totalorder %s59, %s73
    %p75 = scmp.eq.s32.totalorder %s21, 0
    %p76 = por %p74, %p75
    %s78 = sadd.s32 %s77, 1
    %p81 = scmp.eq.s32.totalorder %s15, 3
    %p82 = scmp.ne.s32.totalorder %s77, %s79
    %p83 = scmp.eq.s32.totalorder %s15, 0
    %p84 = por %p82, %p83
    %p85 = scmp.ne.s32.totalorder %s77, %s79
    %p86 = scmp.eq.s32.totalorder %s20, 3
    %p87 = por %p85, %p86
    %p88 = scmp.ne.s32.totalorder %s79, %s80
    %p89 = scmp.eq.s32.totalorder %s20, 0
    %p90 = por %p88, %p89
    %p91 = scmp.ne.s32.totalorder %s79, %s80
    %p92 = scmp.eq.s32.totalorder %s21, 3
    %p93 = por %p91, %p92
    %p95 = scmp.ne.s32.totalorder %s80, %s94
    %p96 = scmp.eq.s32.totalorder %s21, 0
    %p97 = por %p95, %p96
    %s99 = sadd.s32 %s98, 1
    %p102 = scmp.eq.s32.totalorder %s15, 3
    %p103 = scmp.ne.s32.totalorder %s98, %s100
    %p104 = scmp.eq.s32.totalorder %s15, 0
    %p105 = por %p103, %p104
    %p106 = scmp.ne.s32.totalorder %s98, %s100
    %p107 = scmp.eq.s32.totalorder %s20, 3
    %p108 = por %p106, %p107
    %p109 = scmp.ne.s32.totalorder %s100, %s101
    %p110 = scmp.eq.s32.totalorder %s20, 0
    %p111 = por %p109, %p110
    %p112 = scmp.ne.s32.totalorder %s100, %s101
    %p113 = scmp.eq.s32.totalorder %s21, 3
    %p114 = por %p112, %p113
    %p116 = scmp.ne.s32.totalorder %s101, %s115
    %p117 = scmp.eq.s32.totalorder %s21, 0
    %p118 = por %p116, %p117
    %s119 = ssub.s32 %s22, %s34
    %s120 = ssub.s32 %s23, %s30
    %s121 = sor.u32 %s119, %s120
    %p122 = scmp.eq.s32.totalorder %s121, 0
    %s124 = sadd.s32 %s123, 1
    %s125 = scalar_select %p122, %s123, %s124
    %p128 = pneg %p122
    %p129 = scmp.eq.s32.totalorder %s15, 3
    %p130 = por %p128, %p129
    %p131 = scmp.ne.s32.totalorder %s123, %s126
    %p132 = scmp.eq.s32.totalorder %s15, 0
    %p133 = por %p131, %p132
    %p134 = scmp.ne.s32.totalorder %s123, %s126
    %p135 = scmp.eq.s32.totalorder %s20, 3
    %p136 = por %p134, %p135
    %p137 = scmp.ne.s32.totalorder %s126, %s127
    %p138 = scmp.eq.s32.totalorder %s20, 0
    %p139 = por %p137, %p138
    %p140 = scmp.ne.s32.totalorder %s126, %s127
    %p141 = scmp.eq.s32.totalorder %s21, 3
    %p142 = por %p140, %p141
    %p144 = scmp.ne.s32.totalorder %s127, %s143
    %p145 = scmp.eq.s32.totalorder %s21, 0
    %p146 = por %p144, %p145
    %s147 = smul.u32 %s23, 8
    %s148 = ssub.s32 %s147, 1
    %p149 = scmp.gt.s32.totalorder %s148, 0
    %s150 = scalar_select %p149, %s148, 0
    %s151 = smul.u32 %s30, 8
    %s152 = ssub.s32 %s151, 1
    %p153 = scmp.gt.s32.totalorder %s152, 0
    %s154 = scalar_select %p153, %s152, 0
    %s155 = ssub.s32 %s22, %s34
    %s156 = ssub.s32 %s150, %s154
    %s157 = sor.u32 %s155, %s156
    %p158 = scmp.eq.s32.totalorder %s157, 0
    %s160 = sadd.s32 %s159, 1
    %s161 = scalar_select %p158, %s159, %s160
    %p164 = pneg %p158
    %p165 = scmp.eq.s32.totalorder %s15, 3
    %p166 = por %p164, %p165
    %p167 = scmp.ne.s32.totalorder %s159, %s162
    %p168 = scmp.eq.s32.totalorder %s15, 0
    %p169 = por %p167, %p168
    %p170 = scmp.ne.s32.totalorder %s159, %s162
    %p171 = scmp.eq.s32.totalorder %s20, 3
    %p172 = por %p170, %p171
    %p173 = scmp.ne.s32.totalorder %s162, %s163
    %p174 = scmp.eq.s32.totalorder %s20, 0
    %p175 = por %p173, %p174
    %p176 = scmp.ne.s32.totalorder %s162, %s163
    %p177 = scmp.eq.s32.totalorder %s21, 3
    %p178 = por %p176, %p177
    %p180 = scmp.ne.s32.totalorder %s163, %s179
    %p181 = scmp.eq.s32.totalorder %s21, 0
    %p182 = por %p180, %p181
    %s183 = sadd.s32 %s23, 1
    %s184 = smul.u32 %s183, 8
    %p185 = scmp.lt.s32.totalorder %s184, 15
    %s186 = scalar_select %p185, %s184, 15
    %s187 = sadd.s32 %s30, 1
    %s188 = smul.u32 %s187, 8
    %p189 = scmp.lt.s32.totalorder %s188, 15
    %s190 = scalar_select %p189, %s188, 15
    %s191 = ssub.s32 %s22, %s34
    %s192 = ssub.s32 %s186, %s190
    %s193 = sor.u32 %s191, %s192
    %p194 = scmp.eq.s32.totalorder %s193, 0
    %s196 = sadd.s32 %s195, 1
    %s197 = scalar_select %p194, %s195, %s196
    %p200 = pneg %p194
    %p201 = scmp.eq.s32.totalorder %s15, 3
    %p202 = por %p200, %p201
    %p203 = scmp.ne.s32.totalorder %s195, %s198
    %p204 = scmp.eq.s32.totalorder %s15, 0
    %p205 = por %p203, %p204
    %p206 = scmp.ne.s32.totalorder %s195, %s198
    %p207 = scmp.eq.s32.totalorder %s20, 3
    %p208 = por %p206, %p207
    %p209 = scmp.ne.s32.totalorder %s198, %s199
    %p210 = scmp.eq.s32.totalorder %s20, 0
    %p211 = por %p209, %p210
    %p212 = scmp.ne.s32.totalorder %s198, %s199
    %p213 = scmp.eq.s32.totalorder %s21, 3
    %p214 = por %p212, %p213
    %p216 = scmp.ne.s32.totalorder %s199, %s215
    %p217 = scmp.eq.s32.totalorder %s21, 0
    %p218 = por %p216, %p217
    %s219 = ssub.s32 %s22, %s34
    %s220 = ssub.s32 %s23, %s30
    %s221 = sor.u32 %s219, %s220
    %p222 = scmp.eq.s32.totalorder %s221, 0
    %s224 = sadd.s32 %s223, 1
    %s225 = scalar_select %p222, %s223, %s224
    %p228 = pneg %p222
    %p229 = scmp.eq.s32.totalorder %s15, 3
    %p230 = por %p228, %p229
    %p231 = scmp.ne.s32.totalorder %s223, %s226
    %p232 = scmp.eq.s32.totalorder %s15, 0
    %p233 = por %p231, %p232
    %p234 = scmp.ne.s32.totalorder %s223, %s226
    %p235 = scmp.eq.s32.totalorder %s20, 3
    %p236 = por %p234, %p235
    %p237 = scmp.ne.s32.totalorder %s226, %s227
    %p238 = scmp.eq.s32.totalorder %s20, 0
    %p239 = por %p237, %p238
    %p240 = scmp.ne.s32.totalorder %s226, %s227
    %p241 = scmp.eq.s32.totalorder %s21, 3
    %p242 = por %p240, %p241
    %p244 = scmp.ne.s32.totalorder %s227, %s243
    %p245 = scmp.eq.s32.totalorder %s21, 0
    %p246 = por %p244, %p245
    %s247 = ssub.s32 %s22, %s34
    %s248 = ssub.s32 %s23, %s30
    %s249 = sor.u32 %s247, %s248
    %p250 = scmp.eq.s32.totalorder %s249, 0
    %s252 = sadd.s32 %s251, 1
    %s253 = scalar_select %p250, %s251, %s252
    %p256 = pneg %p250
    %p257 = scmp.eq.s32.totalorder %s15, 3
    %p258 = por %p256, %p257
    %p259 = scmp.ne.s32.totalorder %s251, %s254
    %p260 = scmp.eq.s32.totalorder %s15, 0
    %p261 = por %p259, %p260
    %p262 = scmp.ne.s32.totalorder %s251, %s254
    %p263 = scmp.eq.s32.totalorder %s20, 3
    %p264 = por %p262, %p263
    %p265 = scmp.ne.s32.totalorder %s254, %s255
    %p266 = scmp.eq.s32.totalorder %s20, 0
    %p267 = por %p265, %p266
    %p268 = scmp.ne.s32.totalorder %s254, %s255
    %p269 = scmp.eq.s32.totalorder %s21, 3
    %p270 = por %p268, %p269
    %p272 = scmp.ne.s32.totalorder %s255, %s271
    %p273 = scmp.eq.s32.totalorder %s21, 0
    %p274 = por %p272, %p273
    %p275 = scmp.le.s32.totalorder 1, %s15
    %p276 = scmp.lt.s32.totalorder %s15, 5
    %p277 = pnand %p275, %p276
    %p278 = pneg %p277
    // Predicated region
    $region9: #{_unet_convblock.4} parent=5 // pred_check
      _
    $region10: #{_unet_convblock.4} parent=5 // pred_check_branch
      %280 = sbr.rel (%p277) target = $region12
    $region11: #{_unet_convblock.4} parent=5 // pred_region
      %s281 = ssub.s32 %s15, 1
      // Predicated region
      $region13: #{_unet_convblock.4} parent=11 // pred_check
        %p282 = pneg %p48
      $region14: #{_unet_convblock.4} parent=11 // pred_check_branch
        %284 = sbr.rel (%p282) target = $region16
      $region15: #{_unet_convblock.4} parent=11 // pred_region
        _
      $region16: #{_unet_convblock.4} parent=11 // pred_fallthru
        _
      // Predicated region
      $region17: #{_unet_convblock.4} parent=11 // pred_check
        %p285 = pneg %p69
      $region18: #{_unet_convblock.4} parent=11 // pred_check_branch
        %287 = sbr.rel (%p285) target = $region20
      $region19: #{_unet_convblock.4} parent=11 // pred_region
        _
      $region20: #{_unet_convblock.4} parent=11 // pred_fallthru
        _
      // Predicated region
      $region21: #{_unet_convblock.4} parent=11 // pred_check
        %p288 = pneg %p90
      $region22: #{_unet_convblock.4} parent=11 // pred_check_branch
        %290 = sbr.rel (%p288) target = $region24
      $region23: #{_unet_convblock.4} parent=11 // pred_region
        _
      $region24: #{_unet_convblock.4} parent=11 // pred_fallthru
        _
      // Predicated region
      $region25: #{_unet_convblock.4} parent=11 // pred_check
        %p291 = pneg %p111
      $region26: #{_unet_convblock.4} parent=11 // pred_check_branch
        %293 = sbr.rel (%p291) target = $region28
      $region27: #{_unet_convblock.4} parent=11 // pred_region
        _
      $region28: #{_unet_convblock.4} parent=11 // pred_fallthru
        _
    $region12: #{_unet_convblock.4} parent=5 // pred_fallthru
      _
    %p294 = scmp.lt.s32.totalorder %s15, 4
    // Predicated region
    $region29: #{_unet_convblock.4} parent=5 // pred_check
      %p295 = pneg %p294
    $region30: #{_unet_convblock.4} parent=5 // pred_check_branch
      %297 = sbr.rel (%p295) target = $region32
    $region31: #{_unet_convblock.4} parent=5 // pred_region
      // Predicated region
      $region33: #{_unet_convblock.4} parent=31 // pred_check
        %p298 = pneg %p133
      $region34: #{_unet_convblock.4} parent=31 // pred_check_branch
        %300 = sbr.rel (%p298) target = $region36
      $region35: #{_unet_convblock.4} parent=31 // pred_region
        %s301 = smul.u32 8, %s23
        %p302 = scmp.lt.s32.totalorder %s22, 1
        %s303 = scalar_select %p302, %s22, 1
        %p304 = scmp.lt.s32.totalorder %s301, 15
        %s305 = scalar_select %p304, %s301, 15
        %s306 = smul.addr %s305, 2
        %s307 = smul.addr %s303, 32
        %s308 = sadd.s32 %s306, %s307
        %s309 = smul.addr %s308, 8
        %s310 = scalar_lea.vmem %s4, %s309
        %s311 = smul.u32 8, %s23
      $region36: #{_unet_convblock.4} parent=31 // pred_fallthru
        _
      // Predicated region
      $region37: #{_unet_convblock.4} parent=31 // pred_check
        %p312 = pneg %p169
      $region38: #{_unet_convblock.4} parent=31 // pred_check_branch
        %314 = sbr.rel (%p312) target = $region40
      $region39: #{_unet_convblock.4} parent=31 // pred_region
        %s315 = smul.u32 %s23, 8
        %s316 = ssub.s32 %s315, 1
        %p317 = scmp.gt.s32.totalorder %s316, 0
        %s318 = scalar_select %p317, %s316, 0
        %p319 = scmp.lt.s32.totalorder %s22, 1
        %s320 = scalar_select %p319, %s22, 1
        %p321 = scmp.lt.s32.totalorder %s318, 15
        %s322 = scalar_select %p321, %s318, 15
        %s323 = smul.addr %s322, 2
        %s324 = smul.addr %s320, 32
        %s325 = sadd.s32 %s323, %s324
        %s326 = smul.addr %s325, 8
        %s327 = scalar_lea.vmem %s5, %s326
        %s328 = smul.u32 %s23, 8
        %s329 = ssub.s32 %s328, 1
        %p330 = scmp.gt.s32.totalorder %s329, 0
        %s331 = scalar_select %p330, %s329, 0
      $region40: #{_unet_convblock.4} parent=31 // pred_fallthru
        _
      // Predicated region
      $region41: #{_unet_convblock.4} parent=31 // pred_check
        %p332 = pneg %p205
      $region42: #{_unet_convblock.4} parent=31 // pred_check_branch
        %334 = sbr.rel (%p332) target = $region44
      $region43: #{_unet_convblock.4} parent=31 // pred_region
        %s335 = sadd.s32 %s23, 1
        %s336 = smul.u32 %s335, 8
        %p337 = scmp.lt.s32.totalorder %s336, 15
        %s338 = scalar_select %p337, %s336, 15
        %p339 = scmp.lt.s32.totalorder %s22, 1
        %s340 = scalar_select %p339, %s22, 1
        %p341 = scmp.lt.s32.totalorder %s338, 15
        %s342 = scalar_select %p341, %s338, 15
        %s343 = smul.addr %s342, 2
        %s344 = smul.addr %s340, 32
        %s345 = sadd.s32 %s343, %s344
        %s346 = smul.addr %s345, 8
        %s347 = scalar_lea.vmem %s6, %s346
        %s348 = sadd.s32 %s23, 1
        %s349 = smul.u32 %s348, 8
        %p350 = scmp.lt.s32.totalorder %s349, 15
        %s351 = scalar_select %p350, %s349, 15
      $region44: #{_unet_convblock.4} parent=31 // pred_fallthru
        _
    $region32: #{_unet_convblock.4} parent=5 // pred_fallthru
      _
    %p352 = scmp.le.s32.totalorder 1, %s15
    %p353 = scmp.lt.s32.totalorder %s15, 5
    %p354 = pnand %p352, %p353
    %p355 = pneg %p354
    // Predicated region
    $region45: #{_unet_convblock.4} parent=5 // pred_check
      _
    $region46: #{_unet_convblock.4} parent=5 // pred_check_branch
      %357 = sbr.rel (%p354) target = $region48
    $region47: #{_unet_convblock.4} parent=5 // pred_region
      %s358 = ssub.s32 %s15, 1
      %p359 = pneg %p48
      %p360 = pneg %p45
      %p361 = pneg %p69
      %p362 = pneg %p66
      %p363 = pneg %p90
      %p364 = pneg %p87
      %p365 = pneg %p111
      %p366 = pneg %p108
      %s367 = smul.u32 8, %s25
      %p368 = scmp.lt.s32.totalorder %s24, 1
      %s369 = scalar_select %p368, %s24, 1
      %p370 = scmp.lt.s32.totalorder %s367, 15
      %s371 = scalar_select %p370, %s367, 15
      %s372 = smul.addr %s371, 2
      %s373 = smul.addr %s369, 32
      %s374 = sadd.s32 %s372, %s373
      %s375 = smul.addr %s374, 8
      %s376 = scalar_lea.vmem %s4, %s375
      %p377 = pneg %p139
      %p378 = pneg %p136
      %s379 = smul.u32 %s25, 8
      %s380 = ssub.s32 %s379, 1
      %p381 = scmp.gt.s32.totalorder %s380, 0
      %s382 = scalar_select %p381, %s380, 0
      %p383 = scmp.lt.s32.totalorder %s24, 1
      %s384 = scalar_select %p383, %s24, 1
      %p385 = scmp.lt.s32.totalorder %s382, 15
      %s386 = scalar_select %p385, %s382, 15
      %s387 = smul.addr %s386, 2
      %s388 = smul.addr %s384, 32
      %s389 = sadd.s32 %s387, %s388
      %s390 = smul.addr %s389, 8
      %s391 = scalar_lea.vmem %s5, %s390
      %p392 = pneg %p175
      %p393 = pneg %p172
      %s394 = sadd.s32 %s25, 1
      %s395 = smul.u32 %s394, 8
      %p396 = scmp.lt.s32.totalorder %s395, 15
      %s397 = scalar_select %p396, %s395, 15
      %p398 = scmp.lt.s32.totalorder %s24, 1
      %s399 = scalar_select %p398, %s24, 1
      %p400 = scmp.lt.s32.totalorder %s397, 15
      %s401 = scalar_select %p400, %s397, 15
      %s402 = smul.addr %s401, 2
      %s403 = smul.addr %s399, 32
      %s404 = sadd.s32 %s402, %s403
      %s405 = smul.addr %s404, 8
      %s406 = scalar_lea.vmem %s6, %s405
      %p407 = pneg %p211
      %p408 = pneg %p208
      %p409 = pneg %p239
      %p410 = pneg %p236
      %s411 = smul.u32 8, %s25
      %p412 = scmp.lt.s32.totalorder %s24, 1
      %s413 = scalar_select %p412, %s24, 1
      %p414 = scmp.lt.s32.totalorder %s411, 15
      %s415 = scalar_select %p414, %s411, 15
      %s416 = smul.addr %s415, 2
      %s417 = smul.addr %s413, 32
      %s418 = sadd.s32 %s416, %s417
      %s419 = smul.addr %s418, 8
      %s420 = scalar_lea.vmem %s7, %s419
      %p421 = pneg %p267
      %p422 = pneg %p264
      %p423 = scmp.lt.s32.totalorder %s24, 1
      %s424 = scalar_select %p423, %s24, 1
      %p425 = scmp.lt.s32.totalorder %s25, 1
      %s426 = scalar_select %p425, %s25, 1
      %s427 = smul.addr %s424, 2
      %s428 = sadd.s32 %s426, %s427
      %s429 = smul.addr %s428, 2
      %s430 = scalar_lea.vmem %s8, %s429
      %s431 = smul.u32 8, %s25
      %p432 = scmp.lt.s32.totalorder %s24, 1
      %s433 = scalar_select %p432, %s24, 1
      %p434 = scmp.lt.s32.totalorder %s431, 15
      %s435 = scalar_select %p434, %s431, 15
      %s436 = smul.addr %s435, 2
      %s437 = smul.addr %s433, 32
      %s438 = sadd.s32 %s436, %s437
      %s439 = smul.addr %s438, 8
      %s440 = scalar_lea.vmem %s4, %s439
      %s441 = smul.u32 8, %s25
      %s442 = smul.u32 %s25, 8
      %s443 = ssub.s32 %s442, 1
      %p444 = scmp.gt.s32.totalorder %s443, 0
      %s445 = scalar_select %p444, %s443, 0
      %p446 = scmp.lt.s32.totalorder %s24, 1
      %s447 = scalar_select %p446, %s24, 1
      %p448 = scmp.lt.s32.totalorder %s445, 15
      %s449 = scalar_select %p448, %s445, 15
      %s450 = smul.addr %s449, 2
      %s451 = smul.addr %s447, 32
      %s452 = sadd.s32 %s450, %s451
      %s453 = smul.addr %s452, 8
      %s454 = scalar_lea.vmem %s5, %s453
      %s455 = smul.u32 %s25, 8
      %s456 = ssub.s32 %s455, 1
      %p457 = scmp.gt.s32.totalorder %s456, 0
      %s458 = scalar_select %p457, %s456, 0
      %s459 = sadd.s32 %s25, 1
      %s460 = smul.u32 %s459, 8
      %p461 = scmp.lt.s32.totalorder %s460, 15
      %s462 = scalar_select %p461, %s460, 15
      %p463 = scmp.lt.s32.totalorder %s24, 1
      %s464 = scalar_select %p463, %s24, 1
      %p465 = scmp.lt.s32.totalorder %s462, 15
      %s466 = scalar_select %p465, %s462, 15
      %s467 = smul.addr %s466, 2
      %s468 = smul.addr %s464, 32
      %s469 = sadd.s32 %s467, %s468
      %s470 = smul.addr %s469, 8
      %s471 = scalar_lea.vmem %s6, %s470
      %s472 = sadd.s32 %s25, 1
      %s473 = smul.u32 %s472, 8
      %p474 = scmp.lt.s32.totalorder %s473, 15
      %s475 = scalar_select %p474, %s473, 15
      %s476 = smul.u32 8, %s25
      %p477 = scmp.lt.s32.totalorder %s24, 1
      %s478 = scalar_select %p477, %s24, 1
      %p479 = scmp.lt.s32.totalorder %s476, 15
      %s480 = scalar_select %p479, %s476, 15
      %s481 = smul.addr %s480, 2
      %s482 = smul.addr %s478, 32
      %s483 = sadd.s32 %s481, %s482
      %s484 = smul.addr %s483, 8
      %s485 = scalar_lea.vmem %s7, %s484
      %s486 = smul.u32 8, %s25
      %p487 = scmp.lt.s32.totalorder %s24, 1
      %s488 = scalar_select %p487, %s24, 1
      %p489 = scmp.lt.s32.totalorder %s25, 1
      %s490 = scalar_select %p489, %s25, 1
      %s491 = smul.addr %s488, 2
      %s492 = sadd.s32 %s490, %s491
      %s493 = smul.addr %s492, 2
      %s494 = scalar_lea.vmem %s8, %s493
      %v495 = vld [vmem:[%s0] sm:$0x1]
      %v496 = vld [vmem:[%s1] sm:$0x1]
      %v497 = vld [vmem:[%s454] sm:$0xff]
      %v498 = vld [vmem:[%s454 + $0x8] sm:$0xff]
      %v500 = vperm.slane %v495, 0
      %v502 = vmul.f32 %v497, %v500
      %v503 = vmul.f32 %v498, %v500
      %v505 = vperm.slane %v496, 0
      %v507 = vadd.f32 %v502, %v505
      %v508 = vadd.f32 %v503, %v505
      %v509 = vld [vmem:[%s440] sm:$0xff]
      %v510 = vld [vmem:[%s440 + $0x8] sm:$0xff]
      %v511 = vld [vmem:[%s440 + $0x10] sm:$0xff]
      %v512 = vld [vmem:[%s440 + $0x18] sm:$0xff]
      %v513 = vld [vmem:[%s440 + $0x20] sm:$0xff]
      %v514 = vld [vmem:[%s440 + $0x28] sm:$0xff]
      %v515 = vld [vmem:[%s440 + $0x30] sm:$0xff]
      %v516 = vld [vmem:[%s440 + $0x38] sm:$0xff]
      %v517 = vld [vmem:[%s440 + $0x40] sm:$0xff]
      %v518 = vld [vmem:[%s440 + $0x48] sm:$0xff]
      %v519 = vld [vmem:[%s440 + $0x50] sm:$0xff]
      %v520 = vld [vmem:[%s440 + $0x58] sm:$0xff]
      %v521 = vld [vmem:[%s440 + $0x60] sm:$0xff]
      %v522 = vld [vmem:[%s440 + $0x68] sm:$0xff]
      %v523 = vld [vmem:[%s440 + $0x70] sm:$0xff]
      %v524 = vld [vmem:[%s440 + $0x78] sm:$0xff]
      %v525 = vmul.f32 %v509, %v500
      %v526 = vmul.f32 %v510, %v500
      %v527 = vmul.f32 %v511, %v500
      %v528 = vmul.f32 %v512, %v500
      %v529 = vmul.f32 %v513, %v500
      %v530 = vmul.f32 %v514, %v500
      %v531 = vmul.f32 %v515, %v500
      %v532 = vmul.f32 %v516, %v500
      %v533 = vmul.f32 %v517, %v500
      %v534 = vmul.f32 %v518, %v500
      %v535 = vmul.f32 %v519, %v500
      %v536 = vmul.f32 %v520, %v500
      %v537 = vmul.f32 %v521, %v500
      %v538 = vmul.f32 %v522, %v500
      %v539 = vmul.f32 %v523, %v500
      %v540 = vmul.f32 %v524, %v500
      %v541 = vadd.f32 %v525, %v505
      %v542 = vadd.f32 %v526, %v505
      %v543 = vadd.f32 %v527, %v505
      %v544 = vadd.f32 %v528, %v505
      %v545 = vadd.f32 %v529, %v505
      %v546 = vadd.f32 %v530, %v505
      %v547 = vadd.f32 %v531, %v505
      %v548 = vadd.f32 %v532, %v505
      %v549 = vadd.f32 %v533, %v505
      %v550 = vadd.f32 %v534, %v505
      %v551 = vadd.f32 %v535, %v505
      %v552 = vadd.f32 %v536, %v505
      %v553 = vadd.f32 %v537, %v505
      %v554 = vadd.f32 %v538, %v505
      %v555 = vadd.f32 %v539, %v505
      %v556 = vadd.f32 %v540, %v505
      %v557 = vld [vmem:[%s471] sm:$0xff]
      %v558 = vld [vmem:[%s471 + $0x8] sm:$0xff]
      %v559 = vmul.f32 %v557, %v500
      %v560 = vmul.f32 %v558, %v500
      %v561 = vadd.f32 %v559, %v505
      %v562 = vadd.f32 %v560, %v505
      %p563 = scmp.gt.s32.totalorder %s25, 0
      %s564 = scalar_select %p563, 1, 0
      %v565 = vstv %s564
      %vm566 = vcmp.eq.s32.totalorder %v565, 1
      %v567 = vsel %vm566, %v507, 0.0
      %v568 = vsel %vm566, %v508, 0.0
      %p569 = scmp.lt.s32.totalorder %s25, 1
      %s570 = scalar_select %p569, 1, 0
      %v571 = vstv %s570
      %vm572 = vcmp.eq.s32.totalorder %v571, 1
      %v573 = vsel %vm572, %v561, 0.0
      %v574 = vsel %vm572, %v562, 0.0
      %vm595 = vcmask 1040384
      %v596 = vrot.slane %v567, 7
      %v597 = vrot.slane %v568, 7
      %v598 = vsel %vm595, %v596, %v597
      %v599 = vrot.slane %v541, 7
      %v600 = vrot.slane %v542, 7
      %v601 = vsel %vm595, %v599, %v600
      %v602 = vrot.slane %v543, 7
      %v603 = vrot.slane %v544, 7
      %v604 = vsel %vm595, %v602, %v603
      %v605 = vrot.slane %v545, 7
      %v606 = vrot.slane %v546, 7
      %v607 = vsel %vm595, %v605, %v606
      %v608 = vrot.slane %v547, 7
      %v609 = vrot.slane %v548, 7
      %v610 = vsel %vm595, %v608, %v609
      %v611 = vrot.slane %v549, 7
      %v612 = vrot.slane %v550, 7
      %v613 = vsel %vm595, %v611, %v612
      %v614 = vrot.slane %v551, 7
      %v615 = vrot.slane %v552, 7
      %v616 = vsel %vm595, %v614, %v615
      %v617 = vrot.slane %v553, 7
      %v618 = vrot.slane %v554, 7
      %v619 = vsel %vm595, %v617, %v618
      %v620 = vrot.slane %v555, 7
      %v621 = vrot.slane %v556, 7
      %v622 = vsel %vm595, %v620, %v621
      %v623 = vrot.slane %v573, 7
      %v624 = vrot.slane %v574, 7
      %v625 = vsel %vm595, %v623, %v624
      %v646 = vsel %vm595, 0.0, %v596
      %v647 = vsel %vm595, 0.0, %v599
      %v648 = vsel %vm595, 0.0, %v602
      %v649 = vsel %vm595, 0.0, %v605
      %v650 = vsel %vm595, 0.0, %v608
      %v651 = vsel %vm595, 0.0, %v611
      %v652 = vsel %vm595, 0.0, %v614
      %v653 = vsel %vm595, 0.0, %v617
      %v654 = vsel %vm595, 0.0, %v620
      %v655 = vsel %vm595, 0.0, %v623
      %vm656 = vcmask 1046528
      %v657 = vrot.slane %v567, 1
      %v658 = vrot.slane %v568, 1
      %v659 = vsel %vm656, %v657, %v658
      %v660 = vrot.slane %v541, 1
      %v661 = vrot.slane %v542, 1
      %v662 = vsel %vm656, %v660, %v661
      %v663 = vrot.slane %v543, 1
      %v664 = vrot.slane %v544, 1
      %v665 = vsel %vm656, %v663, %v664
      %v666 = vrot.slane %v545, 1
      %v667 = vrot.slane %v546, 1
      %v668 = vsel %vm656, %v666, %v667
      %v669 = vrot.slane %v547, 1
      %v670 = vrot.slane %v548, 1
      %v671 = vsel %vm656, %v669, %v670
      %v672 = vrot.slane %v549, 1
      %v673 = vrot.slane %v550, 1
      %v674 = vsel %vm656, %v672, %v673
      %v675 = vrot.slane %v551, 1
      %v676 = vrot.slane %v552, 1
      %v677 = vsel %vm656, %v675, %v676
      %v678 = vrot.slane %v553, 1
      %v679 = vrot.slane %v554, 1
      %v680 = vsel %vm656, %v678, %v679
      %v681 = vrot.slane %v555, 1
      %v682 = vrot.slane %v556, 1
      %v683 = vsel %vm656, %v681, %v682
      %v684 = vrot.slane %v573, 1
      %v685 = vrot.slane %v574, 1
      %v686 = vsel %vm656, %v684, %v685
      %v697 = vsel %vm656, %v658, 0.0
      %v698 = vsel %vm656, %v661, 0.0
      %v699 = vsel %vm656, %v664, 0.0
      %v700 = vsel %vm656, %v667, 0.0
      %v701 = vsel %vm656, %v670, 0.0
      %v702 = vsel %vm656, %v673, 0.0
      %v703 = vsel %vm656, %v676, 0.0
      %v704 = vsel %vm656, %v679, 0.0
      %v705 = vsel %vm656, %v682, 0.0
      %v706 = vsel %vm656, %v685, 0.0
      %707 = vrot.lane.b32.xlu0 %v567, 8
      %v708 = vpop.permute.xlu0 %707
      %709 = vrot.lane.b32.xlu0 %v568, 8
      %v710 = vpop.permute.xlu0 %709
      %711 = vrot.lane.b32.xlu0 %v541, 8
      %v712 = vpop.permute.xlu0 %711
      %713 = vrot.lane.b32.xlu0 %v542, 8
      %v714 = vpop.permute.xlu0 %713
      %715 = vrot.lane.b32.xlu0 %v543, 8
      %v716 = vpop.permute.xlu0 %715
      %717 = vrot.lane.b32.xlu0 %v544, 8
      %v718 = vpop.permute.xlu0 %717
      %719 = vrot.lane.b32.xlu0 %v545, 8
      %v720 = vpop.permute.xlu0 %719
      %721 = vrot.lane.b32.xlu0 %v546, 8
      %v722 = vpop.permute.xlu0 %721
      %723 = vrot.lane.b32.xlu0 %v547, 8
      %v724 = vpop.permute.xlu0 %723
      %725 = vrot.lane.b32.xlu0 %v548, 8
      %v726 = vpop.permute.xlu0 %725
      %727 = vrot.lane.b32.xlu0 %v549, 8
      %v728 = vpop.permute.xlu0 %727
      %729 = vrot.lane.b32.xlu0 %v550, 8
      %v730 = vpop.permute.xlu0 %729
      %731 = vrot.lane.b32.xlu0 %v551, 8
      %v732 = vpop.permute.xlu0 %731
      %733 = vrot.lane.b32.xlu0 %v552, 8
      %v734 = vpop.permute.xlu0 %733
      %735 = vrot.lane.b32.xlu0 %v553, 8
      %v736 = vpop.permute.xlu0 %735
      %737 = vrot.lane.b32.xlu0 %v554, 8
      %v738 = vpop.permute.xlu0 %737
      %739 = vrot.lane.b32.xlu0 %v555, 8
      %v740 = vpop.permute.xlu0 %739
      %741 = vrot.lane.b32.xlu0 %v556, 8
      %v742 = vpop.permute.xlu0 %741
      %743 = vrot.lane.b32.xlu0 %v573, 8
      %v744 = vpop.permute.xlu0 %743
      %745 = vrot.lane.b32.xlu0 %v574, 8
      %v746 = vpop.permute.xlu0 %745
      %777 = vrot.lane.b32.xlu0 %v659, 16
      %v778 = vpop.permute.xlu0 %777
      %779 = vrot.lane.b32.xlu0 %v697, 16
      %v780 = vpop.permute.xlu0 %779
      %781 = vrot.lane.b32.xlu0 %v662, 16
      %v782 = vpop.permute.xlu0 %781
      %783 = vrot.lane.b32.xlu0 %v698, 16
      %v784 = vpop.permute.xlu0 %783
      %785 = vrot.lane.b32.xlu0 %v665, 16
      %v786 = vpop.permute.xlu0 %785
      %787 = vrot.lane.b32.xlu0 %v699, 16
      %v788 = vpop.permute.xlu0 %787
      %789 = vrot.lane.b32.xlu0 %v668, 16
      %v790 = vpop.permute.xlu0 %789
      %791 = vrot.lane.b32.xlu0 %v700, 16
      %v792 = vpop.permute.xlu0 %791
      %793 = vrot.lane.b32.xlu0 %v671, 16
      %v794 = vpop.permute.xlu0 %793
      %795 = vrot.lane.b32.xlu0 %v701, 16
      %v796 = vpop.permute.xlu0 %795
      %797 = vrot.lane.b32.xlu0 %v674, 16
      %v798 = vpop.permute.xlu0 %797
      %799 = vrot.lane.b32.xlu0 %v702, 16
      %v800 = vpop.permute.xlu0 %799
      %801 = vrot.lane.b32.xlu0 %v677, 16
      %v802 = vpop.permute.xlu0 %801
      %803 = vrot.lane.b32.xlu0 %v703, 16
      %v804 = vpop.permute.xlu0 %803
      %805 = vrot.lane.b32.xlu0 %v680, 16
      %v806 = vpop.permute.xlu0 %805
      %807 = vrot.lane.b32.xlu0 %v704, 16
      %v808 = vpop.permute.xlu0 %807
      %809 = vrot.lane.b32.xlu0 %v683, 16
      %v810 = vpop.permute.xlu0 %809
      %811 = vrot.lane.b32.xlu0 %v705, 16
      %v812 = vpop.permute.xlu0 %811
      %813 = vrot.lane.b32.xlu0 %v686, 16
      %v814 = vpop.permute.xlu0 %813
      %815 = vrot.lane.b32.xlu0 %v706, 16
      %v816 = vpop.permute.xlu0 %815
      %vm837 = vcmask 64512
      %v838 = vsel %vm837, %v646, %v708
      %v839 = vsel %vm837, %v598, %v710
      %v840 = vsel %vm837, %v647, %v712
      %v841 = vsel %vm837, %v601, %v714
      %v842 = vsel %vm837, %v648, %v716
      %v843 = vsel %vm837, %v604, %v718
      %v844 = vsel %vm837, %v649, %v720
      %v845 = vsel %vm837, %v607, %v722
      %v846 = vsel %vm837, %v650, %v724
      %v847 = vsel %vm837, %v610, %v726
      %v848 = vsel %vm837, %v651, %v728
      %v849 = vsel %vm837, %v613, %v730
      %v850 = vsel %vm837, %v652, %v732
      %v851 = vsel %vm837, %v616, %v734
      %v852 = vsel %vm837, %v653, %v736
      %v853 = vsel %vm837, %v619, %v738
      %v854 = vsel %vm837, %v654, %v740
      %v855 = vsel %vm837, %v622, %v742
      %v856 = vsel %vm837, %v655, %v744
      %v857 = vsel %vm837, %v625, %v746
      %vm858 = vcmask 130048
      %v859 = vsel %vm858, %v838, %v778
      %v860 = vsel %vm858, %v839, %v780
      %v861 = vsel %vm858, %v840, %v782
      %v862 = vsel %vm858, %v841, %v784
      %v863 = vsel %vm858, %v842, %v786
      %v864 = vsel %vm858, %v843, %v788
      %v865 = vsel %vm858, %v844, %v790
      %v866 = vsel %vm858, %v845, %v792
      %v867 = vsel %vm858, %v846, %v794
      %v868 = vsel %vm858, %v847, %v796
      %v869 = vsel %vm858, %v848, %v798
      %v870 = vsel %vm858, %v849, %v800
      %v871 = vsel %vm858, %v850, %v802
      %v872 = vsel %vm858, %v851, %v804
      %v873 = vsel %vm858, %v852, %v806
      %v874 = vsel %vm858, %v853, %v808
      %v875 = vsel %vm858, %v854, %v810
      %v876 = vsel %vm858, %v855, %v812
      %v877 = vsel %vm858, %v856, %v814
      %v878 = vsel %vm858, %v857, %v816
      %v879 = vld [vmem:[%s2] sm:$0xff]
      %v880 = vld [vmem:[%s2 + $0x8] sm:$0xff]
      %v881 = vld [vmem:[%s2 + $0x10] sm:$0xff]
      %vm882 = vcmask 195584
      %v884 = vsel %vm882, %v859, 0
      %v887 = vsel %vm882, %v860, 0
      %v890 = vsel %vm882, %v861, 0
      %v893 = vsel %vm882, %v862, 0
      %v896 = vsel %vm882, %v863, 0
      %v899 = vsel %vm882, %v864, 0
      %v902 = vsel %vm882, %v865, 0
      %v905 = vsel %vm882, %v866, 0
      %v908 = vsel %vm882, %v867, 0
      %v911 = vsel %vm882, %v868, 0
      %v914 = vsel %vm882, %v869, 0
      %v917 = vsel %vm882, %v870, 0
      %v920 = vsel %vm882, %v871, 0
      %v923 = vsel %vm882, %v872, 0
      %v926 = vsel %vm882, %v873, 0
      %v929 = vsel %vm882, %v874, 0
      %931 = vmatpush.msra.mxu0 0.0
      %932 = vmatpush.msra.mxu0 0.0
      %933 = vmatpush.msra.mxu0 0.0
      %934 = vmatpush.msra.mxu0 0.0
      %935 = vmatpush.msra.mxu0 0.0
      %936 = vmatpush.msra.mxu0 0.0
      %937 = vmatpush.msra.mxu0 0.0
      %938 = vmatpush.msra.mxu0 0.0
      %939 = vmatpush.msra.mxu0 0.0
      %940 = vmatpush.msra.mxu0 0.0
      %941 = vmatpush.msra.mxu0 0.0
      %942 = vmatpush.msra.mxu0 0.0
      %943 = vmatpush.msra.mxu0 0.0
      %944 = vmatpush.msra.mxu0 %v881
      %945 = vmatpush.msra.mxu0 %v880
      %946 = vmatpush.msra.mxu0 %v879
      %947 = vmatmul.f32.gmra.mxu0 %v884
      %v948 = vpop.f32.mrf.mxu0
      %v949 = vadd.f32 0.0, %v948
      %950 = vmatmul.f32.gmra.mxu0 %v887
      %v951 = vpop.f32.mrf.mxu0
      %v952 = vadd.f32 0.0, %v951
      %953 = vmatmul.f32.gmra.mxu0 %v890
      %v954 = vpop.f32.mrf.mxu0
      %v955 = vadd.f32 0.0, %v954
      %956 = vmatmul.f32.gmra.mxu0 %v893
      %v957 = vpop.f32.mrf.mxu0
      %v958 = vadd.f32 0.0, %v957
      %959 = vmatmul.f32.gmra.mxu0 %v896
      %v960 = vpop.f32.mrf.mxu0
      %v961 = vadd.f32 0.0, %v960
      %962 = vmatmul.f32.gmra.mxu0 %v899
      %v963 = vpop.f32.mrf.mxu0
      %v964 = vadd.f32 0.0, %v963
      %965 = vmatmul.f32.gmra.mxu0 %v902
      %v966 = vpop.f32.mrf.mxu0
      %v967 = vadd.f32 0.0, %v966
      %968 = vmatmul.f32.gmra.mxu0 %v905
      %v969 = vpop.f32.mrf.mxu0
      %v970 = vadd.f32 0.0, %v969
      %971 = vmatmul.f32.gmra.mxu0 %v908
      %v972 = vpop.f32.mrf.mxu0
      %v973 = vadd.f32 0.0, %v972
      %974 = vmatmul.f32.gmra.mxu0 %v911
      %v975 = vpop.f32.mrf.mxu0
      %v976 = vadd.f32 0.0, %v975
      %977 = vmatmul.f32.gmra.mxu0 %v914
      %v978 = vpop.f32.mrf.mxu0
      %v979 = vadd.f32 0.0, %v978
      %980 = vmatmul.f32.gmra.mxu0 %v917
      %v981 = vpop.f32.mrf.mxu0
      %v982 = vadd.f32 0.0, %v981
      %983 = vmatmul.f32.gmra.mxu0 %v920
      %v984 = vpop.f32.mrf.mxu0
      %v985 = vadd.f32 0.0, %v984
      %986 = vmatmul.f32.gmra.mxu0 %v923
      %v987 = vpop.f32.mrf.mxu0
      %v988 = vadd.f32 0.0, %v987
      %989 = vmatmul.f32.gmra.mxu0 %v926
      %v990 = vpop.f32.mrf.mxu0
      %v991 = vadd.f32 0.0, %v990
      %992 = vmatmul.f32.gmra.mxu0 %v929
      %v993 = vpop.f32.mrf.mxu0
      %v994 = vadd.f32 0.0, %v993
      %995 = vdwg.mxu0
      %996 = vst.msk [vmem:[#allocation2] sm:$0xff] %vm837, %v949
      %997 = vst.msk [vmem:[#allocation2 + $0x8] sm:$0xff] %vm837, %v952
      %998 = vst.msk [vmem:[#allocation2 + $0x10] sm:$0xff] %vm837, %v955
      %999 = vst.msk [vmem:[#allocation2 + $0x18] sm:$0xff] %vm837, %v958
      %1000 = vst.msk [vmem:[#allocation2 + $0x20] sm:$0xff] %vm837, %v961
      %1001 = vst.msk [vmem:[#allocation2 + $0x28] sm:$0xff] %vm837, %v964
      %1002 = vst.msk [vmem:[#allocation2 + $0x30] sm:$0xff] %vm837, %v967
      %1003 = vst.msk [vmem:[#allocation2 + $0x38] sm:$0xff] %vm837, %v970
      %1004 = vst.msk [vmem:[#allocation2 + $0x40] sm:$0xff] %vm837, %v973
      %1005 = vst.msk [vmem:[#allocation2 + $0x48] sm:$0xff] %vm837, %v976
      %1006 = vst.msk [vmem:[#allocation2 + $0x50] sm:$0xff] %vm837, %v979
      %1007 = vst.msk [vmem:[#allocation2 + $0x58] sm:$0xff] %vm837, %v982
      %1008 = vst.msk [vmem:[#allocation2 + $0x60] sm:$0xff] %vm837, %v985
      %1009 = vst.msk [vmem:[#allocation2 + $0x68] sm:$0xff] %vm837, %v988
      %1010 = vst.msk [vmem:[#allocation2 + $0x70] sm:$0xff] %vm837, %v991
      %1011 = vst.msk [vmem:[#allocation2 + $0x78] sm:$0xff] %vm837, %v994
      %s1012 = scalar_lea.vmem %s2, 24
      %v1013 = vld [vmem:[%s1012] sm:$0xff]
      %v1014 = vld [vmem:[%s1012 + $0x8] sm:$0xff]
      %v1015 = vld [vmem:[%s1012 + $0x10] sm:$0xff]
      %v1017 = vsel %vm882, %v875, 0
      %v1020 = vsel %vm882, %v876, 0
      %1022 = vmatpush.msra.mxu0 0.0
      %1023 = vmatpush.msra.mxu0 0.0
      %1024 = vmatpush.msra.mxu0 0.0
      %1025 = vmatpush.msra.mxu0 0.0
      %1026 = vmatpush.msra.mxu0 0.0
      %1027 = vmatpush.msra.mxu0 0.0
      %1028 = vmatpush.msra.mxu0 0.0
      %1029 = vmatpush.msra.mxu0 0.0
      %1030 = vmatpush.msra.mxu0 0.0
      %1031 = vmatpush.msra.mxu0 0.0
      %1032 = vmatpush.msra.mxu0 0.0
      %1033 = vmatpush.msra.mxu0 0.0
      %1034 = vmatpush.msra.mxu0 0.0
      %1035 = vmatpush.msra.mxu0 %v1015
      %1036 = vmatpush.msra.mxu0 %v1014
      %1037 = vmatpush.msra.mxu0 %v1013
      %1038 = vmatmul.f32.gmra.mxu0 %v890
      %v1039 = vpop.f32.mrf.mxu0
      %v1040 = vadd.f32 0.0, %v1039
      %1041 = vmatmul.f32.gmra.mxu0 %v893
      %v1042 = vpop.f32.mrf.mxu0
      %v1043 = vadd.f32 0.0, %v1042
      %1044 = vmatmul.f32.gmra.mxu0 %v896
      %v1045 = vpop.f32.mrf.mxu0
      %v1046 = vadd.f32 0.0, %v1045
      %1047 = vmatmul.f32.gmra.mxu0 %v899
      %v1048 = vpop.f32.mrf.mxu0
      %v1049 = vadd.f32 0.0, %v1048
      %1050 = vmatmul.f32.gmra.mxu0 %v902
      %v1051 = vpop.f32.mrf.mxu0
      %v1052 = vadd.f32 0.0, %v1051
      %1053 = vmatmul.f32.gmra.mxu0 %v905
      %v1054 = vpop.f32.mrf.mxu0
      %v1055 = vadd.f32 0.0, %v1054
      %1056 = vmatmul.f32.gmra.mxu0 %v908
      %v1057 = vpop.f32.mrf.mxu0
      %v1058 = vadd.f32 0.0, %v1057
      %1059 = vmatmul.f32.gmra.mxu0 %v911
      %v1060 = vpop.f32.mrf.mxu0
      %v1061 = vadd.f32 0.0, %v1060
      %1062 = vmatmul.f32.gmra.mxu0 %v914
      %v1063 = vpop.f32.mrf.mxu0
      %v1064 = vadd.f32 0.0, %v1063
      %1065 = vmatmul.f32.gmra.mxu0 %v917
      %v1066 = vpop.f32.mrf.mxu0
      %v1067 = vadd.f32 0.0, %v1066
      %1068 = vmatmul.f32.gmra.mxu0 %v920
      %v1069 = vpop.f32.mrf.mxu0
      %v1070 = vadd.f32 0.0, %v1069
      %1071 = vmatmul.f32.gmra.mxu0 %v923
      %v1072 = vpop.f32.mrf.mxu0
      %v1073 = vadd.f32 0.0, %v1072
      %1074 = vmatmul.f32.gmra.mxu0 %v926
      %v1075 = vpop.f32.mrf.mxu0
      %v1076 = vadd.f32 0.0, %v1075
      %1077 = vmatmul.f32.gmra.mxu0 %v929
      %v1078 = vpop.f32.mrf.mxu0
      %v1079 = vadd.f32 0.0, %v1078
      %1080 = vmatmul.f32.gmra.mxu0 %v1017
      %v1081 = vpop.f32.mrf.mxu0
      %v1082 = vadd.f32 0.0, %v1081
      %1083 = vmatmul.f32.gmra.mxu0 %v1020
      %v1084 = vpop.f32.mrf.mxu0
      %v1085 = vadd.f32 0.0, %v1084
      %1086 = vdwg.mxu0
      %v1087 = vld [vmem:[#allocation2] sm:$0xff]
      %v1088 = vld [vmem:[#allocation2 + $0x8] sm:$0xff]
      %v1089 = vld [vmem:[#allocation2 + $0x10] sm:$0xff]
      %v1090 = vld [vmem:[#allocation2 + $0x18] sm:$0xff]
      %v1091 = vld [vmem:[#allocation2 + $0x20] sm:$0xff]
      %v1092 = vld [vmem:[#allocation2 + $0x28] sm:$0xff]
      %v1093 = vld [vmem:[#allocation2 + $0x30] sm:$0xff]
      %v1094 = vld [vmem:[#allocation2 + $0x38] sm:$0xff]
      %v1095 = vld [vmem:[#allocation2 + $0x40] sm:$0xff]
      %v1096 = vld [vmem:[#allocation2 + $0x48] sm:$0xff]
      %v1097 = vld [vmem:[#allocation2 + $0x50] sm:$0xff]
      %v1098 = vld [vmem:[#allocation2 + $0x58] sm:$0xff]
      %v1099 = vld [vmem:[#allocation2 + $0x60] sm:$0xff]
      %v1100 = vld [vmem:[#allocation2 + $0x68] sm:$0xff]
      %v1101 = vld [vmem:[#allocation2 + $0x70] sm:$0xff]
      %v1102 = vld [vmem:[#allocation2 + $0x78] sm:$0xff]
      %v1103 = vadd.f32 %v1087, %v1040
      %v1104 = vadd.f32 %v1088, %v1043
      %v1105 = vadd.f32 %v1089, %v1046
      %v1106 = vadd.f32 %v1090, %v1049
      %v1107 = vadd.f32 %v1091, %v1052
      %v1108 = vadd.f32 %v1092, %v1055
      %v1109 = vadd.f32 %v1093, %v1058
      %v1110 = vadd.f32 %v1094, %v1061
      %v1111 = vadd.f32 %v1095, %v1064
      %v1112 = vadd.f32 %v1096, %v1067
      %v1113 = vadd.f32 %v1097, %v1070
      %v1114 = vadd.f32 %v1098, %v1073
      %v1115 = vadd.f32 %v1099, %v1076
      %v1116 = vadd.f32 %v1100, %v1079
      %v1117 = vadd.f32 %v1101, %v1082
      %v1118 = vadd.f32 %v1102, %v1085
      %1119 = vst.msk [vmem:[#allocation2] sm:$0xff] %vm837, %v1103
      %1120 = vst.msk [vmem:[#allocation2 + $0x8] sm:$0xff] %vm837, %v1104
      %1121 = vst.msk [vmem:[#allocation2 + $0x10] sm:$0xff] %vm837, %v1105
      %1122 = vst.msk [vmem:[#allocation2 + $0x18] sm:$0xff] %vm837, %v1106
      %1123 = vst.msk [vmem:[#allocation2 + $0x20] sm:$0xff] %vm837, %v1107
      %1124 = vst.msk [vmem:[#allocation2 + $0x28] sm:$0xff] %vm837, %v1108
      %1125 = vst.msk [vmem:[#allocation2 + $0x30] sm:$0xff] %vm837, %v1109
      %1126 = vst.msk [vmem:[#allocation2 + $0x38] sm:$0xff] %vm837, %v1110
      %1127 = vst.msk [vmem:[#allocation2 + $0x40] sm:$0xff] %vm837, %v1111
      %1128 = vst.msk [vmem:[#allocation2 + $0x48] sm:$0xff] %vm837, %v1112
      %1129 = vst.msk [vmem:[#allocation2 + $0x50] sm:$0xff] %vm837, %v1113
      %1130 = vst.msk [vmem:[#allocation2 + $0x58] sm:$0xff] %vm837, %v1114
      %1131 = vst.msk [vmem:[#allocation2 + $0x60] sm:$0xff] %vm837, %v1115
      %1132 = vst.msk [vmem:[#allocation2 + $0x68] sm:$0xff] %vm837, %v1116
      %1133 = vst.msk [vmem:[#allocation2 + $0x70] sm:$0xff] %vm837, %v1117
      %1134 = vst.msk [vmem:[#allocation2 + $0x78] sm:$0xff] %vm837, %v1118
      %s1135 = scalar_lea.vmem %s2, 48
      %v1136 = vld [vmem:[%s1135] sm:$0xff]
      %v1137 = vld [vmem:[%s1135 + $0x8] sm:$0xff]
      %v1138 = vld [vmem:[%s1135 + $0x10] sm:$0xff]
      %v1140 = vsel %vm882, %v877, 0
      %v1143 = vsel %vm882, %v878, 0
      %1145 = vmatpush.msra.mxu0 0.0
      %1146 = vmatpush.msra.mxu0 0.0
      %1147 = vmatpush.msra.mxu0 0.0
      %1148 = vmatpush.msra.mxu0 0.0
      %1149 = vmatpush.msra.mxu0 0.0
      %1150 = vmatpush.msra.mxu0 0.0
      %1151 = vmatpush.msra.mxu0 0.0
      %1152 = vmatpush.msra.mxu0 0.0
      %1153 = vmatpush.msra.mxu0 0.0
      %1154 = vmatpush.msra.mxu0 0.0
      %1155 = vmatpush.msra.mxu0 0.0
      %1156 = vmatpush.msra.mxu0 0.0
      %1157 = vmatpush.msra.mxu0 0.0
      %1158 = vmatpush.msra.mxu0 %v1138
      %1159 = vmatpush.msra.mxu0 %v1137
      %1160 = vmatpush.msra.mxu0 %v1136
      %1161 = vmatmul.f32.gmra.mxu0 %v896
      %v1162 = vpop.f32.mrf.mxu0
      %v1163 = vadd.f32 0.0, %v1162
      %1164 = vmatmul.f32.gmra.mxu0 %v899
      %v1165 = vpop.f32.mrf.mxu0
      %v1166 = vadd.f32 0.0, %v1165
      %1167 = vmatmul.f32.gmra.mxu0 %v902
      %v1168 = vpop.f32.mrf.mxu0
      %v1169 = vadd.f32 0.0, %v1168
      %1170 = vmatmul.f32.gmra.mxu0 %v905
      %v1171 = vpop.f32.mrf.mxu0
      %v1172 = vadd.f32 0.0, %v1171
      %1173 = vmatmul.f32.gmra.mxu0 %v908
      %v1174 = vpop.f32.mrf.mxu0
      %v1175 = vadd.f32 0.0, %v1174
      %1176 = vmatmul.f32.gmra.mxu0 %v911
      %v1177 = vpop.f32.mrf.mxu0
      %v1178 = vadd.f32 0.0, %v1177
      %1179 = vmatmul.f32.gmra.mxu0 %v914
      %v1180 = vpop.f32.mrf.mxu0
      %v1181 = vadd.f32 0.0, %v1180
      %1182 = vmatmul.f32.gmra.mxu0 %v917
      %v1183 = vpop.f32.mrf.mxu0
      %v1184 = vadd.f32 0.0, %v1183
      %1185 = vmatmul.f32.gmra.mxu0 %v920
      %v1186 = vpop.f32.mrf.mxu0
      %v1187 = vadd.f32 0.0, %v1186
      %1188 = vmatmul.f32.gmra.mxu0 %v923
      %v1189 = vpop.f32.mrf.mxu0
      %v1190 = vadd.f32 0.0, %v1189
      %1191 = vmatmul.f32.gmra.mxu0 %v926
      %v1192 = vpop.f32.mrf.mxu0
      %v1193 = vadd.f32 0.0, %v1192
      %1194 = vmatmul.f32.gmra.mxu0 %v929
      %v1195 = vpop.f32.mrf.mxu0
      %v1196 = vadd.f32 0.0, %v1195
      %1197 = vmatmul.f32.gmra.mxu0 %v1017
      %v1198 = vpop.f32.mrf.mxu0
      %v1199 = vadd.f32 0.0, %v1198
      %1200 = vmatmul.f32.gmra.mxu0 %v1020
      %v1201 = vpop.f32.mrf.mxu0
      %v1202 = vadd.f32 0.0, %v1201
      %1203 = vmatmul.f32.gmra.mxu0 %v1140
      %v1204 = vpop.f32.mrf.mxu0
      %v1205 = vadd.f32 0.0, %v1204
      %1206 = vmatmul.f32.gmra.mxu0 %v1143
      %v1207 = vpop.f32.mrf.mxu0
      %v1208 = vadd.f32 0.0, %v1207
      %1209 = vdwg.mxu0
      %v1210 = vld [vmem:[#allocation2] sm:$0xff]
      %v1211 = vld [vmem:[#allocation2 + $0x8] sm:$0xff]
      %v1212 = vld [vmem:[#allocation2 + $0x10] sm:$0xff]
      %v1213 = vld [vmem:[#allocation2 + $0x18] sm:$0xff]
      %v1214 = vld [vmem:[#allocation2 + $0x20] sm:$0xff]
      %v1215 = vld [vmem:[#allocation2 + $0x28] sm:$0xff]
      %v1216 = vld [vmem:[#allocation2 + $0x30] sm:$0xff]
      %v1217 = vld [vmem:[#allocation2 + $0x38] sm:$0xff]
      %v1218 = vld [vmem:[#allocation2 + $0x40] sm:$0xff]
      %v1219 = vld [vmem:[#allocation2 + $0x48] sm:$0xff]
      %v1220 = vld [vmem:[#allocation2 + $0x50] sm:$0xff]
      %v1221 = vld [vmem:[#allocation2 + $0x58] sm:$0xff]
      %v1222 = vld [vmem:[#allocation2 + $0x60] sm:$0xff]
      %v1223 = vld [vmem:[#allocation2 + $0x68] sm:$0xff]
      %v1224 = vld [vmem:[#allocation2 + $0x70] sm:$0xff]
      %v1225 = vld [vmem:[#allocation2 + $0x78] sm:$0xff]
      %v1226 = vadd.f32 %v1210, %v1163
      %v1227 = vadd.f32 %v1211, %v1166
      %v1228 = vadd.f32 %v1212, %v1169
      %v1229 = vadd.f32 %v1213, %v1172
      %v1230 = vadd.f32 %v1214, %v1175
      %v1231 = vadd.f32 %v1215, %v1178
      %v1232 = vadd.f32 %v1216, %v1181
      %v1233 = vadd.f32 %v1217, %v1184
      %v1234 = vadd.f32 %v1218, %v1187
      %v1235 = vadd.f32 %v1219, %v1190
      %v1236 = vadd.f32 %v1220, %v1193
      %v1237 = vadd.f32 %v1221, %v1196
      %v1238 = vadd.f32 %v1222, %v1199
      %v1239 = vadd.f32 %v1223, %v1202
      %v1240 = vadd.f32 %v1224, %v1205
      %v1241 = vadd.f32 %v1225, %v1208
      %1242 = vst.msk [vmem:[#allocation2] sm:$0xff] %vm837, %v1226
      %1243 = vst.msk [vmem:[#allocation2 + $0x8] sm:$0xff] %vm837, %v1227
      %1244 = vst.msk [vmem:[#allocation2 + $0x10] sm:$0xff] %vm837, %v1228
      %1245 = vst.msk [vmem:[#allocation2 + $0x18] sm:$0xff] %vm837, %v1229
      %1246 = vst.msk [vmem:[#allocation2 + $0x20] sm:$0xff] %vm837, %v1230
      %1247 = vst.msk [vmem:[#allocation2 + $0x28] sm:$0xff] %vm837, %v1231
      %1248 = vst.msk [vmem:[#allocation2 + $0x30] sm:$0xff] %vm837, %v1232
      %1249 = vst.msk [vmem:[#allocation2 + $0x38] sm:$0xff] %vm837, %v1233
      %1250 = vst.msk [vmem:[#allocation2 + $0x40] sm:$0xff] %vm837, %v1234
      %1251 = vst.msk [vmem:[#allocation2 + $0x48] sm:$0xff] %vm837, %v1235
      %1252 = vst.msk [vmem:[#allocation2 + $0x50] sm:$0xff] %vm837, %v1236
      %1253 = vst.msk [vmem:[#allocation2 + $0x58] sm:$0xff] %vm837, %v1237
      %1254 = vst.msk [vmem:[#allocation2 + $0x60] sm:$0xff] %vm837, %v1238
      %1255 = vst.msk [vmem:[#allocation2 + $0x68] sm:$0xff] %vm837, %v1239
      %1256 = vst.msk [vmem:[#allocation2 + $0x70] sm:$0xff] %vm837, %v1240
      %1257 = vst.msk [vmem:[#allocation2 + $0x78] sm:$0xff] %vm837, %v1241
      %v1258 = vld [vmem:[#allocation2] sm:$0xff]
      %v1259 = vld [vmem:[#allocation2 + $0x8] sm:$0xff]
      %v1260 = vld [vmem:[#allocation2 + $0x10] sm:$0xff]
      %v1261 = vld [vmem:[#allocation2 + $0x18] sm:$0xff]
      %v1262 = vld [vmem:[#allocation2 + $0x20] sm:$0xff]
      %v1263 = vld [vmem:[#allocation2 + $0x28] sm:$0xff]
      %v1264 = vld [vmem:[#allocation2 + $0x30] sm:$0xff]
      %v1265 = vld [vmem:[#allocation2 + $0x38] sm:$0xff]
      %v1266 = vld [vmem:[#allocation2 + $0x40] sm:$0xff]
      %v1267 = vld [vmem:[#allocation2 + $0x48] sm:$0xff]
      %v1268 = vld [vmem:[#allocation2 + $0x50] sm:$0xff]
      %v1269 = vld [vmem:[#allocation2 + $0x58] sm:$0xff]
      %v1270 = vld [vmem:[#allocation2 + $0x60] sm:$0xff]
      %v1271 = vld [vmem:[#allocation2 + $0x68] sm:$0xff]
      %v1272 = vld [vmem:[#allocation2 + $0x70] sm:$0xff]
      %v1273 = vld [vmem:[#allocation2 + $0x78] sm:$0xff]
      %v1274 = vld [vmem:[%s3] sm:$0x1]
      %v1276 = vperm.slane %v1274, 0
      %v1278 = vadd.f32 %v1258, %v1276
      %v1279 = vadd.f32 %v1259, %v1276
      %v1280 = vadd.f32 %v1260, %v1276
      %v1281 = vadd.f32 %v1261, %v1276
      %v1282 = vadd.f32 %v1262, %v1276
      %v1283 = vadd.f32 %v1263, %v1276
      %v1284 = vadd.f32 %v1264, %v1276
      %v1285 = vadd.f32 %v1265, %v1276
      %v1286 = vadd.f32 %v1266, %v1276
      %v1287 = vadd.f32 %v1267, %v1276
      %v1288 = vadd.f32 %v1268, %v1276
      %v1289 = vadd.f32 %v1269, %v1276
      %v1290 = vadd.f32 %v1270, %v1276
      %v1291 = vadd.f32 %v1271, %v1276
      %v1292 = vadd.f32 %v1272, %v1276
      %v1293 = vadd.f32 %v1273, %v1276
      %v1294 = vmax.f32 %v1278, 0.0
      %v1295 = vmax.f32 %v1279, 0.0
      %v1296 = vmax.f32 %v1280, 0.0
      %v1297 = vmax.f32 %v1281, 0.0
      %v1298 = vmax.f32 %v1282, 0.0
      %v1299 = vmax.f32 %v1283, 0.0
      %v1300 = vmax.f32 %v1284, 0.0
      %v1301 = vmax.f32 %v1285, 0.0
      %v1302 = vmax.f32 %v1286, 0.0
      %v1303 = vmax.f32 %v1287, 0.0
      %v1304 = vmax.f32 %v1288, 0.0
      %v1305 = vmax.f32 %v1289, 0.0
      %v1306 = vmax.f32 %v1290, 0.0
      %v1307 = vmax.f32 %v1291, 0.0
      %v1308 = vmax.f32 %v1292, 0.0
      %v1309 = vmax.f32 %v1293, 0.0
      %v1310 = vsel %vm837, %v1294, 0.0
      %v1311 = vsel %vm837, %v1295, 0.0
      %v1312 = vadd.f32 %v1310, %v1311
      %v1313 = vsel %vm837, %v1296, 0.0
      %v1314 = vadd.f32 %v1312, %v1313
      %v1315 = vsel %vm837, %v1297, 0.0
      %v1316 = vadd.f32 %v1314, %v1315
      %v1317 = vsel %vm837, %v1298, 0.0
      %v1318 = vadd.f32 %v1316, %v1317
      %v1319 = vsel %vm837, %v1299, 0.0
      %v1320 = vadd.f32 %v1318, %v1319
      %v1321 = vsel %vm837, %v1300, 0.0
      %v1322 = vadd.f32 %v1320, %v1321
      %v1323 = vsel %vm837, %v1301, 0.0
      %v1324 = vadd.f32 %v1322, %v1323
      %v1325 = vsel %vm837, %v1302, 0.0
      %v1326 = vadd.f32 %v1324, %v1325
      %v1327 = vsel %vm837, %v1303, 0.0
      %v1328 = vadd.f32 %v1326, %v1327
      %v1329 = vsel %vm837, %v1304, 0.0
      %v1330 = vadd.f32 %v1328, %v1329
      %v1331 = vsel %vm837, %v1305, 0.0
      %v1332 = vadd.f32 %v1330, %v1331
      %v1333 = vsel %vm837, %v1306, 0.0
      %v1334 = vadd.f32 %v1332, %v1333
      %v1335 = vsel %vm837, %v1307, 0.0
      %v1336 = vadd.f32 %v1334, %v1335
      %v1337 = vsel %vm837, %v1308, 0.0
      %v1338 = vadd.f32 %v1336, %v1337
      %v1339 = vsel %vm837, %v1309, 0.0
      %v1340 = vadd.f32 %v1338, %v1339
      %v1341 = vrot.slane %v1340, 4
      %v1342 = vadd.f32 %v1340, %v1341
      %v1343 = vrot.slane %v1342, 2
      %v1344 = vadd.f32 %v1342, %v1343
      %v1345 = vrot.slane %v1344, 1
      %v1346 = vadd.f32 %v1344, %v1345
      %v1347 = vmul.f32 %v1294, %v1294
      %v1348 = vmul.f32 %v1295, %v1295
      %v1349 = vmul.f32 %v1296, %v1296
      %v1350 = vmul.f32 %v1297, %v1297
      %v1351 = vmul.f32 %v1298, %v1298
      %v1352 = vmul.f32 %v1299, %v1299
      %v1353 = vmul.f32 %v1300, %v1300
      %v1354 = vmul.f32 %v1301, %v1301
      %v1355 = vmul.f32 %v1302, %v1302
      %v1356 = vmul.f32 %v1303, %v1303
      %v1357 = vmul.f32 %v1304, %v1304
      %v1358 = vmul.f32 %v1305, %v1305
      %v1359 = vmul.f32 %v1306, %v1306
      %v1360 = vmul.f32 %v1307, %v1307
      %v1361 = vmul.f32 %v1308, %v1308
      %v1362 = vmul.f32 %v1309, %v1309
      %v1363 = vsel %vm837, %v1347, 0.0
      %v1364 = vsel %vm837, %v1348, 0.0
      %v1365 = vadd.f32 %v1363, %v1364
      %v1366 = vsel %vm837, %v1349, 0.0
      %v1367 = vadd.f32 %v1365, %v1366
      %v1368 = vsel %vm837, %v1350, 0.0
      %v1369 = vadd.f32 %v1367, %v1368
      %v1370 = vsel %vm837, %v1351, 0.0
      %v1371 = vadd.f32 %v1369, %v1370
      %v1372 = vsel %vm837, %v1352, 0.0
      %v1373 = vadd.f32 %v1371, %v1372
      %v1374 = vsel %vm837, %v1353, 0.0
      %v1375 = vadd.f32 %v1373, %v1374
      %v1376 = vsel %vm837, %v1354, 0.0
      %v1377 = vadd.f32 %v1375, %v1376
      %v1378 = vsel %vm837, %v1355, 0.0
      %v1379 = vadd.f32 %v1377, %v1378
      %v1380 = vsel %vm837, %v1356, 0.0
      %v1381 = vadd.f32 %v1379, %v1380
      %v1382 = vsel %vm837, %v1357, 0.0
      %v1383 = vadd.f32 %v1381, %v1382
      %v1384 = vsel %vm837, %v1358, 0.0
      %v1385 = vadd.f32 %v1383, %v1384
      %v1386 = vsel %vm837, %v1359, 0.0
      %v1387 = vadd.f32 %v1385, %v1386
      %v1388 = vsel %vm837, %v1360, 0.0
      %v1389 = vadd.f32 %v1387, %v1388
      %v1390 = vsel %vm837, %v1361, 0.0
      %v1391 = vadd.f32 %v1389, %v1390
      %v1392 = vsel %vm837, %v1362, 0.0
      %v1393 = vadd.f32 %v1391, %v1392
      %v1394 = vrot.slane %v1393, 4
      %v1395 = vadd.f32 %v1393, %v1394
      %v1396 = vrot.slane %v1395, 2
      %v1397 = vadd.f32 %v1395, %v1396
      %v1398 = vrot.slane %v1397, 1
      %v1399 = vadd.f32 %v1397, %v1398
      %v1400 = vsel %vm595, %v1346, %v1399
      %vm1401 = vcmask 58368
      %1402 = vst.msk [vmem:[%s494] sm:$0x3] %vm1401, %v1400
      %1403 = vst.msk [vmem:[%s485] sm:$0xff] %vm837, %v1294
      %1404 = vst.msk [vmem:[%s485 + $0x8] sm:$0xff] %vm837, %v1295
      %1405 = vst.msk [vmem:[%s485 + $0x10] sm:$0xff] %vm837, %v1296
      %1406 = vst.msk [vmem:[%s485 + $0x18] sm:$0xff] %vm837, %v1297
      %1407 = vst.msk [vmem:[%s485 + $0x20] sm:$0xff] %vm837, %v1298
      %1408 = vst.msk [vmem:[%s485 + $0x28] sm:$0xff] %vm837, %v1299
      %1409 = vst.msk [vmem:[%s485 + $0x30] sm:$0xff] %vm837, %v1300
      %1410 = vst.msk [vmem:[%s485 + $0x38] sm:$0xff] %vm837, %v1301
      %1411 = vst.msk [vmem:[%s485 + $0x40] sm:$0xff] %vm837, %v1302
      %1412 = vst.msk [vmem:[%s485 + $0x48] sm:$0xff] %vm837, %v1303
      %1413 = vst.msk [vmem:[%s485 + $0x50] sm:$0xff] %vm837, %v1304
      %1414 = vst.msk [vmem:[%s485 + $0x58] sm:$0xff] %vm837, %v1305
      %1415 = vst.msk [vmem:[%s485 + $0x60] sm:$0xff] %vm837, %v1306
      %1416 = vst.msk [vmem:[%s485 + $0x68] sm:$0xff] %vm837, %v1307
      %1417 = vst.msk [vmem:[%s485 + $0x70] sm:$0xff] %vm837, %v1308
      %1418 = vst.msk [vmem:[%s485 + $0x78] sm:$0xff] %vm837, %v1309
      %s1419 = smul.u32 8, %s25
      %p1420 = scmp.lt.s32.totalorder %s24, 1
      %s1421 = scalar_select %p1420, %s24, 1
      %p1422 = scmp.lt.s32.totalorder %s1419, 15
      %s1423 = scalar_select %p1422, %s1419, 15
      %s1424 = smul.addr %s1423, 2
      %s1425 = smul.addr %s1421, 32
      %s1426 = sadd.s32 %s1424, %s1425
      %s1427 = smul.addr %s1426, 8
      %s1428 = scalar_lea.vmem %s7, %s1427
      %p1429 = scmp.lt.s32.totalorder %s24, 1
      %s1430 = scalar_select %p1429, %s24, 1
      %p1431 = scmp.lt.s32.totalorder %s25, 1
      %s1432 = scalar_select %p1431, %s25, 1
      %s1433 = smul.addr %s1430, 2
      %s1434 = sadd.s32 %s1432, %s1433
      %s1435 = smul.addr %s1434, 2
      %s1436 = scalar_lea.vmem %s8, %s1435
      // Predicated region
      $region49: #{_unet_convblock.4} parent=47 // pred_check
        %p1437 = pneg %p236
      $region50: #{_unet_convblock.4} parent=47 // pred_check_branch
        %1439 = sbr.rel (%p1437) target = $region52
      $region51: #{_unet_convblock.4} parent=47 // pred_region
        %s1440 = smul.u32 8, %s25
      $region52: #{_unet_convblock.4} parent=47 // pred_fallthru
        _
      // Predicated region
      $region53: #{_unet_convblock.4} parent=47 // pred_check
        %p1441 = pneg %p264
      $region54: #{_unet_convblock.4} parent=47 // pred_check_branch
        %1443 = sbr.rel (%p1441) target = $region56
      $region55: #{_unet_convblock.4} parent=47 // pred_region
        _
      $region56: #{_unet_convblock.4} parent=47 // pred_fallthru
        _
    $region48: #{_unet_convblock.4} parent=5 // pred_fallthru
      _
    %p1444 = scmp.le.s32.totalorder 2, %s15
    // Predicated region
    $region57: #{_unet_convblock.4} parent=5 // pred_check
      %p1445 = pneg %p1444
    $region58: #{_unet_convblock.4} parent=5 // pred_check_branch
      %1447 = sbr.rel (%p1445) target = $region60
    $region59: #{_unet_convblock.4} parent=5 // pred_region
      %s1448 = ssub.s32 %s15, 2
      // Predicated region
      $region61: #{_unet_convblock.4} parent=59 // pred_check
        %p1449 = pneg %p242
      $region62: #{_unet_convblock.4} parent=59 // pred_check_branch
        %1451 = sbr.rel (%p1449) target = $region64
      $region63: #{_unet_convblock.4} parent=59 // pred_region
        %s1452 = smul.u32 8, %s27
        %p1453 = scmp.lt.s32.totalorder %s26, 1
        %s1454 = scalar_select %p1453, %s26, 1
        %p1455 = scmp.lt.s32.totalorder %s1452, 15
        %s1456 = scalar_select %p1455, %s1452, 15
        %s1457 = smul.addr %s1456, 2
        %s1458 = smul.addr %s1454, 32
        %s1459 = sadd.s32 %s1457, %s1458
        %s1460 = smul.addr %s1459, 8
        %s1461 = scalar_lea.vmem %s7, %s1460
      $region64: #{_unet_convblock.4} parent=59 // pred_fallthru
        _
      // Predicated region
      $region65: #{_unet_convblock.4} parent=59 // pred_check
        %p1462 = pneg %p270
      $region66: #{_unet_convblock.4} parent=59 // pred_check_branch
        %1464 = sbr.rel (%p1462) target = $region68
      $region67: #{_unet_convblock.4} parent=59 // pred_region
        %p1465 = scmp.lt.s32.totalorder %s26, 1
        %s1466 = scalar_select %p1465, %s26, 1
        %p1467 = scmp.lt.s32.totalorder %s27, 1
        %s1468 = scalar_select %p1467, %s27, 1
        %s1469 = smul.addr %s1466, 2
        %s1470 = sadd.s32 %s1468, %s1469
        %s1471 = smul.addr %s1470, 2
        %s1472 = scalar_lea.vmem %s8, %s1471
      $region68: #{_unet_convblock.4} parent=59 // pred_fallthru
        _
    $region60: #{_unet_convblock.4} parent=5 // pred_fallthru
      _
  $region6: #{_unet_convblock.4} parent=0 // loop_footer
    %s19 = sadd.s32 1, %s15
  $region7: #{_unet_convblock.4} parent=0 // loop_footer_branch
    %14 = sbr.rel target = $region3
  $region8: #{_unet_convblock.4} parent=0 // loop_exit
    _

</llo_original>
